<compile_context>
chip_gen: v7x
topology: tpu7x:2x2x1
jax: 0.10.0
libtpu: 0.0.40
codegen_flags: <defaults>
</compile_context>

<pallas_src>
import numpy as np
import jax
import jax.numpy as jnp
from jax.experimental import pallas as pl
from jax.experimental.pallas import tpu as pltpu

# ---------------- config (matches logFbankCal defaults) ----------------
SAMPLE_RATE   = 16000
N_FFT         = 800
WIN_LENGTH    = 800
HOP_LENGTH    = 200
N_MELS        = 80
RESCALING_MAX = 0.9
MAX_ABS_VALUE = 4.0
PREEMPHASIS   = 0.97
FMIN, FMAX    = 55.0, 7600.0
MIN_LEVEL_DB  = -100.0
REF_LEVEL_DB  = 20.0
MIN_LEVEL     = float(np.exp(MIN_LEVEL_DB / 20.0 * np.log(10.0)))  # 1e-5
N_FREQ        = N_FFT // 2 + 1                                     # 401

# lane-padded sizes (multiples of 128)
N_FFT_PAD   = 896      # 7 * 128
N_FREQ_PAD  = 512      # 4 * 128
N_MELS_PAD  = 128
TILE_F_MAX  = 1024     # frame rows per grid step (bf16 footprint ~20 MiB)

LOG10_SCALE = 20.0 / float(np.log(10.0))


# ---------------- deterministic parameter construction ----------------
def _hz_to_mel(f):
    f = np.asarray(f, dtype=np.float64)
    f_sp = 200.0 / 3.0
    mels = f / f_sp
    min_log_hz = 1000.0
    min_log_mel = min_log_hz / f_sp
    logstep = np.log(6.4) / 27.0
    return np.where(f >= min_log_hz, min_log_mel + np.log(f / min_log_hz) / logstep, mels)


def _mel_to_hz(m):
    m = np.asarray(m, dtype=np.float64)
    f_sp = 200.0 / 3.0
    freqs = f_sp * m
    min_log_hz = 1000.0
    min_log_mel = min_log_hz / f_sp
    logstep = np.log(6.4) / 27.0
    return np.where(m >= min_log_mel, min_log_hz * np.exp(logstep * (m - min_log_mel)), freqs)


def librosa_mel_basis(sr, n_fft, n_mels, fmin, fmax):
    """Slaney-style mel filterbank, identical to librosa.filters.mel defaults."""
    n_freq = n_fft // 2 + 1
    fftfreqs = np.linspace(0.0, sr / 2.0, n_freq)
    mel_pts = np.linspace(_hz_to_mel(fmin), _hz_to_mel(fmax), n_mels + 2)
    hz_pts = _mel_to_hz(mel_pts)
    fdiff = np.diff(hz_pts)
    ramps = hz_pts[:, None] - fftfreqs[None, :]
    weights = np.zeros((n_mels, n_freq), dtype=np.float64)
    for i in range(n_mels):
        lower = -ramps[i] / fdiff[i]
        upper = ramps[i + 2] / fdiff[i + 1]
        weights[i] = np.maximum(0.0, np.minimum(lower, upper))
    enorm = 2.0 / (hz_pts[2:n_mels + 2] - hz_pts[:n_mels])
    weights *= enorm[:, None]
    return weights.astype(np.float32)


def hann_window_periodic(n):
    # torch.hann_window(n) default (periodic=True)
    k = np.arange(n, dtype=np.float64)
    return (0.5 - 0.5 * np.cos(2.0 * np.pi * k / n)).astype(np.float32)


def dft_bases(n_fft, n_freq):
    n = np.arange(n_fft, dtype=np.float64)[:, None]
    f = np.arange(n_freq, dtype=np.float64)[None, :]
    ang = 2.0 * np.pi * n * f / n_fft
    return np.cos(ang).astype(np.float32), (-np.sin(ang)).astype(np.float32)


def _build_constants():
    """Window-folded, lane-padded [cos | -sin] DFT basis and mel^T basis (bf16)."""
    win = hann_window_periodic(WIN_LENGTH).astype(np.float64)           # (800,)
    cos_b, sin_b = dft_bases(N_FFT, N_FREQ)                             # (800, 401) each
    basis = np.zeros((N_FFT_PAD, 2 * N_FREQ_PAD), np.float32)           # (896, 1024)
    basis[:N_FFT, :N_FREQ] = win[:, None] * cos_b
    basis[:N_FFT, N_FREQ_PAD:N_FREQ_PAD + N_FREQ] = win[:, None] * sin_b

    melT = np.zeros((N_FREQ_PAD, N_MELS_PAD), np.float32)               # (512, 128)
    melT[:N_FREQ, :N_MELS] = librosa_mel_basis(SAMPLE_RATE, N_FFT, N_MELS, FMIN, FMAX).T
    # ml_dtypes bfloat16 numpy dtype (no device needed at import time)
    return basis.astype(jnp.bfloat16), melT.astype(jnp.bfloat16)


_BASIS_BF16, _MELT_BF16 = _build_constants()


def _round_up(x, m):
    return ((x + m - 1) // m) * m


# ---------------- Pallas kernel (hot path) ----------------
def fbank_kernel(scale_ref, frames_ref, basis_ref, melT_ref, out_ref):
    # frames/basis are bf16 (window already folded into the basis); MXU
    # accumulates in f32.  Single wide DFT matmul against [cos | -sin];
    # re/im recovered with 128-aligned static slices.
    dft = jnp.dot(frames_ref[...], basis_ref[...],
                  preferred_element_type=jnp.float32)                    # (tile_f, 1024) f32
    re = dft[:, :N_FREQ_PAD]
    im = dft[:, N_FREQ_PAD:]
    mag = jnp.sqrt(re * re + im * im)                                    # |STFT| (power=1)
    mel = jnp.dot(mag.astype(jnp.bfloat16), melT_ref[...],
                  preferred_element_type=jnp.float32)                    # (tile_f, 128) f32
    # rescale factor is linear -> applied here instead of on the raw frames
    mel = mel * scale_ref[0, 0]
    s = LOG10_SCALE * jnp.log(jnp.maximum(MIN_LEVEL, mel)) - REF_LEVEL_DB
    out = (2.0 * MAX_ABS_VALUE / (-MIN_LEVEL_DB)) * (s - MIN_LEVEL_DB) - MAX_ABS_VALUE
    out_ref[...] = jnp.clip(out, -MAX_ABS_VALUE, MAX_ABS_VALUE)


# ---------------- wrapper ----------------
def _log_fbank_impl(x):
    """x: float32 waveform of shape (T,). Returns (n_mels, n_frames) float32."""
    x = jnp.asarray(x, jnp.float32)

    # rescale factor (applied inside the kernel at the mel stage); eps guards x==0
    scale = RESCALING_MAX / jnp.maximum(jnp.max(jnp.abs(x)), 1e-12)
    scale = scale.reshape(1, 1).astype(jnp.float32)

    # preemphasis (matches F.pad(x, (1,0), 'reflect') + conv1d([-p, 1])):
    # z[t] = x[t] - p * x[t-1], with x[-1] := x[1] (reflect of one sample)
    z = x - PREEMPHASIS * jnp.concatenate([x[1:2], x[:-1]])

    # torchaudio Spectrogram: center=True -> reflect pad n_fft//2 each side
    pad = N_FFT // 2
    zp = jnp.pad(z, (pad, pad), mode="reflect")
    n_frames = 1 + (zp.shape[0] - N_FFT) // HOP_LENGTH

    # balanced frame tiles, >= 2 grid steps (covers both v7x TensorCores),
    # tile rows a multiple of 16 (bf16 sublane packing)
    n_tiles = max(2, -(-n_frames // TILE_F_MAX))
    tile_f = _round_up(-(-n_frames // n_tiles), 16)
    n_frames_pad = tile_f * n_tiles

    # hop-strided slab framing (n_fft == 4*hop): contiguous reshapes, no gather.
    # Row padding is absorbed into a cheap 1-D pad of the waveform; the lane
    # padding 800->896 is a zero column slab in the same concatenate, so the
    # padded bf16 frame slab is materialized exactly once.
    n_slabs = N_FFT // HOP_LENGTH
    need = (n_frames_pad + n_slabs - 1) * HOP_LENGTH
    pad_amt = max(0, need - int(zp.shape[0]))
    zp_ext = jnp.pad(zp, (0, pad_amt)) if pad_amt else zp
    zp_bf = zp_ext.astype(jnp.bfloat16)
    slabs = [zp_bf[j * HOP_LENGTH:(j + n_frames_pad) * HOP_LENGTH]
             .reshape(n_frames_pad, HOP_LENGTH) for j in range(n_slabs)]
    slabs.append(jnp.zeros((n_frames_pad, N_FFT_PAD - N_FFT), jnp.bfloat16))
    frames_p = jnp.concatenate(slabs, axis=1)                  # (n_frames_pad, 896) bf16

    basis_b = jnp.asarray(_BASIS_BF16)   # (896, 1024) bf16, window folded in
    melT_b = jnp.asarray(_MELT_BF16)     # (512, 128)  bf16

    flops = (2 * n_frames_pad * N_FFT_PAD * (2 * N_FREQ_PAD)
             + 2 * n_frames_pad * N_FREQ_PAD * N_MELS_PAD)
    transcendentals = n_frames_pad * (N_FREQ_PAD + N_MELS_PAD)
    bytes_accessed = (2 * (n_frames_pad * N_FFT_PAD
                           + N_FFT_PAD * 2 * N_FREQ_PAD
                           + N_FREQ_PAD * N_MELS_PAD)
                      + 4 * n_frames_pad * N_MELS_PAD)

    out_p = pl.pallas_call(
        fbank_kernel,
        out_shape=jax.ShapeDtypeStruct((n_frames_pad, N_MELS_PAD), jnp.float32),
        grid=(n_tiles,),
        in_specs=[
            pl.BlockSpec(memory_space=pltpu.MemorySpace.SMEM),             # scale (1,1)
            pl.BlockSpec((tile_f, N_FFT_PAD), lambda i: (i, 0)),           # frame tile (pipelined)
            pl.BlockSpec((N_FFT_PAD, 2 * N_FREQ_PAD), lambda i: (0, 0)),   # [cos|-sin]*win (resident)
            pl.BlockSpec((N_FREQ_PAD, N_MELS_PAD), lambda i: (0, 0)),      # mel^T (resident)
        ],
        out_specs=pl.BlockSpec((tile_f, N_MELS_PAD), lambda i: (i, 0)),
        compiler_params=pltpu.CompilerParams(
            dimension_semantics=("parallel",),
            vmem_limit_bytes=40 * 1024 * 1024),
        cost_estimate=pl.CostEstimate(flops=flops,
                                      transcendentals=transcendentals,
                                      bytes_accessed=bytes_accessed),
    )(scale, frames_p, basis_b, melT_b)

    # PyTorch module returns (n_mels, n_frames); drop frame/mel padding.
    return out_p[:n_frames, :N_MELS].T


log_fbank = jax.jit(_log_fbank_impl)


# ---------------- float64 numpy reference (for tolerance check only) ----------------
def _reference_numpy(x):
    x = np.asarray(x, np.float64)
    x = x / np.max(np.abs(x)) * RESCALING_MAX
    z = x - PREEMPHASIS * np.concatenate([x[1:2], x[:-1]])
    pad = N_FFT // 2
    zp = np.pad(z, (pad, pad), mode="reflect")
    n_frames = 1 + (len(zp) - N_FFT) // HOP_LENGTH
    win = hann_window_periodic(WIN_LENGTH).astype(np.float64)
    frames = np.stack([zp[i * HOP_LENGTH:i * HOP_LENGTH + N_FFT] for i in range(n_frames)])
    spec = np.fft.rfft(frames * win, n=N_FFT, axis=1)
    mag = np.abs(spec)                                          # (n_frames, 401)
    mel = librosa_mel_basis(SAMPLE_RATE, N_FFT, N_MELS, FMIN, FMAX).astype(np.float64) @ mag.T
    s = 20.0 * np.log10(np.maximum(MIN_LEVEL, mel)) - REF_LEVEL_DB
    out = 2.0 * MAX_ABS_VALUE * ((s - MIN_LEVEL_DB) / (-MIN_LEVEL_DB)) - MAX_ABS_VALUE
    return np.clip(out, -MAX_ABS_VALUE, MAX_ABS_VALUE)          # (n_mels, n_frames)


if __name__ == "__main__":
    key = jax.random.PRNGKey(0)
    T = 3200  # 0.2 s of 16 kHz audio -> 17 frames
    x = jax.random.normal(key, (T,), dtype=jnp.float32)
    out = log_fbank(x)
    out = jax.block_until_ready(out)
    assert out.shape == (N_MELS, 1 + T // HOP_LENGTH), out.shape
    assert out.dtype == jnp.float32
    assert bool(jnp.all(jnp.isfinite(out)))
    assert bool(jnp.all(jnp.abs(out) <= MAX_ABS_VALUE + 1e-5))
    # bf16-MXU numerics vs float64 reference (dB-domain error expected ~1e-2)
    ref = _reference_numpy(np.asarray(x))
    err = float(np.max(np.abs(np.asarray(out, np.float64) - ref)))
    assert err < 0.25, f"max abs err vs reference = {err}"
    print("KERNEL_OK")
</pallas_src>

<mosaic_0001>
module attributes {stable_mosaic.version = 11 : i64} {
  func.func @fbank_kernel(%arg0: i32, %arg1: memref<1x1xf32, #tpu.memory_space<smem>>, %arg2: memref<16x896xbf16, #tpu.memory_space<vmem>>, %arg3: memref<896x1024xbf16, #tpu.memory_space<vmem>>, %arg4: memref<512x128xbf16, #tpu.memory_space<vmem>>, %arg5: memref<16x128xf32, #tpu.memory_space<vmem>>) attributes {dimension_semantics = [#tpu.dimension_semantics<parallel>], iteration_bounds = array<i64: 2>, scalar_prefetch = 0 : i64, scratch_operands = 0 : i64, tpu.core_type = #tpu.core_type<tc>, window_params = [{transform_indices = @transform_0, window_bounds = array<i64: 1, 1>}, {transform_indices = @transform_1, window_bounds = array<i64: 16, 896>}, {pipeline_mode = #tpu.pipeline_mode<synchronous>, transform_indices = @transform_2, window_bounds = array<i64: 896, 1024>}, {pipeline_mode = #tpu.pipeline_mode<synchronous>, transform_indices = @transform_3, window_bounds = array<i64: 512, 128>}, {transform_indices = @transform_4, window_bounds = array<i64: 16, 128>}]} {
    %c0 = arith.constant 0 : index
    %c0_0 = arith.constant 0 : index
    %0 = vector.load %arg2[%c0, %c0_0] : memref<16x896xbf16, #tpu.memory_space<vmem>>, vector<16x896xbf16>
    %c0_1 = arith.constant 0 : index
    %c0_2 = arith.constant 0 : index
    %1 = vector.load %arg3[%c0_1, %c0_2] : memref<896x1024xbf16, #tpu.memory_space<vmem>>, vector<896x1024xbf16>
    %cst = arith.constant dense<0.000000e+00> : vector<16x1024xf32>
    %2 = tpu.matmul %0, %1, %cst {dimension_numbers = #tpu.dot_dimension_numbers<[1], [0], [0], [1], [0, 0, 1, 1], [], []>} : vector<16x896xbf16>, vector<896x1024xbf16>, vector<16x1024xf32> -> vector<16x1024xf32>
    %3 = vector.extract_strided_slice %2 {offsets = [0, 0], sizes = [16, 512], strides = [1, 1]} : vector<16x1024xf32> to vector<16x512xf32>
    %4 = vector.extract_strided_slice %2 {offsets = [0, 512], sizes = [16, 512], strides = [1, 1]} : vector<16x1024xf32> to vector<16x512xf32>
    %5 = arith.mulf %3, %3 : vector<16x512xf32>
    %6 = arith.mulf %4, %4 : vector<16x512xf32>
    %7 = arith.addf %5, %6 : vector<16x512xf32>
    %8 = math.sqrt %7 : vector<16x512xf32>
    %9 = arith.truncf %8 : vector<16x512xf32> to vector<16x512xbf16>
    %c0_3 = arith.constant 0 : index
    %c0_4 = arith.constant 0 : index
    %10 = vector.load %arg4[%c0_3, %c0_4] : memref<512x128xbf16, #tpu.memory_space<vmem>>, vector<512x128xbf16>
    %cst_5 = arith.constant dense<0.000000e+00> : vector<16x128xf32>
    %11 = tpu.matmul %9, %10, %cst_5 {dimension_numbers = #tpu.dot_dimension_numbers<[1], [0], [0], [1], [0, 0, 1, 1], [], []>} : vector<16x512xbf16>, vector<512x128xbf16>, vector<16x128xf32> -> vector<16x128xf32>
    %c0_6 = arith.constant 0 : index
    %c0_7 = arith.constant 0 : index
    %12 = memref.load %arg1[%c0_6, %c0_7] : memref<1x1xf32, #tpu.memory_space<smem>>
    %13 = vector.broadcast %12 : f32 to vector<16x128xf32>
    %14 = arith.mulf %11, %13 : vector<16x128xf32>
    %cst_8 = arith.constant 9.99999974E-6 : f32
    %15 = vector.broadcast %cst_8 : f32 to vector<16x128xf32>
    %16 = arith.maximumf %15, %14 : vector<16x128xf32>
    %17 = math.log %16 : vector<16x128xf32>
    %cst_9 = arith.constant 8.68588924 : f32
    %18 = vector.broadcast %cst_9 : f32 to vector<16x128xf32>
    %19 = arith.mulf %18, %17 : vector<16x128xf32>
    %cst_10 = arith.constant 2.000000e+01 : f32
    %20 = vector.broadcast %cst_10 : f32 to vector<16x128xf32>
    %21 = arith.subf %19, %20 : vector<16x128xf32>
    %cst_11 = arith.constant -1.000000e+02 : f32
    %22 = vector.broadcast %cst_11 : f32 to vector<16x128xf32>
    %23 = arith.subf %21, %22 : vector<16x128xf32>
    %cst_12 = arith.constant 8.000000e-02 : f32
    %24 = vector.broadcast %cst_12 : f32 to vector<16x128xf32>
    %25 = arith.mulf %24, %23 : vector<16x128xf32>
    %cst_13 = arith.constant 4.000000e+00 : f32
    %26 = vector.broadcast %cst_13 : f32 to vector<16x128xf32>
    %27 = arith.subf %25, %26 : vector<16x128xf32>
    %cst_14 = arith.constant -4.000000e+00 : f32
    %cst_15 = arith.constant 4.000000e+00 : f32
    %28 = vector.broadcast %cst_14 : f32 to vector<16x128xf32>
    %29 = arith.maximumf %28, %27 : vector<16x128xf32>
    %30 = vector.broadcast %cst_15 : f32 to vector<16x128xf32>
    %31 = arith.minimumf %30, %29 : vector<16x128xf32>
    %c0_16 = arith.constant 0 : index
    %c0_17 = arith.constant 0 : index
    %32 = vector.load %arg5[%c0_16, %c0_17] : memref<16x128xf32, #tpu.memory_space<vmem>>, vector<16x128xf32>
    tpu.vector_store %arg5[%c0_16, %c0_17], %31 {strides = array<i32>} : memref<16x128xf32, #tpu.memory_space<vmem>>, vector<16x128xf32>,
    return
  }
  func.func @transform_0(%arg0: i32) -> (i32, i32) {
    %c0_i32 = arith.constant 0 : i32
    %c0_i32_0 = arith.constant 0 : i32
    %c0_i32_1 = arith.constant 0 : i32
    return %c0_i32, %c0_i32_0 : i32, i32
  }
  func.func @transform_1(%arg0: i32) -> (i32, i32) {
    %c0_i32 = arith.constant 0 : i32
    %c0_i32_0 = arith.constant 0 : i32
    return %arg0, %c0_i32 : i32, i32
  }
  func.func @transform_2(%arg0: i32) -> (i32, i32) {
    %c0_i32 = arith.constant 0 : i32
    %c0_i32_0 = arith.constant 0 : i32
    %c0_i32_1 = arith.constant 0 : i32
    return %c0_i32, %c0_i32_0 : i32, i32
  }
  func.func @transform_3(%arg0: i32) -> (i32, i32) {
    %c0_i32 = arith.constant 0 : i32
    %c0_i32_0 = arith.constant 0 : i32
    %c0_i32_1 = arith.constant 0 : i32
    return %c0_i32, %c0_i32_0 : i32, i32
  }
  func.func @transform_4(%arg0: i32) -> (i32, i32) {
    %c0_i32 = arith.constant 0 : i32
    %c0_i32_0 = arith.constant 0 : i32
    return %arg0, %c0_i32 : i32, i32
  }
}

</mosaic_0001>

<llo_original>
// kernel: reverse.1
$region0: #{reverse.1}
  %s0 = inlined_call_operand.vmem [shape: bf16[512], index: 0, kind: input, shape index: {}]
  %s1 = inlined_call_operand.vmem [shape: bf16[512], index: 1, kind: output, shape index: {}]
  %v2 = vlaneseq
  %v3 = vsub.s32 127, %v2
  %4 = vset.pattern.permute.xlu0 %v3
  $region1: #{reverse.1} parent=0
    #allocation0 [shape = 'u8[8192]{0}', space=vmem, size = 0x2000, scoped, tag = 'operand span for operand 0']
    #allocation1 [shape = 'u8[2048]{0}', space=vmem, size = 0x800, scoped, tag = 'packed  for operand 0']
    #allocation2 [shape = 'u8[4096]{0}', space=vmem, size = 0x1000, scoped, tag = 'operand span for operand 1']
    #allocation3 [shape = 'u8[1024]{0}', space=vmem, size = 0x400, scoped, tag = 'packed  for operand 1']
    %s5 = scalar_lea.vmem [#allocation1], 2
    // Predicated region
    $region2: #{reverse.1} parent=1 // pred_check
      _
    $region3: #{reverse.1} parent=1 // pred_check_branch
      %7 = sbr.rel (0) target = $region5
    $region4: #{reverse.1} parent=1 // pred_region
      // Predicated region
      $region6: #{reverse.1} parent=4 // pred_check
        _
      $region7: #{reverse.1} parent=4 // pred_check_branch
        %9 = sbr.rel target = $region9
      $region8: #{reverse.1} parent=4 // pred_region
        // Predicated region
        $region21: #{reverse.1} parent=8 // pred_check
          _
        $region22: #{reverse.1} parent=8 // pred_check_branch
          %24 = sbr.rel (0) target = $region24
        $region23: #{reverse.1} parent=8 // pred_region
          loop: start=0, step=1, limit=1
          $region25: #{reverse.1} parent=23 // loop_pre_header
            _
          $region26: #{reverse.1} parent=23 // loop_header
            %s27 = sphi 0, %s31
            %p28 = scmp.ge.s32.totalorder %s27, 1
            %s32 = sphi %s0, %s0
            %s33 = sphi %s5, %s5
          $region27: #{reverse.1} parent=23 // loop_header_branch
            %30 = sbr.rel (%p28) target = $region31
          $region28: #{reverse.1} parent=23 // loop_body
            %v34 = vld [vmem:[%s32] sm:$0x3]
            %35 = vst [vmem:[%s33] sm:$0x3] %v34
          $region29: #{reverse.1} parent=23 // loop_footer
            %s31 = sadd.s32 1, %s27
          $region30: #{reverse.1} parent=23 // loop_footer_branch
            %26 = sbr.rel target = $region26
          $region31: #{reverse.1} parent=23 // loop_exit
            _
        $region24: #{reverse.1} parent=8 // pred_fallthru
          _
      $region9: #{reverse.1} parent=4 // pred_fallthru
        _
      // Predicated region
      $region10: #{reverse.1} parent=4 // pred_check
        _
      $region11: #{reverse.1} parent=4 // pred_check_branch
        %11 = sbr.rel (0) target = $region13
      $region12: #{reverse.1} parent=4 // pred_region
        loop: start=0, step=1, limit=1
        $region14: #{reverse.1} parent=12 // loop_pre_header
          _
        $region15: #{reverse.1} parent=12 // loop_header
          %s14 = sphi 0, %s18
          %p15 = scmp.ge.s32.totalorder %s14, 1
          %s19 = sphi %s0, %s0
          %s20 = sphi %s5, %s5
        $region16: #{reverse.1} parent=12 // loop_header_branch
          %17 = sbr.rel (%p15) target = $region20
        $region17: #{reverse.1} parent=12 // loop_body
          %v21 = vld [vmem:[%s19] sm:$0x3]
          %22 = vst [vmem:[%s20] sm:$0x3] %v21
        $region18: #{reverse.1} parent=12 // loop_footer
          %s18 = sadd.s32 1, %s14
        $region19: #{reverse.1} parent=12 // loop_footer_branch
          %13 = sbr.rel target = $region15
        $region20: #{reverse.1} parent=12 // loop_exit
          _
      $region13: #{reverse.1} parent=4 // pred_fallthru
        _
    $region5: #{reverse.1} parent=1 // pred_fallthru
      _
    %36 = vnop
    %s38 = smul.u32 2, 2
    %s39 = sshllo.u32 0, %s38
    %s40 = scalar_lea.vmem [#allocation1], 2
    %s41 = sshrl.u32 %s39, 1
    %s42 = sor.u32 %s39, %s41
    %s43 = sand.u32 %s42, 85
    %s44 = sshrl.u32 %s43, 1
    %s45 = sor.u32 %s43, %s44
    %s46 = sand.u32 51, %s45
    %s47 = sshrl.u32 %s46, 2
    %s48 = sor.u32 %s46, %s47
    %s49 = sand.u32 15, %s48
    %v50 = vld [vmem:[%s40] sm:%s49]
    %v51 = vunpack.c.l.bf16 %v50
    %v52 = vunpack.c.h.bf16 %v50
    %s53 = scalar_lea.vmem [#allocation0], 8
    %54 = vst [vmem:[%s53] sm:%s39] %v51
    %s55 = sshrl.u32 %s39, 1
    %s56 = sor.u32 %s39, %s55
    %s57 = sand.u32 %s56, 85
    %s58 = sshrl.u32 %s57, 1
    %s59 = sor.u32 %s57, %s58
    %s60 = sand.u32 51, %s59
    %s61 = sshrl.u32 %s60, 2
    %s62 = sor.u32 %s60, %s61
    %s63 = sand.u32 15, %s62
    %v64 = vld [vmem:[#allocation1] sm:%s63]
    %v65 = vunpack.c.l.bf16 %v64
    %v66 = vunpack.c.h.bf16 %v64
    %67 = vst [vmem:[#allocation0] sm:%s39] %v65
    %s68 = scalar_lea.vmem [#allocation0], 7
    %v69 = vld [vmem:[%s68] ss:$-1 sm:$0xff]
    %v70 = vrot.slane %v69, 4
    %71 = vperm.xlu0 %4, %v70
    %v72 = vpop.permute.xlu0 %71
    %73 = vst [vmem:[#allocation2] sm:$0xff] %v72
    %s74 = scalar_lea.vmem [#allocation0], 8
    %s75 = scalar_lea.vmem %s74, 7 [#allocation0]
    %v76 = vld [vmem:[%s75] ss:$-1 sm:$0xff]
    %v77 = vrot.slane %v76, 4
    %78 = vperm.xlu0 %4, %v77
    %v79 = vpop.permute.xlu0 %78
    %v80 = vlaneseq
    %v81 = vshrl.u32 %v80, 7
    %vm82 = vcmp.lt.s32.totalorder %v81, 4
    %83 = vst.msk [vmem:[#allocation2] sm:$0xff] %vm82, %v79
    %s85 = smul.u32 2, 2
    %s86 = sshllo.u32 0, %s85
    %s87 = sshrl.u32 %s85, 1
    %v88 = vld [vmem:[#allocation2] sm:%s86]
    %v89 = vpack.c.bf16 0.0, %v88
    %s90 = sshllo.u32 0, %s87
    %91 = vst [vmem:[#allocation3] sm:%s90] %v89
    // Predicated region
    $region32: #{reverse.1} parent=1 // pred_check
      _
    $region33: #{reverse.1} parent=1 // pred_check_branch
      %93 = sbr.rel (0) target = $region35
    $region34: #{reverse.1} parent=1 // pred_region
      // Predicated region
      $region36: #{reverse.1} parent=34 // pred_check
        _
      $region37: #{reverse.1} parent=34 // pred_check_branch
        %95 = sbr.rel target = $region39
      $region38: #{reverse.1} parent=34 // pred_region
        // Predicated region
        $region51: #{reverse.1} parent=38 // pred_check
          _
        $region52: #{reverse.1} parent=38 // pred_check_branch
          %110 = sbr.rel (0) target = $region54
        $region53: #{reverse.1} parent=38 // pred_region
          loop: start=0, step=1, limit=1
          $region55: #{reverse.1} parent=53 // loop_pre_header
            _
          $region56: #{reverse.1} parent=53 // loop_header
            %s113 = sphi 0, %s117
            %p114 = scmp.ge.s32.totalorder %s113, 1
            %s118 = sphi [#allocation3], [#allocation3]
            %s119 = sphi %s1, %s1
          $region57: #{reverse.1} parent=53 // loop_header_branch
            %116 = sbr.rel (%p114) target = $region61
          $region58: #{reverse.1} parent=53 // loop_body
            %v120 = vld [vmem:[%s118] sm:$0x3]
            %121 = vst [vmem:[%s119] sm:$0x3] %v120
          $region59: #{reverse.1} parent=53 // loop_footer
            %s117 = sadd.s32 1, %s113
          $region60: #{reverse.1} parent=53 // loop_footer_branch
            %112 = sbr.rel target = $region56
          $region61: #{reverse.1} parent=53 // loop_exit
            _
        $region54: #{reverse.1} parent=38 // pred_fallthru
          _
      $region39: #{reverse.1} parent=34 // pred_fallthru
        _
      // Predicated region
      $region40: #{reverse.1} parent=34 // pred_check
        _
      $region41: #{reverse.1} parent=34 // pred_check_branch
        %97 = sbr.rel (0) target = $region43
      $region42: #{reverse.1} parent=34 // pred_region
        loop: start=0, step=1, limit=1
        $region44: #{reverse.1} parent=42 // loop_pre_header
          _
        $region45: #{reverse.1} parent=42 // loop_header
          %s100 = sphi 0, %s104
          %p101 = scmp.ge.s32.totalorder %s100, 1
          %s105 = sphi [#allocation3], [#allocation3]
          %s106 = sphi %s1, %s1
        $region46: #{reverse.1} parent=42 // loop_header_branch
          %103 = sbr.rel (%p101) target = $region50
        $region47: #{reverse.1} parent=42 // loop_body
          %v107 = vld [vmem:[%s105] sm:$0x3]
          %108 = vst [vmem:[%s106] sm:$0x3] %v107
        $region48: #{reverse.1} parent=42 // loop_footer
          %s104 = sadd.s32 1, %s100
        $region49: #{reverse.1} parent=42 // loop_footer_branch
          %99 = sbr.rel target = $region45
        $region50: #{reverse.1} parent=42 // loop_exit
          _
      $region43: #{reverse.1} parent=34 // pred_fallthru
        _
    $region35: #{reverse.1} parent=1 // pred_fallthru
      _
    %122 = vnop

// kernel: _log_fbank_impl.1
$region0: #{_log_fbank_impl.1}
  #allocation0 [shape = 'u32[]', space=smem, size = 0x4, offset = 0x4, fixed_abs, tag = 'smem constant byte address 0x4 - core index']
  #allocation1 [shape = 'u32[144,128]{1,0:T(1,128)}', space=vmem, size = 0x12000, scoped, tag = 'internal scratch']
  #allocation2 [shape = 'f32[1,1]{1,0:T(1,128)S(6)}', space=smem, size = 0x200, scoped, tag = 'scoped memory for _log_fbank_impl.1']
  %s0 = inlined_call_operand.<no memory space> [shape: f32[1,1], index: 0, kind: input, shape index: {}]
  %s1 = inlined_call_operand.vmem [shape: bf16[32,896], index: 1, kind: input, shape index: {}]
  %s2 = inlined_call_operand.vmem [shape: bf16[896,1024], index: 2, kind: input, shape index: {}]
  %s3 = inlined_call_operand.vmem [shape: bf16[512,128], index: 3, kind: input, shape index: {}]
  %s4 = inlined_call_operand.vmem [shape: f32[32,128], index: 4, kind: output, shape index: {}]
  %s5 = sld [smem:[#allocation0]]
  $region49: #{_log_fbank_impl.1} parent=0
    _
  %s7 = ssub.s32 1, %s5
  %s8 = scalar_select 0, %s7, %s5
  %9 = sst [smem:[#allocation2]] %s0
  loop: start=0, step=1, limit=4
  $region2: #{_log_fbank_impl.1} parent=0 // loop_pre_header
    _
  $region3: #{_log_fbank_impl.1} parent=0 // loop_header
    %s11 = sphi 0, %s15
    %p12 = scmp.ge.s32.totalorder %s11, 4
    %s19 = sphi 0, %s19
    %s21 = sphi 0, %s19
    %s22 = sphi 0, %s21
    %s36 = sphi 0, %s22
    %s42 = sphi 0, %s44
    %s45 = sphi 0, %s42
    %s46 = sphi 0, %s45
    %s62 = sphi 0, %s46
    %s66 = sphi 0, %s66
    %s68 = sphi 0, %s66
    %s69 = sphi 0, %s68
    %s83 = sphi 0, %s69
    %s87 = sphi 0, %s87
    %s89 = sphi 0, %s87
    %s90 = sphi 0, %s89
    %s104 = sphi 0, %s90
    %s110 = sphi 0, %s112
    %s113 = sphi 0, %s110
    %s114 = sphi 0, %s113
    %s130 = sphi 0, %s114
  $region4: #{_log_fbank_impl.1} parent=0 // loop_header_branch
    %14 = sbr.rel (%p12) target = $region8
  $region5: #{_log_fbank_impl.1} parent=0 // loop_body
    %s16 = ssub.s32 %s11, 1
    %s17 = ssub.s32 %s11, 2
    %s18 = sadd.s32 %s11, 1
    %s20 = sadd.s32 %s19, 1
    %p23 = scmp.eq.s32.totalorder %s11, 1
    %p24 = scmp.ne.s32.totalorder %s19, %s21
    %p25 = scmp.eq.s32.totalorder %s11, 0
    %p26 = por %p24, %p25
    %p27 = scmp.ne.s32.totalorder %s19, %s21
    %p28 = scmp.eq.s32.totalorder %s16, 1
    %p29 = por %p27, %p28
    %p30 = scmp.ne.s32.totalorder %s21, %s22
    %p31 = scmp.eq.s32.totalorder %s16, 0
    %p32 = por %p30, %p31
    %p33 = scmp.ne.s32.totalorder %s21, %s22
    %p34 = scmp.eq.s32.totalorder %s17, 1
    %p35 = por %p33, %p34
    %p37 = scmp.ne.s32.totalorder %s22, %s36
    %p38 = scmp.eq.s32.totalorder %s17, 0
    %p39 = por %p37, %p38
    %s40 = ssub.s32 %s11, %s18
    %p41 = scmp.eq.s32.totalorder %s40, 0
    %s43 = sadd.s32 %s42, 1
    %s44 = scalar_select %p41, %s42, %s43
    %p47 = pneg %p41
    %p48 = scmp.eq.s32.totalorder %s11, 1
    %p49 = por %p47, %p48
    %p50 = scmp.ne.s32.totalorder %s42, %s45
    %p51 = scmp.eq.s32.totalorder %s11, 0
    %p52 = por %p50, %p51
    %p53 = scmp.ne.s32.totalorder %s42, %s45
    %p54 = scmp.eq.s32.totalorder %s16, 1
    %p55 = por %p53, %p54
    %p56 = scmp.ne.s32.totalorder %s45, %s46
    %p57 = scmp.eq.s32.totalorder %s16, 0
    %p58 = por %p56, %p57
    %p59 = scmp.ne.s32.totalorder %s45, %s46
    %p60 = scmp.eq.s32.totalorder %s17, 1
    %p61 = por %p59, %p60
    %p63 = scmp.ne.s32.totalorder %s46, %s62
    %p64 = scmp.eq.s32.totalorder %s17, 0
    %p65 = por %p63, %p64
    %s67 = sadd.s32 %s66, 1
    %p70 = scmp.eq.s32.totalorder %s11, 1
    %p71 = scmp.ne.s32.totalorder %s66, %s68
    %p72 = scmp.eq.s32.totalorder %s11, 0
    %p73 = por %p71, %p72
    %p74 = scmp.ne.s32.totalorder %s66, %s68
    %p75 = scmp.eq.s32.totalorder %s16, 1
    %p76 = por %p74, %p75
    %p77 = scmp.ne.s32.totalorder %s68, %s69
    %p78 = scmp.eq.s32.totalorder %s16, 0
    %p79 = por %p77, %p78
    %p80 = scmp.ne.s32.totalorder %s68, %s69
    %p81 = scmp.eq.s32.totalorder %s17, 1
    %p82 = por %p80, %p81
    %p84 = scmp.ne.s32.totalorder %s69, %s83
    %p85 = scmp.eq.s32.totalorder %s17, 0
    %p86 = por %p84, %p85
    %s88 = sadd.s32 %s87, 1
    %p91 = scmp.eq.s32.totalorder %s11, 1
    %p92 = scmp.ne.s32.totalorder %s87, %s89
    %p93 = scmp.eq.s32.totalorder %s11, 0
    %p94 = por %p92, %p93
    %p95 = scmp.ne.s32.totalorder %s87, %s89
    %p96 = scmp.eq.s32.totalorder %s16, 1
    %p97 = por %p95, %p96
    %p98 = scmp.ne.s32.totalorder %s89, %s90
    %p99 = scmp.eq.s32.totalorder %s16, 0
    %p100 = por %p98, %p99
    %p101 = scmp.ne.s32.totalorder %s89, %s90
    %p102 = scmp.eq.s32.totalorder %s17, 1
    %p103 = por %p101, %p102
    %p105 = scmp.ne.s32.totalorder %s90, %s104
    %p106 = scmp.eq.s32.totalorder %s17, 0
    %p107 = por %p105, %p106
    %s108 = ssub.s32 %s11, %s18
    %p109 = scmp.eq.s32.totalorder %s108, 0
    %s111 = sadd.s32 %s110, 1
    %s112 = scalar_select %p109, %s110, %s111
    %p115 = pneg %p109
    %p116 = scmp.eq.s32.totalorder %s11, 1
    %p117 = por %p115, %p116
    %p118 = scmp.ne.s32.totalorder %s110, %s113
    %p119 = scmp.eq.s32.totalorder %s11, 0
    %p120 = por %p118, %p119
    %p121 = scmp.ne.s32.totalorder %s110, %s113
    %p122 = scmp.eq.s32.totalorder %s16, 1
    %p123 = por %p121, %p122
    %p124 = scmp.ne.s32.totalorder %s113, %s114
    %p125 = scmp.eq.s32.totalorder %s16, 0
    %p126 = por %p124, %p125
    %p127 = scmp.ne.s32.totalorder %s113, %s114
    %p128 = scmp.eq.s32.totalorder %s17, 1
    %p129 = por %p127, %p128
    %p131 = scmp.ne.s32.totalorder %s114, %s130
    %p132 = scmp.eq.s32.totalorder %s17, 0
    %p133 = por %p131, %p132
    %p134 = scmp.le.s32.totalorder 1, %s11
    %p135 = scmp.lt.s32.totalorder %s11, 3
    %p136 = pnand %p134, %p135
    %p137 = pneg %p136
    // Predicated region
    $region9: #{_log_fbank_impl.1} parent=5 // pred_check
      _
    $region10: #{_log_fbank_impl.1} parent=5 // pred_check_branch
      %139 = sbr.rel (%p136) target = $region12
    $region11: #{_log_fbank_impl.1} parent=5 // pred_region
      %s140 = ssub.s32 %s11, 1
      // Predicated region
      $region13: #{_log_fbank_impl.1} parent=11 // pred_check
        %p141 = pneg %p32
      $region14: #{_log_fbank_impl.1} parent=11 // pred_check_branch
        %143 = sbr.rel (%p141) target = $region16
      $region15: #{_log_fbank_impl.1} parent=11 // pred_region
        _
      $region16: #{_log_fbank_impl.1} parent=11 // pred_fallthru
        _
      // Predicated region
      $region17: #{_log_fbank_impl.1} parent=11 // pred_check
        %p144 = pneg %p79
      $region18: #{_log_fbank_impl.1} parent=11 // pred_check_branch
        %146 = sbr.rel (%p144) target = $region20
      $region19: #{_log_fbank_impl.1} parent=11 // pred_region
        _
      $region20: #{_log_fbank_impl.1} parent=11 // pred_fallthru
        _
      // Predicated region
      $region21: #{_log_fbank_impl.1} parent=11 // pred_check
        %p147 = pneg %p100
      $region22: #{_log_fbank_impl.1} parent=11 // pred_check_branch
        %149 = sbr.rel (%p147) target = $region24
      $region23: #{_log_fbank_impl.1} parent=11 // pred_region
        _
      $region24: #{_log_fbank_impl.1} parent=11 // pred_fallthru
        _
    $region12: #{_log_fbank_impl.1} parent=5 // pred_fallthru
      _
    %p150 = scmp.lt.s32.totalorder %s11, 2
    // Predicated region
    $region25: #{_log_fbank_impl.1} parent=5 // pred_check
      %p151 = pneg %p150
    $region26: #{_log_fbank_impl.1} parent=5 // pred_check_branch
      %153 = sbr.rel (%p151) target = $region28
    $region27: #{_log_fbank_impl.1} parent=5 // pred_region
      // Predicated region
      $region29: #{_log_fbank_impl.1} parent=27 // pred_check
        %p154 = pneg %p52
      $region30: #{_log_fbank_impl.1} parent=27 // pred_check_branch
        %156 = sbr.rel (%p154) target = $region32
      $region31: #{_log_fbank_impl.1} parent=27 // pred_region
        %s157 = smul.u32 2, %s11
        %p158 = scmp.lt.s32.totalorder %s157, 3
        %s159 = scalar_select %p158, %s157, 3
        %s160 = smul.addr %s159, 7
        %s161 = smul.addr %s160, 4
        %s162 = scalar_lea.vmem %s1, %s161
        %s163 = smul.u32 2, %s11
      $region32: #{_log_fbank_impl.1} parent=27 // pred_fallthru
        _
    $region28: #{_log_fbank_impl.1} parent=5 // pred_fallthru
      _
    %p164 = scmp.le.s32.totalorder 1, %s11
    %p165 = scmp.lt.s32.totalorder %s11, 3
    %p166 = pnand %p164, %p165
    %p167 = pneg %p166
    // Predicated region
    $region33: #{_log_fbank_impl.1} parent=5 // pred_check
      _
    $region34: #{_log_fbank_impl.1} parent=5 // pred_check_branch
      %169 = sbr.rel (%p166) target = $region36
    $region35: #{_log_fbank_impl.1} parent=5 // pred_region
      %s170 = ssub.s32 %s11, 1
      %p171 = pneg %p32
      %p172 = pneg %p29
      %s173 = smul.u32 2, %s16
      %p174 = scmp.lt.s32.totalorder %s173, 3
      %s175 = scalar_select %p174, %s173, 3
      %s176 = smul.addr %s175, 7
      %s177 = smul.addr %s176, 4
      %s178 = scalar_lea.vmem %s1, %s177
      %p179 = pneg %p58
      %p180 = pneg %p55
      %p181 = pneg %p79
      %p182 = pneg %p76
      %p183 = pneg %p100
      %p184 = pneg %p97
      %p185 = pneg %p126
      %p186 = pneg %p123
      %s187 = smul.u32 2, %s16
      %p188 = scmp.lt.s32.totalorder %s187, 3
      %s189 = scalar_select %p188, %s187, 3
      %s190 = smul.addr %s189, 8
      %s191 = scalar_lea.vmem %s4, %s190
      %s192 = smul.u32 2, %s16
      %p193 = scmp.lt.s32.totalorder %s192, 3
      %s194 = scalar_select %p193, %s192, 3
      %s195 = smul.addr %s194, 7
      %s196 = smul.addr %s195, 4
      %s197 = scalar_lea.vmem %s1, %s196
      %s198 = smul.u32 2, %s16
      %s199 = smul.u32 2, %s16
      %p200 = scmp.lt.s32.totalorder %s199, 3
      %s201 = scalar_select %p200, %s199, 3
      %s202 = smul.addr %s201, 8
      %s203 = scalar_lea.vmem %s4, %s202
      %s204 = smul.u32 2, %s16
      %v206 = vld [vmem:[%s197] sm:$0xff]
      %v207 = vld [vmem:[%s197 + $0x8] sm:$0xff]
      %v208 = vld [vmem:[%s197 + $0x10] sm:$0xff]
      %v209 = vld [vmem:[%s197 + $0x18] sm:$0xf]
      %v210 = vld [vmem:[%s197 + $0x1c] sm:$0xff]
      %v211 = vld [vmem:[%s197 + $0x24] sm:$0xff]
      %v212 = vld [vmem:[%s197 + $0x2c] sm:$0xff]
      %v213 = vld [vmem:[%s197 + $0x34] sm:$0xf]
      %v214 = vld [vmem:[%s2] sm:$0xff]
      %v215 = vld [vmem:[%s2 + $0x8] sm:$0xff]
      %v216 = vld [vmem:[%s2 + $0x10] sm:$0xff]
      %v217 = vld [vmem:[%s2 + $0x18] sm:$0xff]
      %v218 = vld [vmem:[%s2 + $0x20] sm:$0xff]
      %v219 = vld [vmem:[%s2 + $0x28] sm:$0xff]
      %v220 = vld [vmem:[%s2 + $0x30] sm:$0xff]
      %v221 = vld [vmem:[%s2 + $0x38] sm:$0xff]
      %v222 = vld [vmem:[%s2 + $0x40] sm:$0xff]
      %v223 = vld [vmem:[%s2 + $0x48] sm:$0xff]
      %v224 = vld [vmem:[%s2 + $0x50] sm:$0xff]
      %v225 = vld [vmem:[%s2 + $0x58] sm:$0xff]
      %v226 = vld [vmem:[%s2 + $0x60] sm:$0xff]
      %v227 = vld [vmem:[%s2 + $0x68] sm:$0xff]
      %v228 = vld [vmem:[%s2 + $0x70] sm:$0xff]
      %v229 = vld [vmem:[%s2 + $0x78] sm:$0xff]
      %v230 = vld [vmem:[%s2 + $0x80] sm:$0xff]
      %v231 = vld [vmem:[%s2 + $0x88] sm:$0xff]
      %v232 = vld [vmem:[%s2 + $0x90] sm:$0xff]
      %v233 = vld [vmem:[%s2 + $0x98] sm:$0xff]
      %v234 = vld [vmem:[%s2 + $0xa0] sm:$0xff]
      %v235 = vld [vmem:[%s2 + $0xa8] sm:$0xff]
      %v236 = vld [vmem:[%s2 + $0xb0] sm:$0xff]
      %v237 = vld [vmem:[%s2 + $0xb8] sm:$0xff]
      %v238 = vld [vmem:[%s2 + $0xc0] sm:$0xff]
      %v239 = vld [vmem:[%s2 + $0xc8] sm:$0xff]
      %v240 = vld [vmem:[%s2 + $0xd0] sm:$0xff]
      %v241 = vld [vmem:[%s2 + $0xd8] sm:$0xff]
      %v242 = vld [vmem:[%s2 + $0xe0] sm:$0xff]
      %v243 = vld [vmem:[%s2 + $0xe8] sm:$0xff]
      %v244 = vld [vmem:[%s2 + $0xf0] sm:$0xff]
      %v245 = vld [vmem:[%s2 + $0xf8] sm:$0xff]
      %v246 = vld [vmem:[%s2 + $0x100] sm:$0xff]
      %v247 = vld [vmem:[%s2 + $0x108] sm:$0xff]
      %v248 = vld [vmem:[%s2 + $0x110] sm:$0xff]
      %v249 = vld [vmem:[%s2 + $0x118] sm:$0xff]
      %v250 = vld [vmem:[%s2 + $0x120] sm:$0xff]
      %v251 = vld [vmem:[%s2 + $0x128] sm:$0xff]
      %v252 = vld [vmem:[%s2 + $0x130] sm:$0xff]
      %v253 = vld [vmem:[%s2 + $0x138] sm:$0xff]
      %v254 = vld [vmem:[%s2 + $0x140] sm:$0xff]
      %v255 = vld [vmem:[%s2 + $0x148] sm:$0xff]
      %v256 = vld [vmem:[%s2 + $0x150] sm:$0xff]
      %v257 = vld [vmem:[%s2 + $0x158] sm:$0xff]
      %v258 = vld [vmem:[%s2 + $0x160] sm:$0xff]
      %v259 = vld [vmem:[%s2 + $0x168] sm:$0xff]
      %v260 = vld [vmem:[%s2 + $0x170] sm:$0xff]
      %v261 = vld [vmem:[%s2 + $0x178] sm:$0xff]
      %v262 = vld [vmem:[%s2 + $0x180] sm:$0xff]
      %v263 = vld [vmem:[%s2 + $0x188] sm:$0xff]
      %v264 = vld [vmem:[%s2 + $0x190] sm:$0xff]
      %v265 = vld [vmem:[%s2 + $0x198] sm:$0xff]
      %v266 = vld [vmem:[%s2 + $0x1a0] sm:$0xff]
      %v267 = vld [vmem:[%s2 + $0x1a8] sm:$0xff]
      %v268 = vld [vmem:[%s2 + $0x1b0] sm:$0xff]
      %v269 = vld [vmem:[%s2 + $0x1b8] sm:$0xff]
      %v270 = vld [vmem:[%s2 + $0x1c0] sm:$0xff]
      %v271 = vld [vmem:[%s2 + $0x1c8] sm:$0xff]
      %v272 = vld [vmem:[%s2 + $0x1d0] sm:$0xff]
      %v273 = vld [vmem:[%s2 + $0x1d8] sm:$0xff]
      %v274 = vld [vmem:[%s2 + $0x1e0] sm:$0xff]
      %v275 = vld [vmem:[%s2 + $0x1e8] sm:$0xff]
      %v276 = vld [vmem:[%s2 + $0x1f0] sm:$0xff]
      %v277 = vld [vmem:[%s2 + $0x1f8] sm:$0xff]
      %v278 = vld [vmem:[%s2 + $0x200] sm:$0xff]
      %v279 = vld [vmem:[%s2 + $0x208] sm:$0xff]
      %v280 = vld [vmem:[%s2 + $0x210] sm:$0xff]
      %v281 = vld [vmem:[%s2 + $0x218] sm:$0xff]
      %v282 = vld [vmem:[%s2 + $0x220] sm:$0xff]
      %v283 = vld [vmem:[%s2 + $0x228] sm:$0xff]
      %v284 = vld [vmem:[%s2 + $0x230] sm:$0xff]
      %v285 = vld [vmem:[%s2 + $0x238] sm:$0xff]
      %v286 = vld [vmem:[%s2 + $0x240] sm:$0xff]
      %v287 = vld [vmem:[%s2 + $0x248] sm:$0xff]
      %v288 = vld [vmem:[%s2 + $0x250] sm:$0xff]
      %v289 = vld [vmem:[%s2 + $0x258] sm:$0xff]
      %v290 = vld [vmem:[%s2 + $0x260] sm:$0xff]
      %v291 = vld [vmem:[%s2 + $0x268] sm:$0xff]
      %v292 = vld [vmem:[%s2 + $0x270] sm:$0xff]
      %v293 = vld [vmem:[%s2 + $0x278] sm:$0xff]
      %v294 = vld [vmem:[%s2 + $0x280] sm:$0xff]
      %v295 = vld [vmem:[%s2 + $0x288] sm:$0xff]
      %v296 = vld [vmem:[%s2 + $0x290] sm:$0xff]
      %v297 = vld [vmem:[%s2 + $0x298] sm:$0xff]
      %v298 = vld [vmem:[%s2 + $0x2a0] sm:$0xff]
      %v299 = vld [vmem:[%s2 + $0x2a8] sm:$0xff]
      %v300 = vld [vmem:[%s2 + $0x2b0] sm:$0xff]
      %v301 = vld [vmem:[%s2 + $0x2b8] sm:$0xff]
      %v302 = vld [vmem:[%s2 + $0x2c0] sm:$0xff]
      %v303 = vld [vmem:[%s2 + $0x2c8] sm:$0xff]
      %v304 = vld [vmem:[%s2 + $0x2d0] sm:$0xff]
      %v305 = vld [vmem:[%s2 + $0x2d8] sm:$0xff]
      %v306 = vld [vmem:[%s2 + $0x2e0] sm:$0xff]
      %v307 = vld [vmem:[%s2 + $0x2e8] sm:$0xff]
      %v308 = vld [vmem:[%s2 + $0x2f0] sm:$0xff]
      %v309 = vld [vmem:[%s2 + $0x2f8] sm:$0xff]
      %v310 = vld [vmem:[%s2 + $0x300] sm:$0xff]
      %v311 = vld [vmem:[%s2 + $0x308] sm:$0xff]
      %v312 = vld [vmem:[%s2 + $0x310] sm:$0xff]
      %v313 = vld [vmem:[%s2 + $0x318] sm:$0xff]
      %v314 = vld [vmem:[%s2 + $0x320] sm:$0xff]
      %v315 = vld [vmem:[%s2 + $0x328] sm:$0xff]
      %v316 = vld [vmem:[%s2 + $0x330] sm:$0xff]
      %v317 = vld [vmem:[%s2 + $0x338] sm:$0xff]
      %v318 = vld [vmem:[%s2 + $0x340] sm:$0xff]
      %v319 = vld [vmem:[%s2 + $0x348] sm:$0xff]
      %v320 = vld [vmem:[%s2 + $0x350] sm:$0xff]
      %v321 = vld [vmem:[%s2 + $0x358] sm:$0xff]
      %v322 = vld [vmem:[%s2 + $0x360] sm:$0xff]
      %v323 = vld [vmem:[%s2 + $0x368] sm:$0xff]
      %v324 = vld [vmem:[%s2 + $0x370] sm:$0xff]
      %v325 = vld [vmem:[%s2 + $0x378] sm:$0xff]
      %v326 = vld [vmem:[%s2 + $0x380] sm:$0xff]
      %v327 = vld [vmem:[%s2 + $0x388] sm:$0xff]
      %v328 = vld [vmem:[%s2 + $0x390] sm:$0xff]
      %v329 = vld [vmem:[%s2 + $0x398] sm:$0xff]
      %v330 = vld [vmem:[%s2 + $0x3a0] sm:$0xff]
      %v331 = vld [vmem:[%s2 + $0x3a8] sm:$0xff]
      %v332 = vld [vmem:[%s2 + $0x3b0] sm:$0xff]
      %v333 = vld [vmem:[%s2 + $0x3b8] sm:$0xff]
      %v334 = vld [vmem:[%s2 + $0x3c0] sm:$0xff]
      %v335 = vld [vmem:[%s2 + $0x3c8] sm:$0xff]
      %v336 = vld [vmem:[%s2 + $0x3d0] sm:$0xff]
      %v337 = vld [vmem:[%s2 + $0x3d8] sm:$0xff]
      %v338 = vld [vmem:[%s2 + $0x3e0] sm:$0xff]
      %v339 = vld [vmem:[%s2 + $0x3e8] sm:$0xff]
      %v340 = vld [vmem:[%s2 + $0x3f0] sm:$0xff]
      %v341 = vld [vmem:[%s2 + $0x3f8] sm:$0xff]
      %v342 = vld [vmem:[%s2 + $0x400] sm:$0xff]
      %v343 = vld [vmem:[%s2 + $0x408] sm:$0xff]
      %v344 = vld [vmem:[%s2 + $0x410] sm:$0xff]
      %v345 = vld [vmem:[%s2 + $0x418] sm:$0xff]
      %v346 = vld [vmem:[%s2 + $0x420] sm:$0xff]
      %v347 = vld [vmem:[%s2 + $0x428] sm:$0xff]
      %v348 = vld [vmem:[%s2 + $0x430] sm:$0xff]
      %v349 = vld [vmem:[%s2 + $0x438] sm:$0xff]
      %v350 = vld [vmem:[%s2 + $0x440] sm:$0xff]
      %v351 = vld [vmem:[%s2 + $0x448] sm:$0xff]
      %v352 = vld [vmem:[%s2 + $0x450] sm:$0xff]
      %v353 = vld [vmem:[%s2 + $0x458] sm:$0xff]
      %v354 = vld [vmem:[%s2 + $0x460] sm:$0xff]
      %v355 = vld [vmem:[%s2 + $0x468] sm:$0xff]
      %v356 = vld [vmem:[%s2 + $0x470] sm:$0xff]
      %v357 = vld [vmem:[%s2 + $0x478] sm:$0xff]
      %v358 = vld [vmem:[%s2 + $0x480] sm:$0xff]
      %v359 = vld [vmem:[%s2 + $0x488] sm:$0xff]
      %v360 = vld [vmem:[%s2 + $0x490] sm:$0xff]
      %v361 = vld [vmem:[%s2 + $0x498] sm:$0xff]
      %v362 = vld [vmem:[%s2 + $0x4a0] sm:$0xff]
      %v363 = vld [vmem:[%s2 + $0x4a8] sm:$0xff]
      %v364 = vld [vmem:[%s2 + $0x4b0] sm:$0xff]
      %v365 = vld [vmem:[%s2 + $0x4b8] sm:$0xff]
      %v366 = vld [vmem:[%s2 + $0x4c0] sm:$0xff]
      %v367 = vld [vmem:[%s2 + $0x4c8] sm:$0xff]
      %v368 = vld [vmem:[%s2 + $0x4d0] sm:$0xff]
      %v369 = vld [vmem:[%s2 + $0x4d8] sm:$0xff]
      %v370 = vld [vmem:[%s2 + $0x4e0] sm:$0xff]
      %v371 = vld [vmem:[%s2 + $0x4e8] sm:$0xff]
      %v372 = vld [vmem:[%s2 + $0x4f0] sm:$0xff]
      %v373 = vld [vmem:[%s2 + $0x4f8] sm:$0xff]
      %v374 = vld [vmem:[%s2 + $0x500] sm:$0xff]
      %v375 = vld [vmem:[%s2 + $0x508] sm:$0xff]
      %v376 = vld [vmem:[%s2 + $0x510] sm:$0xff]
      %v377 = vld [vmem:[%s2 + $0x518] sm:$0xff]
      %v378 = vld [vmem:[%s2 + $0x520] sm:$0xff]
      %v379 = vld [vmem:[%s2 + $0x528] sm:$0xff]
      %v380 = vld [vmem:[%s2 + $0x530] sm:$0xff]
      %v381 = vld [vmem:[%s2 + $0x538] sm:$0xff]
      %v382 = vld [vmem:[%s2 + $0x540] sm:$0xff]
      %v383 = vld [vmem:[%s2 + $0x548] sm:$0xff]
      %v384 = vld [vmem:[%s2 + $0x550] sm:$0xff]
      %v385 = vld [vmem:[%s2 + $0x558] sm:$0xff]
      %v386 = vld [vmem:[%s2 + $0x560] sm:$0xff]
      %v387 = vld [vmem:[%s2 + $0x568] sm:$0xff]
      %v388 = vld [vmem:[%s2 + $0x570] sm:$0xff]
      %v389 = vld [vmem:[%s2 + $0x578] sm:$0xff]
      %v390 = vld [vmem:[%s2 + $0x580] sm:$0xff]
      %v391 = vld [vmem:[%s2 + $0x588] sm:$0xff]
      %v392 = vld [vmem:[%s2 + $0x590] sm:$0xff]
      %v393 = vld [vmem:[%s2 + $0x598] sm:$0xff]
      %v394 = vld [vmem:[%s2 + $0x5a0] sm:$0xff]
      %v395 = vld [vmem:[%s2 + $0x5a8] sm:$0xff]
      %v396 = vld [vmem:[%s2 + $0x5b0] sm:$0xff]
      %v397 = vld [vmem:[%s2 + $0x5b8] sm:$0xff]
      %v398 = vld [vmem:[%s2 + $0x5c0] sm:$0xff]
      %v399 = vld [vmem:[%s2 + $0x5c8] sm:$0xff]
      %v400 = vld [vmem:[%s2 + $0x5d0] sm:$0xff]
      %v401 = vld [vmem:[%s2 + $0x5d8] sm:$0xff]
      %v402 = vld [vmem:[%s2 + $0x5e0] sm:$0xff]
      %v403 = vld [vmem:[%s2 + $0x5e8] sm:$0xff]
      %v404 = vld [vmem:[%s2 + $0x5f0] sm:$0xff]
      %v405 = vld [vmem:[%s2 + $0x5f8] sm:$0xff]
      %v406 = vld [vmem:[%s2 + $0x600] sm:$0xff]
      %v407 = vld [vmem:[%s2 + $0x608] sm:$0xff]
      %v408 = vld [vmem:[%s2 + $0x610] sm:$0xff]
      %v409 = vld [vmem:[%s2 + $0x618] sm:$0xff]
      %v410 = vld [vmem:[%s2 + $0x620] sm:$0xff]
      %v411 = vld [vmem:[%s2 + $0x628] sm:$0xff]
      %v412 = vld [vmem:[%s2 + $0x630] sm:$0xff]
      %v413 = vld [vmem:[%s2 + $0x638] sm:$0xff]
      %v414 = vld [vmem:[%s2 + $0x640] sm:$0xff]
      %v415 = vld [vmem:[%s2 + $0x648] sm:$0xff]
      %v416 = vld [vmem:[%s2 + $0x650] sm:$0xff]
      %v417 = vld [vmem:[%s2 + $0x658] sm:$0xff]
      %v418 = vld [vmem:[%s2 + $0x660] sm:$0xff]
      %v419 = vld [vmem:[%s2 + $0x668] sm:$0xff]
      %v420 = vld [vmem:[%s2 + $0x670] sm:$0xff]
      %v421 = vld [vmem:[%s2 + $0x678] sm:$0xff]
      %v422 = vld [vmem:[%s2 + $0x680] sm:$0xff]
      %v423 = vld [vmem:[%s2 + $0x688] sm:$0xff]
      %v424 = vld [vmem:[%s2 + $0x690] sm:$0xff]
      %v425 = vld [vmem:[%s2 + $0x698] sm:$0xff]
      %v426 = vld [vmem:[%s2 + $0x6a0] sm:$0xff]
      %v427 = vld [vmem:[%s2 + $0x6a8] sm:$0xff]
      %v428 = vld [vmem:[%s2 + $0x6b0] sm:$0xff]
      %v429 = vld [vmem:[%s2 + $0x6b8] sm:$0xff]
      %v430 = vld [vmem:[%s2 + $0x6c0] sm:$0xff]
      %v431 = vld [vmem:[%s2 + $0x6c8] sm:$0xff]
      %v432 = vld [vmem:[%s2 + $0x6d0] sm:$0xff]
      %v433 = vld [vmem:[%s2 + $0x6d8] sm:$0xff]
      %v434 = vld [vmem:[%s2 + $0x6e0] sm:$0xff]
      %v435 = vld [vmem:[%s2 + $0x6e8] sm:$0xff]
      %v436 = vld [vmem:[%s2 + $0x6f0] sm:$0xff]
      %v437 = vld [vmem:[%s2 + $0x6f8] sm:$0xff]
      %v438 = vld [vmem:[%s2 + $0x700] sm:$0xff]
      %v439 = vld [vmem:[%s2 + $0x708] sm:$0xff]
      %v440 = vld [vmem:[%s2 + $0x710] sm:$0xff]
      %v441 = vld [vmem:[%s2 + $0x718] sm:$0xff]
      %v442 = vld [vmem:[%s2 + $0x720] sm:$0xff]
      %v443 = vld [vmem:[%s2 + $0x728] sm:$0xff]
      %v444 = vld [vmem:[%s2 + $0x730] sm:$0xff]
      %v445 = vld [vmem:[%s2 + $0x738] sm:$0xff]
      %v446 = vld [vmem:[%s2 + $0x740] sm:$0xff]
      %v447 = vld [vmem:[%s2 + $0x748] sm:$0xff]
      %v448 = vld [vmem:[%s2 + $0x750] sm:$0xff]
      %v449 = vld [vmem:[%s2 + $0x758] sm:$0xff]
      %v450 = vld [vmem:[%s2 + $0x760] sm:$0xff]
      %v451 = vld [vmem:[%s2 + $0x768] sm:$0xff]
      %v452 = vld [vmem:[%s2 + $0x770] sm:$0xff]
      %v453 = vld [vmem:[%s2 + $0x778] sm:$0xff]
      %v454 = vld [vmem:[%s2 + $0x780] sm:$0xff]
      %v455 = vld [vmem:[%s2 + $0x788] sm:$0xff]
      %v456 = vld [vmem:[%s2 + $0x790] sm:$0xff]
      %v457 = vld [vmem:[%s2 + $0x798] sm:$0xff]
      %v458 = vld [vmem:[%s2 + $0x7a0] sm:$0xff]
      %v459 = vld [vmem:[%s2 + $0x7a8] sm:$0xff]
      %v460 = vld [vmem:[%s2 + $0x7b0] sm:$0xff]
      %v461 = vld [vmem:[%s2 + $0x7b8] sm:$0xff]
      %v462 = vld [vmem:[%s2 + $0x7c0] sm:$0xff]
      %v463 = vld [vmem:[%s2 + $0x7c8] sm:$0xff]
      %v464 = vld [vmem:[%s2 + $0x7d0] sm:$0xff]
      %v465 = vld [vmem:[%s2 + $0x7d8] sm:$0xff]
      %v466 = vld [vmem:[%s2 + $0x7e0] sm:$0xff]
      %v467 = vld [vmem:[%s2 + $0x7e8] sm:$0xff]
      %v468 = vld [vmem:[%s2 + $0x7f0] sm:$0xff]
      %v469 = vld [vmem:[%s2 + $0x7f8] sm:$0xff]
      %v470 = vld [vmem:[%s2 + $0x800] sm:$0xff]
      %v471 = vld [vmem:[%s2 + $0x808] sm:$0xff]
      %v472 = vld [vmem:[%s2 + $0x810] sm:$0xff]
      %v473 = vld [vmem:[%s2 + $0x818] sm:$0xff]
      %v474 = vld [vmem:[%s2 + $0x820] sm:$0xff]
      %v475 = vld [vmem:[%s2 + $0x828] sm:$0xff]
      %v476 = vld [vmem:[%s2 + $0x830] sm:$0xff]
      %v477 = vld [vmem:[%s2 + $0x838] sm:$0xff]
      %v478 = vld [vmem:[%s2 + $0x840] sm:$0xff]
      %v479 = vld [vmem:[%s2 + $0x848] sm:$0xff]
      %v480 = vld [vmem:[%s2 + $0x850] sm:$0xff]
      %v481 = vld [vmem:[%s2 + $0x858] sm:$0xff]
      %v482 = vld [vmem:[%s2 + $0x860] sm:$0xff]
      %v483 = vld [vmem:[%s2 + $0x868] sm:$0xff]
      %v484 = vld [vmem:[%s2 + $0x870] sm:$0xff]
      %v485 = vld [vmem:[%s2 + $0x878] sm:$0xff]
      %v486 = vld [vmem:[%s2 + $0x880] sm:$0xff]
      %v487 = vld [vmem:[%s2 + $0x888] sm:$0xff]
      %v488 = vld [vmem:[%s2 + $0x890] sm:$0xff]
      %v489 = vld [vmem:[%s2 + $0x898] sm:$0xff]
      %v490 = vld [vmem:[%s2 + $0x8a0] sm:$0xff]
      %v491 = vld [vmem:[%s2 + $0x8a8] sm:$0xff]
      %v492 = vld [vmem:[%s2 + $0x8b0] sm:$0xff]
      %v493 = vld [vmem:[%s2 + $0x8b8] sm:$0xff]
      %v494 = vld [vmem:[%s2 + $0x8c0] sm:$0xff]
      %v495 = vld [vmem:[%s2 + $0x8c8] sm:$0xff]
      %v496 = vld [vmem:[%s2 + $0x8d0] sm:$0xff]
      %v497 = vld [vmem:[%s2 + $0x8d8] sm:$0xff]
      %v498 = vld [vmem:[%s2 + $0x8e0] sm:$0xff]
      %v499 = vld [vmem:[%s2 + $0x8e8] sm:$0xff]
      %v500 = vld [vmem:[%s2 + $0x8f0] sm:$0xff]
      %v501 = vld [vmem:[%s2 + $0x8f8] sm:$0xff]
      %v502 = vld [vmem:[%s2 + $0x900] sm:$0xff]
      %v503 = vld [vmem:[%s2 + $0x908] sm:$0xff]
      %v504 = vld [vmem:[%s2 + $0x910] sm:$0xff]
      %v505 = vld [vmem:[%s2 + $0x918] sm:$0xff]
      %v506 = vld [vmem:[%s2 + $0x920] sm:$0xff]
      %v507 = vld [vmem:[%s2 + $0x928] sm:$0xff]
      %v508 = vld [vmem:[%s2 + $0x930] sm:$0xff]
      %v509 = vld [vmem:[%s2 + $0x938] sm:$0xff]
      %v510 = vld [vmem:[%s2 + $0x940] sm:$0xff]
      %v511 = vld [vmem:[%s2 + $0x948] sm:$0xff]
      %v512 = vld [vmem:[%s2 + $0x950] sm:$0xff]
      %v513 = vld [vmem:[%s2 + $0x958] sm:$0xff]
      %v514 = vld [vmem:[%s2 + $0x960] sm:$0xff]
      %v515 = vld [vmem:[%s2 + $0x968] sm:$0xff]
      %v516 = vld [vmem:[%s2 + $0x970] sm:$0xff]
      %v517 = vld [vmem:[%s2 + $0x978] sm:$0xff]
      %v518 = vld [vmem:[%s2 + $0x980] sm:$0xff]
      %v519 = vld [vmem:[%s2 + $0x988] sm:$0xff]
      %v520 = vld [vmem:[%s2 + $0x990] sm:$0xff]
      %v521 = vld [vmem:[%s2 + $0x998] sm:$0xff]
      %v522 = vld [vmem:[%s2 + $0x9a0] sm:$0xff]
      %v523 = vld [vmem:[%s2 + $0x9a8] sm:$0xff]
      %v524 = vld [vmem:[%s2 + $0x9b0] sm:$0xff]
      %v525 = vld [vmem:[%s2 + $0x9b8] sm:$0xff]
      %v526 = vld [vmem:[%s2 + $0x9c0] sm:$0xff]
      %v527 = vld [vmem:[%s2 + $0x9c8] sm:$0xff]
      %v528 = vld [vmem:[%s2 + $0x9d0] sm:$0xff]
      %v529 = vld [vmem:[%s2 + $0x9d8] sm:$0xff]
      %v530 = vld [vmem:[%s2 + $0x9e0] sm:$0xff]
      %v531 = vld [vmem:[%s2 + $0x9e8] sm:$0xff]
      %v532 = vld [vmem:[%s2 + $0x9f0] sm:$0xff]
      %v533 = vld [vmem:[%s2 + $0x9f8] sm:$0xff]
      %v534 = vld [vmem:[%s2 + $0xa00] sm:$0xff]
      %v535 = vld [vmem:[%s2 + $0xa08] sm:$0xff]
      %v536 = vld [vmem:[%s2 + $0xa10] sm:$0xff]
      %v537 = vld [vmem:[%s2 + $0xa18] sm:$0xff]
      %v538 = vld [vmem:[%s2 + $0xa20] sm:$0xff]
      %v539 = vld [vmem:[%s2 + $0xa28] sm:$0xff]
      %v540 = vld [vmem:[%s2 + $0xa30] sm:$0xff]
      %v541 = vld [vmem:[%s2 + $0xa38] sm:$0xff]
      %v542 = vld [vmem:[%s2 + $0xa40] sm:$0xff]
      %v543 = vld [vmem:[%s2 + $0xa48] sm:$0xff]
      %v544 = vld [vmem:[%s2 + $0xa50] sm:$0xff]
      %v545 = vld [vmem:[%s2 + $0xa58] sm:$0xff]
      %v546 = vld [vmem:[%s2 + $0xa60] sm:$0xff]
      %v547 = vld [vmem:[%s2 + $0xa68] sm:$0xff]
      %v548 = vld [vmem:[%s2 + $0xa70] sm:$0xff]
      %v549 = vld [vmem:[%s2 + $0xa78] sm:$0xff]
      %v550 = vld [vmem:[%s2 + $0xa80] sm:$0xff]
      %v551 = vld [vmem:[%s2 + $0xa88] sm:$0xff]
      %v552 = vld [vmem:[%s2 + $0xa90] sm:$0xff]
      %v553 = vld [vmem:[%s2 + $0xa98] sm:$0xff]
      %v554 = vld [vmem:[%s2 + $0xaa0] sm:$0xff]
      %v555 = vld [vmem:[%s2 + $0xaa8] sm:$0xff]
      %v556 = vld [vmem:[%s2 + $0xab0] sm:$0xff]
      %v557 = vld [vmem:[%s2 + $0xab8] sm:$0xff]
      %v558 = vld [vmem:[%s2 + $0xac0] sm:$0xff]
      %v559 = vld [vmem:[%s2 + $0xac8] sm:$0xff]
      %v560 = vld [vmem:[%s2 + $0xad0] sm:$0xff]
      %v561 = vld [vmem:[%s2 + $0xad8] sm:$0xff]
      %v562 = vld [vmem:[%s2 + $0xae0] sm:$0xff]
      %v563 = vld [vmem:[%s2 + $0xae8] sm:$0xff]
      %v564 = vld [vmem:[%s2 + $0xaf0] sm:$0xff]
      %v565 = vld [vmem:[%s2 + $0xaf8] sm:$0xff]
      %v566 = vld [vmem:[%s2 + $0xb00] sm:$0xff]
      %v567 = vld [vmem:[%s2 + $0xb08] sm:$0xff]
      %v568 = vld [vmem:[%s2 + $0xb10] sm:$0xff]
      %v569 = vld [vmem:[%s2 + $0xb18] sm:$0xff]
      %v570 = vld [vmem:[%s2 + $0xb20] sm:$0xff]
      %v571 = vld [vmem:[%s2 + $0xb28] sm:$0xff]
      %v572 = vld [vmem:[%s2 + $0xb30] sm:$0xff]
      %v573 = vld [vmem:[%s2 + $0xb38] sm:$0xff]
      %v574 = vld [vmem:[%s2 + $0xb40] sm:$0xff]
      %v575 = vld [vmem:[%s2 + $0xb48] sm:$0xff]
      %v576 = vld [vmem:[%s2 + $0xb50] sm:$0xff]
      %v577 = vld [vmem:[%s2 + $0xb58] sm:$0xff]
      %v578 = vld [vmem:[%s2 + $0xb60] sm:$0xff]
      %v579 = vld [vmem:[%s2 + $0xb68] sm:$0xff]
      %v580 = vld [vmem:[%s2 + $0xb70] sm:$0xff]
      %v581 = vld [vmem:[%s2 + $0xb78] sm:$0xff]
      %v582 = vld [vmem:[%s2 + $0xb80] sm:$0xff]
      %v583 = vld [vmem:[%s2 + $0xb88] sm:$0xff]
      %v584 = vld [vmem:[%s2 + $0xb90] sm:$0xff]
      %v585 = vld [vmem:[%s2 + $0xb98] sm:$0xff]
      %v586 = vld [vmem:[%s2 + $0xba0] sm:$0xff]
      %v587 = vld [vmem:[%s2 + $0xba8] sm:$0xff]
      %v588 = vld [vmem:[%s2 + $0xbb0] sm:$0xff]
      %v589 = vld [vmem:[%s2 + $0xbb8] sm:$0xff]
      %v590 = vld [vmem:[%s2 + $0xbc0] sm:$0xff]
      %v591 = vld [vmem:[%s2 + $0xbc8] sm:$0xff]
      %v592 = vld [vmem:[%s2 + $0xbd0] sm:$0xff]
      %v593 = vld [vmem:[%s2 + $0xbd8] sm:$0xff]
      %v594 = vld [vmem:[%s2 + $0xbe0] sm:$0xff]
      %v595 = vld [vmem:[%s2 + $0xbe8] sm:$0xff]
      %v596 = vld [vmem:[%s2 + $0xbf0] sm:$0xff]
      %v597 = vld [vmem:[%s2 + $0xbf8] sm:$0xff]
      %v598 = vld [vmem:[%s2 + $0xc00] sm:$0xff]
      %v599 = vld [vmem:[%s2 + $0xc08] sm:$0xff]
      %v600 = vld [vmem:[%s2 + $0xc10] sm:$0xff]
      %v601 = vld [vmem:[%s2 + $0xc18] sm:$0xff]
      %v602 = vld [vmem:[%s2 + $0xc20] sm:$0xff]
      %v603 = vld [vmem:[%s2 + $0xc28] sm:$0xff]
      %v604 = vld [vmem:[%s2 + $0xc30] sm:$0xff]
      %v605 = vld [vmem:[%s2 + $0xc38] sm:$0xff]
      %v606 = vld [vmem:[%s2 + $0xc40] sm:$0xff]
      %v607 = vld [vmem:[%s2 + $0xc48] sm:$0xff]
      %v608 = vld [vmem:[%s2 + $0xc50] sm:$0xff]
      %v609 = vld [vmem:[%s2 + $0xc58] sm:$0xff]
      %v610 = vld [vmem:[%s2 + $0xc60] sm:$0xff]
      %v611 = vld [vmem:[%s2 + $0xc68] sm:$0xff]
      %v612 = vld [vmem:[%s2 + $0xc70] sm:$0xff]
      %v613 = vld [vmem:[%s2 + $0xc78] sm:$0xff]
      %v614 = vld [vmem:[%s2 + $0xc80] sm:$0xff]
      %v615 = vld [vmem:[%s2 + $0xc88] sm:$0xff]
      %v616 = vld [vmem:[%s2 + $0xc90] sm:$0xff]
      %v617 = vld [vmem:[%s2 + $0xc98] sm:$0xff]
      %v618 = vld [vmem:[%s2 + $0xca0] sm:$0xff]
      %v619 = vld [vmem:[%s2 + $0xca8] sm:$0xff]
      %v620 = vld [vmem:[%s2 + $0xcb0] sm:$0xff]
      %v621 = vld [vmem:[%s2 + $0xcb8] sm:$0xff]
      %v622 = vld [vmem:[%s2 + $0xcc0] sm:$0xff]
      %v623 = vld [vmem:[%s2 + $0xcc8] sm:$0xff]
      %v624 = vld [vmem:[%s2 + $0xcd0] sm:$0xff]
      %v625 = vld [vmem:[%s2 + $0xcd8] sm:$0xff]
      %v626 = vld [vmem:[%s2 + $0xce0] sm:$0xff]
      %v627 = vld [vmem:[%s2 + $0xce8] sm:$0xff]
      %v628 = vld [vmem:[%s2 + $0xcf0] sm:$0xff]
      %v629 = vld [vmem:[%s2 + $0xcf8] sm:$0xff]
      %v630 = vld [vmem:[%s2 + $0xd00] sm:$0xff]
      %v631 = vld [vmem:[%s2 + $0xd08] sm:$0xff]
      %v632 = vld [vmem:[%s2 + $0xd10] sm:$0xff]
      %v633 = vld [vmem:[%s2 + $0xd18] sm:$0xff]
      %v634 = vld [vmem:[%s2 + $0xd20] sm:$0xff]
      %v635 = vld [vmem:[%s2 + $0xd28] sm:$0xff]
      %v636 = vld [vmem:[%s2 + $0xd30] sm:$0xff]
      %v637 = vld [vmem:[%s2 + $0xd38] sm:$0xff]
      %v638 = vld [vmem:[%s2 + $0xd40] sm:$0xff]
      %v639 = vld [vmem:[%s2 + $0xd48] sm:$0xff]
      %v640 = vld [vmem:[%s2 + $0xd50] sm:$0xff]
      %v641 = vld [vmem:[%s2 + $0xd58] sm:$0xff]
      %v642 = vld [vmem:[%s2 + $0xd60] sm:$0xff]
      %v643 = vld [vmem:[%s2 + $0xd68] sm:$0xff]
      %v644 = vld [vmem:[%s2 + $0xd70] sm:$0xff]
      %v645 = vld [vmem:[%s2 + $0xd78] sm:$0xff]
      %v646 = vld [vmem:[%s2 + $0xd80] sm:$0xff]
      %v647 = vld [vmem:[%s2 + $0xd88] sm:$0xff]
      %v648 = vld [vmem:[%s2 + $0xd90] sm:$0xff]
      %v649 = vld [vmem:[%s2 + $0xd98] sm:$0xff]
      %v650 = vld [vmem:[%s2 + $0xda0] sm:$0xff]
      %v651 = vld [vmem:[%s2 + $0xda8] sm:$0xff]
      %v652 = vld [vmem:[%s2 + $0xdb0] sm:$0xff]
      %v653 = vld [vmem:[%s2 + $0xdb8] sm:$0xff]
      %v654 = vld [vmem:[%s2 + $0xdc0] sm:$0xff]
      %v655 = vld [vmem:[%s2 + $0xdc8] sm:$0xff]
      %v656 = vld [vmem:[%s2 + $0xdd0] sm:$0xff]
      %v657 = vld [vmem:[%s2 + $0xdd8] sm:$0xff]
      %v658 = vld [vmem:[%s2 + $0xde0] sm:$0xff]
      %v659 = vld [vmem:[%s2 + $0xde8] sm:$0xff]
      %v660 = vld [vmem:[%s2 + $0xdf0] sm:$0xff]
      %v661 = vld [vmem:[%s2 + $0xdf8] sm:$0xff]
      %v670 = vunpack.c.l.b16 %v206
      %v671 = vunpack.c.h.b16 %v206
      %v672 = vunpack.c.l.b16 %v207
      %v673 = vunpack.c.h.b16 %v207
      %v674 = vunpack.c.l.b16 %v208
      %v675 = vunpack.c.h.b16 %v208
      %v676 = vunpack.c.l.b16 %v209
      %v677 = vunpack.c.l.b16 %v210
      %v678 = vunpack.c.h.b16 %v210
      %v679 = vunpack.c.l.b16 %v211
      %v680 = vunpack.c.h.b16 %v211
      %v681 = vunpack.c.l.b16 %v212
      %v682 = vunpack.c.h.b16 %v212
      %v683 = vunpack.c.l.b16 %v213
      %v684 = vpack.c.b16 %v677, %v670
      %v685 = vpack.c.b16 %v678, %v671
      %v686 = vpack.c.b16 %v679, %v672
      %v687 = vpack.c.b16 %v680, %v673
      %v688 = vpack.c.b16 %v681, %v674
      %v689 = vpack.c.b16 %v682, %v675
      %v690 = vpack.c.b16 %v683, %v676
      %v1146 = vunpack.c.l.b16 %v214
      %v1147 = vunpack.c.h.b16 %v214
      %v1148 = vunpack.c.l.b16 %v215
      %v1149 = vunpack.c.h.b16 %v215
      %v1150 = vunpack.c.l.b16 %v216
      %v1151 = vunpack.c.h.b16 %v216
      %v1152 = vunpack.c.l.b16 %v217
      %v1153 = vunpack.c.h.b16 %v217
      %v1154 = vunpack.c.l.b16 %v218
      %v1155 = vunpack.c.h.b16 %v218
      %v1156 = vunpack.c.l.b16 %v219
      %v1157 = vunpack.c.h.b16 %v219
      %v1158 = vunpack.c.l.b16 %v220
      %v1159 = vunpack.c.h.b16 %v220
      %v1160 = vunpack.c.l.b16 %v221
      %v1161 = vunpack.c.h.b16 %v221
      %v1162 = vunpack.c.l.b16 %v222
      %v1163 = vunpack.c.h.b16 %v222
      %v1164 = vunpack.c.l.b16 %v223
      %v1165 = vunpack.c.h.b16 %v223
      %v1166 = vunpack.c.l.b16 %v224
      %v1167 = vunpack.c.h.b16 %v224
      %v1168 = vunpack.c.l.b16 %v225
      %v1169 = vunpack.c.h.b16 %v225
      %v1170 = vunpack.c.l.b16 %v226
      %v1171 = vunpack.c.h.b16 %v226
      %v1172 = vunpack.c.l.b16 %v227
      %v1173 = vunpack.c.h.b16 %v227
      %v1174 = vunpack.c.l.b16 %v228
      %v1175 = vunpack.c.h.b16 %v228
      %v1176 = vunpack.c.l.b16 %v229
      %v1177 = vunpack.c.h.b16 %v229
      %v1178 = vunpack.c.l.b16 %v230
      %v1179 = vunpack.c.h.b16 %v230
      %v1180 = vunpack.c.l.b16 %v231
      %v1181 = vunpack.c.h.b16 %v231
      %v1182 = vunpack.c.l.b16 %v232
      %v1183 = vunpack.c.h.b16 %v232
      %v1184 = vunpack.c.l.b16 %v233
      %v1185 = vunpack.c.h.b16 %v233
      %v1186 = vunpack.c.l.b16 %v234
      %v1187 = vunpack.c.h.b16 %v234
      %v1188 = vunpack.c.l.b16 %v235
      %v1189 = vunpack.c.h.b16 %v235
      %v1190 = vunpack.c.l.b16 %v236
      %v1191 = vunpack.c.h.b16 %v236
      %v1192 = vunpack.c.l.b16 %v237
      %v1193 = vunpack.c.h.b16 %v237
      %v1194 = vunpack.c.l.b16 %v238
      %v1195 = vunpack.c.h.b16 %v238
      %v1196 = vunpack.c.l.b16 %v239
      %v1197 = vunpack.c.h.b16 %v239
      %v1198 = vunpack.c.l.b16 %v240
      %v1199 = vunpack.c.h.b16 %v240
      %v1200 = vunpack.c.l.b16 %v241
      %v1201 = vunpack.c.h.b16 %v241
      %v1202 = vunpack.c.l.b16 %v242
      %v1203 = vunpack.c.h.b16 %v242
      %v1204 = vunpack.c.l.b16 %v243
      %v1205 = vunpack.c.h.b16 %v243
      %v1206 = vunpack.c.l.b16 %v244
      %v1207 = vunpack.c.h.b16 %v244
      %v1208 = vunpack.c.l.b16 %v245
      %v1209 = vunpack.c.h.b16 %v245
      %v1210 = vunpack.c.l.b16 %v246
      %v1211 = vunpack.c.h.b16 %v246
      %v1212 = vunpack.c.l.b16 %v247
      %v1213 = vunpack.c.h.b16 %v247
      %v1214 = vunpack.c.l.b16 %v248
      %v1215 = vunpack.c.h.b16 %v248
      %v1216 = vunpack.c.l.b16 %v249
      %v1217 = vunpack.c.h.b16 %v249
      %v1218 = vunpack.c.l.b16 %v250
      %v1219 = vunpack.c.h.b16 %v250
      %v1220 = vunpack.c.l.b16 %v251
      %v1221 = vunpack.c.h.b16 %v251
      %v1222 = vunpack.c.l.b16 %v252
      %v1223 = vunpack.c.h.b16 %v252
      %v1224 = vunpack.c.l.b16 %v253
      %v1225 = vunpack.c.h.b16 %v253
      %v1226 = vunpack.c.l.b16 %v254
      %v1227 = vunpack.c.h.b16 %v254
      %v1228 = vunpack.c.l.b16 %v255
      %v1229 = vunpack.c.h.b16 %v255
      %v1230 = vunpack.c.l.b16 %v256
      %v1231 = vunpack.c.h.b16 %v256
      %v1232 = vunpack.c.l.b16 %v257
      %v1233 = vunpack.c.h.b16 %v257
      %v1234 = vunpack.c.l.b16 %v258
      %v1235 = vunpack.c.h.b16 %v258
      %v1236 = vunpack.c.l.b16 %v259
      %v1237 = vunpack.c.h.b16 %v259
      %v1238 = vunpack.c.l.b16 %v260
      %v1239 = vunpack.c.h.b16 %v260
      %v1240 = vunpack.c.l.b16 %v261
      %v1241 = vunpack.c.h.b16 %v261
      %v1242 = vunpack.c.l.b16 %v262
      %v1243 = vunpack.c.h.b16 %v262
      %v1244 = vunpack.c.l.b16 %v263
      %v1245 = vunpack.c.h.b16 %v263
      %v1246 = vunpack.c.l.b16 %v264
      %v1247 = vunpack.c.h.b16 %v264
      %v1248 = vunpack.c.l.b16 %v265
      %v1249 = vunpack.c.h.b16 %v265
      %v1250 = vunpack.c.l.b16 %v266
      %v1251 = vunpack.c.h.b16 %v266
      %v1252 = vunpack.c.l.b16 %v267
      %v1253 = vunpack.c.h.b16 %v267
      %v1254 = vunpack.c.l.b16 %v268
      %v1255 = vunpack.c.h.b16 %v268
      %v1256 = vunpack.c.l.b16 %v269
      %v1257 = vunpack.c.h.b16 %v269
      %v1258 = vunpack.c.l.b16 %v270
      %v1259 = vunpack.c.h.b16 %v270
      %v1260 = vunpack.c.l.b16 %v271
      %v1261 = vunpack.c.h.b16 %v271
      %v1262 = vunpack.c.l.b16 %v272
      %v1263 = vunpack.c.h.b16 %v272
      %v1264 = vunpack.c.l.b16 %v273
      %v1265 = vunpack.c.h.b16 %v273
      %v1266 = vunpack.c.l.b16 %v274
      %v1267 = vunpack.c.h.b16 %v274
      %v1268 = vunpack.c.l.b16 %v275
      %v1269 = vunpack.c.h.b16 %v275
      %v1270 = vunpack.c.l.b16 %v276
      %v1271 = vunpack.c.h.b16 %v276
      %v1272 = vunpack.c.l.b16 %v277
      %v1273 = vunpack.c.h.b16 %v277
      %v1274 = vunpack.c.l.b16 %v278
      %v1275 = vunpack.c.h.b16 %v278
      %v1276 = vunpack.c.l.b16 %v279
      %v1277 = vunpack.c.h.b16 %v279
      %v1278 = vunpack.c.l.b16 %v280
      %v1279 = vunpack.c.h.b16 %v280
      %v1280 = vunpack.c.l.b16 %v281
      %v1281 = vunpack.c.h.b16 %v281
      %v1282 = vunpack.c.l.b16 %v282
      %v1283 = vunpack.c.h.b16 %v282
      %v1284 = vunpack.c.l.b16 %v283
      %v1285 = vunpack.c.h.b16 %v283
      %v1286 = vunpack.c.l.b16 %v284
      %v1287 = vunpack.c.h.b16 %v284
      %v1288 = vunpack.c.l.b16 %v285
      %v1289 = vunpack.c.h.b16 %v285
      %v1290 = vunpack.c.l.b16 %v286
      %v1291 = vunpack.c.h.b16 %v286
      %v1292 = vunpack.c.l.b16 %v287
      %v1293 = vunpack.c.h.b16 %v287
      %v1294 = vunpack.c.l.b16 %v288
      %v1295 = vunpack.c.h.b16 %v288
      %v1296 = vunpack.c.l.b16 %v289
      %v1297 = vunpack.c.h.b16 %v289
      %v1298 = vunpack.c.l.b16 %v290
      %v1299 = vunpack.c.h.b16 %v290
      %v1300 = vunpack.c.l.b16 %v291
      %v1301 = vunpack.c.h.b16 %v291
      %v1302 = vunpack.c.l.b16 %v292
      %v1303 = vunpack.c.h.b16 %v292
      %v1304 = vunpack.c.l.b16 %v293
      %v1305 = vunpack.c.h.b16 %v293
      %v1306 = vunpack.c.l.b16 %v294
      %v1307 = vunpack.c.h.b16 %v294
      %v1308 = vunpack.c.l.b16 %v295
      %v1309 = vunpack.c.h.b16 %v295
      %v1310 = vunpack.c.l.b16 %v296
      %v1311 = vunpack.c.h.b16 %v296
      %v1312 = vunpack.c.l.b16 %v297
      %v1313 = vunpack.c.h.b16 %v297
      %v1314 = vunpack.c.l.b16 %v298
      %v1315 = vunpack.c.h.b16 %v298
      %v1316 = vunpack.c.l.b16 %v299
      %v1317 = vunpack.c.h.b16 %v299
      %v1318 = vunpack.c.l.b16 %v300
      %v1319 = vunpack.c.h.b16 %v300
      %v1320 = vunpack.c.l.b16 %v301
      %v1321 = vunpack.c.h.b16 %v301
      %v1322 = vunpack.c.l.b16 %v302
      %v1323 = vunpack.c.h.b16 %v302
      %v1324 = vunpack.c.l.b16 %v303
      %v1325 = vunpack.c.h.b16 %v303
      %v1326 = vunpack.c.l.b16 %v304
      %v1327 = vunpack.c.h.b16 %v304
      %v1328 = vunpack.c.l.b16 %v305
      %v1329 = vunpack.c.h.b16 %v305
      %v1330 = vunpack.c.l.b16 %v306
      %v1331 = vunpack.c.h.b16 %v306
      %v1332 = vunpack.c.l.b16 %v307
      %v1333 = vunpack.c.h.b16 %v307
      %v1334 = vunpack.c.l.b16 %v308
      %v1335 = vunpack.c.h.b16 %v308
      %v1336 = vunpack.c.l.b16 %v309
      %v1337 = vunpack.c.h.b16 %v309
      %v1338 = vunpack.c.l.b16 %v310
      %v1339 = vunpack.c.h.b16 %v310
      %v1340 = vunpack.c.l.b16 %v311
      %v1341 = vunpack.c.h.b16 %v311
      %v1342 = vunpack.c.l.b16 %v312
      %v1343 = vunpack.c.h.b16 %v312
      %v1344 = vunpack.c.l.b16 %v313
      %v1345 = vunpack.c.h.b16 %v313
      %v1346 = vunpack.c.l.b16 %v314
      %v1347 = vunpack.c.h.b16 %v314
      %v1348 = vunpack.c.l.b16 %v315
      %v1349 = vunpack.c.h.b16 %v315
      %v1350 = vunpack.c.l.b16 %v316
      %v1351 = vunpack.c.h.b16 %v316
      %v1352 = vunpack.c.l.b16 %v317
      %v1353 = vunpack.c.h.b16 %v317
      %v1354 = vunpack.c.l.b16 %v318
      %v1355 = vunpack.c.h.b16 %v318
      %v1356 = vunpack.c.l.b16 %v319
      %v1357 = vunpack.c.h.b16 %v319
      %v1358 = vunpack.c.l.b16 %v320
      %v1359 = vunpack.c.h.b16 %v320
      %v1360 = vunpack.c.l.b16 %v321
      %v1361 = vunpack.c.h.b16 %v321
      %v1362 = vunpack.c.l.b16 %v322
      %v1363 = vunpack.c.h.b16 %v322
      %v1364 = vunpack.c.l.b16 %v323
      %v1365 = vunpack.c.h.b16 %v323
      %v1366 = vunpack.c.l.b16 %v324
      %v1367 = vunpack.c.h.b16 %v324
      %v1368 = vunpack.c.l.b16 %v325
      %v1369 = vunpack.c.h.b16 %v325
      %v1370 = vunpack.c.l.b16 %v326
      %v1371 = vunpack.c.h.b16 %v326
      %v1372 = vunpack.c.l.b16 %v327
      %v1373 = vunpack.c.h.b16 %v327
      %v1374 = vunpack.c.l.b16 %v328
      %v1375 = vunpack.c.h.b16 %v328
      %v1376 = vunpack.c.l.b16 %v329
      %v1377 = vunpack.c.h.b16 %v329
      %v1378 = vunpack.c.l.b16 %v330
      %v1379 = vunpack.c.h.b16 %v330
      %v1380 = vunpack.c.l.b16 %v331
      %v1381 = vunpack.c.h.b16 %v331
      %v1382 = vunpack.c.l.b16 %v332
      %v1383 = vunpack.c.h.b16 %v332
      %v1384 = vunpack.c.l.b16 %v333
      %v1385 = vunpack.c.h.b16 %v333
      %v1386 = vunpack.c.l.b16 %v334
      %v1387 = vunpack.c.h.b16 %v334
      %v1388 = vunpack.c.l.b16 %v335
      %v1389 = vunpack.c.h.b16 %v335
      %v1390 = vunpack.c.l.b16 %v336
      %v1391 = vunpack.c.h.b16 %v336
      %v1392 = vunpack.c.l.b16 %v337
      %v1393 = vunpack.c.h.b16 %v337
      %v1394 = vunpack.c.l.b16 %v338
      %v1395 = vunpack.c.h.b16 %v338
      %v1396 = vunpack.c.l.b16 %v339
      %v1397 = vunpack.c.h.b16 %v339
      %v1398 = vunpack.c.l.b16 %v340
      %v1399 = vunpack.c.h.b16 %v340
      %v1400 = vunpack.c.l.b16 %v341
      %v1401 = vunpack.c.h.b16 %v341
      %v1402 = vunpack.c.l.b16 %v342
      %v1403 = vunpack.c.h.b16 %v342
      %v1404 = vunpack.c.l.b16 %v343
      %v1405 = vunpack.c.h.b16 %v343
      %v1406 = vunpack.c.l.b16 %v344
      %v1407 = vunpack.c.h.b16 %v344
      %v1408 = vunpack.c.l.b16 %v345
      %v1409 = vunpack.c.h.b16 %v345
      %v1410 = vunpack.c.l.b16 %v346
      %v1411 = vunpack.c.h.b16 %v346
      %v1412 = vunpack.c.l.b16 %v347
      %v1413 = vunpack.c.h.b16 %v347
      %v1414 = vunpack.c.l.b16 %v348
      %v1415 = vunpack.c.h.b16 %v348
      %v1416 = vunpack.c.l.b16 %v349
      %v1417 = vunpack.c.h.b16 %v349
      %v1418 = vunpack.c.l.b16 %v350
      %v1419 = vunpack.c.h.b16 %v350
      %v1420 = vunpack.c.l.b16 %v351
      %v1421 = vunpack.c.h.b16 %v351
      %v1422 = vunpack.c.l.b16 %v352
      %v1423 = vunpack.c.h.b16 %v352
      %v1424 = vunpack.c.l.b16 %v353
      %v1425 = vunpack.c.h.b16 %v353
      %v1426 = vunpack.c.l.b16 %v354
      %v1427 = vunpack.c.h.b16 %v354
      %v1428 = vunpack.c.l.b16 %v355
      %v1429 = vunpack.c.h.b16 %v355
      %v1430 = vunpack.c.l.b16 %v356
      %v1431 = vunpack.c.h.b16 %v356
      %v1432 = vunpack.c.l.b16 %v357
      %v1433 = vunpack.c.h.b16 %v357
      %v1434 = vunpack.c.l.b16 %v358
      %v1435 = vunpack.c.h.b16 %v358
      %v1436 = vunpack.c.l.b16 %v359
      %v1437 = vunpack.c.h.b16 %v359
      %v1438 = vunpack.c.l.b16 %v360
      %v1439 = vunpack.c.h.b16 %v360
      %v1440 = vunpack.c.l.b16 %v361
      %v1441 = vunpack.c.h.b16 %v361
      %v1442 = vunpack.c.l.b16 %v362
      %v1443 = vunpack.c.h.b16 %v362
      %v1444 = vunpack.c.l.b16 %v363
      %v1445 = vunpack.c.h.b16 %v363
      %v1446 = vunpack.c.l.b16 %v364
      %v1447 = vunpack.c.h.b16 %v364
      %v1448 = vunpack.c.l.b16 %v365
      %v1449 = vunpack.c.h.b16 %v365
      %v1450 = vunpack.c.l.b16 %v366
      %v1451 = vunpack.c.h.b16 %v366
      %v1452 = vunpack.c.l.b16 %v367
      %v1453 = vunpack.c.h.b16 %v367
      %v1454 = vunpack.c.l.b16 %v368
      %v1455 = vunpack.c.h.b16 %v368
      %v1456 = vunpack.c.l.b16 %v369
      %v1457 = vunpack.c.h.b16 %v369
      %v1458 = vunpack.c.l.b16 %v370
      %v1459 = vunpack.c.h.b16 %v370
      %v1460 = vunpack.c.l.b16 %v371
      %v1461 = vunpack.c.h.b16 %v371
      %v1462 = vunpack.c.l.b16 %v372
      %v1463 = vunpack.c.h.b16 %v372
      %v1464 = vunpack.c.l.b16 %v373
      %v1465 = vunpack.c.h.b16 %v373
      %v1466 = vunpack.c.l.b16 %v374
      %v1467 = vunpack.c.h.b16 %v374
      %v1468 = vunpack.c.l.b16 %v375
      %v1469 = vunpack.c.h.b16 %v375
      %v1470 = vunpack.c.l.b16 %v376
      %v1471 = vunpack.c.h.b16 %v376
      %v1472 = vunpack.c.l.b16 %v377
      %v1473 = vunpack.c.h.b16 %v377
      %v1474 = vunpack.c.l.b16 %v378
      %v1475 = vunpack.c.h.b16 %v378
      %v1476 = vunpack.c.l.b16 %v379
      %v1477 = vunpack.c.h.b16 %v379
      %v1478 = vunpack.c.l.b16 %v380
      %v1479 = vunpack.c.h.b16 %v380
      %v1480 = vunpack.c.l.b16 %v381
      %v1481 = vunpack.c.h.b16 %v381
      %v1482 = vunpack.c.l.b16 %v382
      %v1483 = vunpack.c.h.b16 %v382
      %v1484 = vunpack.c.l.b16 %v383
      %v1485 = vunpack.c.h.b16 %v383
      %v1486 = vunpack.c.l.b16 %v384
      %v1487 = vunpack.c.h.b16 %v384
      %v1488 = vunpack.c.l.b16 %v385
      %v1489 = vunpack.c.h.b16 %v385
      %v1490 = vunpack.c.l.b16 %v386
      %v1491 = vunpack.c.h.b16 %v386
      %v1492 = vunpack.c.l.b16 %v387
      %v1493 = vunpack.c.h.b16 %v387
      %v1494 = vunpack.c.l.b16 %v388
      %v1495 = vunpack.c.h.b16 %v388
      %v1496 = vunpack.c.l.b16 %v389
      %v1497 = vunpack.c.h.b16 %v389
      %v1498 = vunpack.c.l.b16 %v390
      %v1499 = vunpack.c.h.b16 %v390
      %v1500 = vunpack.c.l.b16 %v391
      %v1501 = vunpack.c.h.b16 %v391
      %v1502 = vunpack.c.l.b16 %v392
      %v1503 = vunpack.c.h.b16 %v392
      %v1504 = vunpack.c.l.b16 %v393
      %v1505 = vunpack.c.h.b16 %v393
      %v1506 = vunpack.c.l.b16 %v394
      %v1507 = vunpack.c.h.b16 %v394
      %v1508 = vunpack.c.l.b16 %v395
      %v1509 = vunpack.c.h.b16 %v395
      %v1510 = vunpack.c.l.b16 %v396
      %v1511 = vunpack.c.h.b16 %v396
      %v1512 = vunpack.c.l.b16 %v397
      %v1513 = vunpack.c.h.b16 %v397
      %v1514 = vunpack.c.l.b16 %v398
      %v1515 = vunpack.c.h.b16 %v398
      %v1516 = vunpack.c.l.b16 %v399
      %v1517 = vunpack.c.h.b16 %v399
      %v1518 = vunpack.c.l.b16 %v400
      %v1519 = vunpack.c.h.b16 %v400
      %v1520 = vunpack.c.l.b16 %v401
      %v1521 = vunpack.c.h.b16 %v401
      %v1522 = vunpack.c.l.b16 %v402
      %v1523 = vunpack.c.h.b16 %v402
      %v1524 = vunpack.c.l.b16 %v403
      %v1525 = vunpack.c.h.b16 %v403
      %v1526 = vunpack.c.l.b16 %v404
      %v1527 = vunpack.c.h.b16 %v404
      %v1528 = vunpack.c.l.b16 %v405
      %v1529 = vunpack.c.h.b16 %v405
      %v1530 = vunpack.c.l.b16 %v406
      %v1531 = vunpack.c.h.b16 %v406
      %v1532 = vunpack.c.l.b16 %v407
      %v1533 = vunpack.c.h.b16 %v407
      %v1534 = vunpack.c.l.b16 %v408
      %v1535 = vunpack.c.h.b16 %v408
      %v1536 = vunpack.c.l.b16 %v409
      %v1537 = vunpack.c.h.b16 %v409
      %v1538 = vunpack.c.l.b16 %v410
      %v1539 = vunpack.c.h.b16 %v410
      %v1540 = vunpack.c.l.b16 %v411
      %v1541 = vunpack.c.h.b16 %v411
      %v1542 = vunpack.c.l.b16 %v412
      %v1543 = vunpack.c.h.b16 %v412
      %v1544 = vunpack.c.l.b16 %v413
      %v1545 = vunpack.c.h.b16 %v413
      %v1546 = vunpack.c.l.b16 %v414
      %v1547 = vunpack.c.h.b16 %v414
      %v1548 = vunpack.c.l.b16 %v415
      %v1549 = vunpack.c.h.b16 %v415
      %v1550 = vunpack.c.l.b16 %v416
      %v1551 = vunpack.c.h.b16 %v416
      %v1552 = vunpack.c.l.b16 %v417
      %v1553 = vunpack.c.h.b16 %v417
      %v1554 = vunpack.c.l.b16 %v418
      %v1555 = vunpack.c.h.b16 %v418
      %v1556 = vunpack.c.l.b16 %v419
      %v1557 = vunpack.c.h.b16 %v419
      %v1558 = vunpack.c.l.b16 %v420
      %v1559 = vunpack.c.h.b16 %v420
      %v1560 = vunpack.c.l.b16 %v421
      %v1561 = vunpack.c.h.b16 %v421
      %v1562 = vunpack.c.l.b16 %v422
      %v1563 = vunpack.c.h.b16 %v422
      %v1564 = vunpack.c.l.b16 %v423
      %v1565 = vunpack.c.h.b16 %v423
      %v1566 = vunpack.c.l.b16 %v424
      %v1567 = vunpack.c.h.b16 %v424
      %v1568 = vunpack.c.l.b16 %v425
      %v1569 = vunpack.c.h.b16 %v425
      %v1570 = vunpack.c.l.b16 %v426
      %v1571 = vunpack.c.h.b16 %v426
      %v1572 = vunpack.c.l.b16 %v427
      %v1573 = vunpack.c.h.b16 %v427
      %v1574 = vunpack.c.l.b16 %v428
      %v1575 = vunpack.c.h.b16 %v428
      %v1576 = vunpack.c.l.b16 %v429
      %v1577 = vunpack.c.h.b16 %v429
      %v1578 = vunpack.c.l.b16 %v430
      %v1579 = vunpack.c.h.b16 %v430
      %v1580 = vunpack.c.l.b16 %v431
      %v1581 = vunpack.c.h.b16 %v431
      %v1582 = vunpack.c.l.b16 %v432
      %v1583 = vunpack.c.h.b16 %v432
      %v1584 = vunpack.c.l.b16 %v433
      %v1585 = vunpack.c.h.b16 %v433
      %v1586 = vunpack.c.l.b16 %v434
      %v1587 = vunpack.c.h.b16 %v434
      %v1588 = vunpack.c.l.b16 %v435
      %v1589 = vunpack.c.h.b16 %v435
      %v1590 = vunpack.c.l.b16 %v436
      %v1591 = vunpack.c.h.b16 %v436
      %v1592 = vunpack.c.l.b16 %v437
      %v1593 = vunpack.c.h.b16 %v437
      %v1594 = vunpack.c.l.b16 %v438
      %v1595 = vunpack.c.h.b16 %v438
      %v1596 = vunpack.c.l.b16 %v439
      %v1597 = vunpack.c.h.b16 %v439
      %v1598 = vunpack.c.l.b16 %v440
      %v1599 = vunpack.c.h.b16 %v440
      %v1600 = vunpack.c.l.b16 %v441
      %v1601 = vunpack.c.h.b16 %v441
      %v1602 = vunpack.c.l.b16 %v442
      %v1603 = vunpack.c.h.b16 %v442
      %v1604 = vunpack.c.l.b16 %v443
      %v1605 = vunpack.c.h.b16 %v443
      %v1606 = vunpack.c.l.b16 %v444
      %v1607 = vunpack.c.h.b16 %v444
      %v1608 = vunpack.c.l.b16 %v445
      %v1609 = vunpack.c.h.b16 %v445
      %v1610 = vunpack.c.l.b16 %v446
      %v1611 = vunpack.c.h.b16 %v446
      %v1612 = vunpack.c.l.b16 %v447
      %v1613 = vunpack.c.h.b16 %v447
      %v1614 = vunpack.c.l.b16 %v448
      %v1615 = vunpack.c.h.b16 %v448
      %v1616 = vunpack.c.l.b16 %v449
      %v1617 = vunpack.c.h.b16 %v449
      %v1618 = vunpack.c.l.b16 %v450
      %v1619 = vunpack.c.h.b16 %v450
      %v1620 = vunpack.c.l.b16 %v451
      %v1621 = vunpack.c.h.b16 %v451
      %v1622 = vunpack.c.l.b16 %v452
      %v1623 = vunpack.c.h.b16 %v452
      %v1624 = vunpack.c.l.b16 %v453
      %v1625 = vunpack.c.h.b16 %v453
      %v1626 = vunpack.c.l.b16 %v454
      %v1627 = vunpack.c.h.b16 %v454
      %v1628 = vunpack.c.l.b16 %v455
      %v1629 = vunpack.c.h.b16 %v455
      %v1630 = vunpack.c.l.b16 %v456
      %v1631 = vunpack.c.h.b16 %v456
      %v1632 = vunpack.c.l.b16 %v457
      %v1633 = vunpack.c.h.b16 %v457
      %v1634 = vunpack.c.l.b16 %v458
      %v1635 = vunpack.c.h.b16 %v458
      %v1636 = vunpack.c.l.b16 %v459
      %v1637 = vunpack.c.h.b16 %v459
      %v1638 = vunpack.c.l.b16 %v460
      %v1639 = vunpack.c.h.b16 %v460
      %v1640 = vunpack.c.l.b16 %v461
      %v1641 = vunpack.c.h.b16 %v461
      %v1642 = vunpack.c.l.b16 %v462
      %v1643 = vunpack.c.h.b16 %v462
      %v1644 = vunpack.c.l.b16 %v463
      %v1645 = vunpack.c.h.b16 %v463
      %v1646 = vunpack.c.l.b16 %v464
      %v1647 = vunpack.c.h.b16 %v464
      %v1648 = vunpack.c.l.b16 %v465
      %v1649 = vunpack.c.h.b16 %v465
      %v1650 = vunpack.c.l.b16 %v466
      %v1651 = vunpack.c.h.b16 %v466
      %v1652 = vunpack.c.l.b16 %v467
      %v1653 = vunpack.c.h.b16 %v467
      %v1654 = vunpack.c.l.b16 %v468
      %v1655 = vunpack.c.h.b16 %v468
      %v1656 = vunpack.c.l.b16 %v469
      %v1657 = vunpack.c.h.b16 %v469
      %v1658 = vunpack.c.l.b16 %v470
      %v1659 = vunpack.c.h.b16 %v470
      %v1660 = vunpack.c.l.b16 %v471
      %v1661 = vunpack.c.h.b16 %v471
      %v1662 = vunpack.c.l.b16 %v472
      %v1663 = vunpack.c.h.b16 %v472
      %v1664 = vunpack.c.l.b16 %v473
      %v1665 = vunpack.c.h.b16 %v473
      %v1666 = vunpack.c.l.b16 %v474
      %v1667 = vunpack.c.h.b16 %v474
      %v1668 = vunpack.c.l.b16 %v475
      %v1669 = vunpack.c.h.b16 %v475
      %v1670 = vunpack.c.l.b16 %v476
      %v1671 = vunpack.c.h.b16 %v476
      %v1672 = vunpack.c.l.b16 %v477
      %v1673 = vunpack.c.h.b16 %v477
      %v1674 = vunpack.c.l.b16 %v478
      %v1675 = vunpack.c.h.b16 %v478
      %v1676 = vunpack.c.l.b16 %v479
      %v1677 = vunpack.c.h.b16 %v479
      %v1678 = vunpack.c.l.b16 %v480
      %v1679 = vunpack.c.h.b16 %v480
      %v1680 = vunpack.c.l.b16 %v481
      %v1681 = vunpack.c.h.b16 %v481
      %v1682 = vunpack.c.l.b16 %v482
      %v1683 = vunpack.c.h.b16 %v482
      %v1684 = vunpack.c.l.b16 %v483
      %v1685 = vunpack.c.h.b16 %v483
      %v1686 = vunpack.c.l.b16 %v484
      %v1687 = vunpack.c.h.b16 %v484
      %v1688 = vunpack.c.l.b16 %v485
      %v1689 = vunpack.c.h.b16 %v485
      %v1690 = vunpack.c.l.b16 %v486
      %v1691 = vunpack.c.h.b16 %v486
      %v1692 = vunpack.c.l.b16 %v487
      %v1693 = vunpack.c.h.b16 %v487
      %v1694 = vunpack.c.l.b16 %v488
      %v1695 = vunpack.c.h.b16 %v488
      %v1696 = vunpack.c.l.b16 %v489
      %v1697 = vunpack.c.h.b16 %v489
      %v1698 = vunpack.c.l.b16 %v490
      %v1699 = vunpack.c.h.b16 %v490
      %v1700 = vunpack.c.l.b16 %v491
      %v1701 = vunpack.c.h.b16 %v491
      %v1702 = vunpack.c.l.b16 %v492
      %v1703 = vunpack.c.h.b16 %v492
      %v1704 = vunpack.c.l.b16 %v493
      %v1705 = vunpack.c.h.b16 %v493
      %v1706 = vunpack.c.l.b16 %v494
      %v1707 = vunpack.c.h.b16 %v494
      %v1708 = vunpack.c.l.b16 %v495
      %v1709 = vunpack.c.h.b16 %v495
      %v1710 = vunpack.c.l.b16 %v496
      %v1711 = vunpack.c.h.b16 %v496
      %v1712 = vunpack.c.l.b16 %v497
      %v1713 = vunpack.c.h.b16 %v497
      %v1714 = vunpack.c.l.b16 %v498
      %v1715 = vunpack.c.h.b16 %v498
      %v1716 = vunpack.c.l.b16 %v499
      %v1717 = vunpack.c.h.b16 %v499
      %v1718 = vunpack.c.l.b16 %v500
      %v1719 = vunpack.c.h.b16 %v500
      %v1720 = vunpack.c.l.b16 %v501
      %v1721 = vunpack.c.h.b16 %v501
      %v1722 = vunpack.c.l.b16 %v502
      %v1723 = vunpack.c.h.b16 %v502
      %v1724 = vunpack.c.l.b16 %v503
      %v1725 = vunpack.c.h.b16 %v503
      %v1726 = vunpack.c.l.b16 %v504
      %v1727 = vunpack.c.h.b16 %v504
      %v1728 = vunpack.c.l.b16 %v505
      %v1729 = vunpack.c.h.b16 %v505
      %v1730 = vunpack.c.l.b16 %v506
      %v1731 = vunpack.c.h.b16 %v506
      %v1732 = vunpack.c.l.b16 %v507
      %v1733 = vunpack.c.h.b16 %v507
      %v1734 = vunpack.c.l.b16 %v508
      %v1735 = vunpack.c.h.b16 %v508
      %v1736 = vunpack.c.l.b16 %v509
      %v1737 = vunpack.c.h.b16 %v509
      %v1738 = vunpack.c.l.b16 %v510
      %v1739 = vunpack.c.h.b16 %v510
      %v1740 = vunpack.c.l.b16 %v511
      %v1741 = vunpack.c.h.b16 %v511
      %v1742 = vunpack.c.l.b16 %v512
      %v1743 = vunpack.c.h.b16 %v512
      %v1744 = vunpack.c.l.b16 %v513
      %v1745 = vunpack.c.h.b16 %v513
      %v1746 = vunpack.c.l.b16 %v514
      %v1747 = vunpack.c.h.b16 %v514
      %v1748 = vunpack.c.l.b16 %v515
      %v1749 = vunpack.c.h.b16 %v515
      %v1750 = vunpack.c.l.b16 %v516
      %v1751 = vunpack.c.h.b16 %v516
      %v1752 = vunpack.c.l.b16 %v517
      %v1753 = vunpack.c.h.b16 %v517
      %v1754 = vunpack.c.l.b16 %v518
      %v1755 = vunpack.c.h.b16 %v518
      %v1756 = vunpack.c.l.b16 %v519
      %v1757 = vunpack.c.h.b16 %v519
      %v1758 = vunpack.c.l.b16 %v520
      %v1759 = vunpack.c.h.b16 %v520
      %v1760 = vunpack.c.l.b16 %v521
      %v1761 = vunpack.c.h.b16 %v521
      %v1762 = vunpack.c.l.b16 %v522
      %v1763 = vunpack.c.h.b16 %v522
      %v1764 = vunpack.c.l.b16 %v523
      %v1765 = vunpack.c.h.b16 %v523
      %v1766 = vunpack.c.l.b16 %v524
      %v1767 = vunpack.c.h.b16 %v524
      %v1768 = vunpack.c.l.b16 %v525
      %v1769 = vunpack.c.h.b16 %v525
      %v1770 = vunpack.c.l.b16 %v526
      %v1771 = vunpack.c.h.b16 %v526
      %v1772 = vunpack.c.l.b16 %v527
      %v1773 = vunpack.c.h.b16 %v527
      %v1774 = vunpack.c.l.b16 %v528
      %v1775 = vunpack.c.h.b16 %v528
      %v1776 = vunpack.c.l.b16 %v529
      %v1777 = vunpack.c.h.b16 %v529
      %v1778 = vunpack.c.l.b16 %v530
      %v1779 = vunpack.c.h.b16 %v530
      %v1780 = vunpack.c.l.b16 %v531
      %v1781 = vunpack.c.h.b16 %v531
      %v1782 = vunpack.c.l.b16 %v532
      %v1783 = vunpack.c.h.b16 %v532
      %v1784 = vunpack.c.l.b16 %v533
      %v1785 = vunpack.c.h.b16 %v533
      %v1786 = vunpack.c.l.b16 %v534
      %v1787 = vunpack.c.h.b16 %v534
      %v1788 = vunpack.c.l.b16 %v535
      %v1789 = vunpack.c.h.b16 %v535
      %v1790 = vunpack.c.l.b16 %v536
      %v1791 = vunpack.c.h.b16 %v536
      %v1792 = vunpack.c.l.b16 %v537
      %v1793 = vunpack.c.h.b16 %v537
      %v1794 = vunpack.c.l.b16 %v538
      %v1795 = vunpack.c.h.b16 %v538
      %v1796 = vunpack.c.l.b16 %v539
      %v1797 = vunpack.c.h.b16 %v539
      %v1798 = vunpack.c.l.b16 %v540
      %v1799 = vunpack.c.h.b16 %v540
      %v1800 = vunpack.c.l.b16 %v541
      %v1801 = vunpack.c.h.b16 %v541
      %v1802 = vunpack.c.l.b16 %v542
      %v1803 = vunpack.c.h.b16 %v542
      %v1804 = vunpack.c.l.b16 %v543
      %v1805 = vunpack.c.h.b16 %v543
      %v1806 = vunpack.c.l.b16 %v544
      %v1807 = vunpack.c.h.b16 %v544
      %v1808 = vunpack.c.l.b16 %v545
      %v1809 = vunpack.c.h.b16 %v545
      %v1810 = vunpack.c.l.b16 %v546
      %v1811 = vunpack.c.h.b16 %v546
      %v1812 = vunpack.c.l.b16 %v547
      %v1813 = vunpack.c.h.b16 %v547
      %v1814 = vunpack.c.l.b16 %v548
      %v1815 = vunpack.c.h.b16 %v548
      %v1816 = vunpack.c.l.b16 %v549
      %v1817 = vunpack.c.h.b16 %v549
      %v1818 = vunpack.c.l.b16 %v550
      %v1819 = vunpack.c.h.b16 %v550
      %v1820 = vunpack.c.l.b16 %v551
      %v1821 = vunpack.c.h.b16 %v551
      %v1822 = vunpack.c.l.b16 %v552
      %v1823 = vunpack.c.h.b16 %v552
      %v1824 = vunpack.c.l.b16 %v553
      %v1825 = vunpack.c.h.b16 %v553
      %v1826 = vunpack.c.l.b16 %v554
      %v1827 = vunpack.c.h.b16 %v554
      %v1828 = vunpack.c.l.b16 %v555
      %v1829 = vunpack.c.h.b16 %v555
      %v1830 = vunpack.c.l.b16 %v556
      %v1831 = vunpack.c.h.b16 %v556
      %v1832 = vunpack.c.l.b16 %v557
      %v1833 = vunpack.c.h.b16 %v557
      %v1834 = vunpack.c.l.b16 %v558
      %v1835 = vunpack.c.h.b16 %v558
      %v1836 = vunpack.c.l.b16 %v559
      %v1837 = vunpack.c.h.b16 %v559
      %v1838 = vunpack.c.l.b16 %v560
      %v1839 = vunpack.c.h.b16 %v560
      %v1840 = vunpack.c.l.b16 %v561
      %v1841 = vunpack.c.h.b16 %v561
      %v1842 = vunpack.c.l.b16 %v562
      %v1843 = vunpack.c.h.b16 %v562
      %v1844 = vunpack.c.l.b16 %v563
      %v1845 = vunpack.c.h.b16 %v563
      %v1846 = vunpack.c.l.b16 %v564
      %v1847 = vunpack.c.h.b16 %v564
      %v1848 = vunpack.c.l.b16 %v565
      %v1849 = vunpack.c.h.b16 %v565
      %v1850 = vunpack.c.l.b16 %v566
      %v1851 = vunpack.c.h.b16 %v566
      %v1852 = vunpack.c.l.b16 %v567
      %v1853 = vunpack.c.h.b16 %v567
      %v1854 = vunpack.c.l.b16 %v568
      %v1855 = vunpack.c.h.b16 %v568
      %v1856 = vunpack.c.l.b16 %v569
      %v1857 = vunpack.c.h.b16 %v569
      %v1858 = vunpack.c.l.b16 %v570
      %v1859 = vunpack.c.h.b16 %v570
      %v1860 = vunpack.c.l.b16 %v571
      %v1861 = vunpack.c.h.b16 %v571
      %v1862 = vunpack.c.l.b16 %v572
      %v1863 = vunpack.c.h.b16 %v572
      %v1864 = vunpack.c.l.b16 %v573
      %v1865 = vunpack.c.h.b16 %v573
      %v1866 = vunpack.c.l.b16 %v574
      %v1867 = vunpack.c.h.b16 %v574
      %v1868 = vunpack.c.l.b16 %v575
      %v1869 = vunpack.c.h.b16 %v575
      %v1870 = vunpack.c.l.b16 %v576
      %v1871 = vunpack.c.h.b16 %v576
      %v1872 = vunpack.c.l.b16 %v577
      %v1873 = vunpack.c.h.b16 %v577
      %v1874 = vunpack.c.l.b16 %v578
      %v1875 = vunpack.c.h.b16 %v578
      %v1876 = vunpack.c.l.b16 %v579
      %v1877 = vunpack.c.h.b16 %v579
      %v1878 = vunpack.c.l.b16 %v580
      %v1879 = vunpack.c.h.b16 %v580
      %v1880 = vunpack.c.l.b16 %v581
      %v1881 = vunpack.c.h.b16 %v581
      %v1882 = vunpack.c.l.b16 %v582
      %v1883 = vunpack.c.h.b16 %v582
      %v1884 = vunpack.c.l.b16 %v583
      %v1885 = vunpack.c.h.b16 %v583
      %v1886 = vunpack.c.l.b16 %v584
      %v1887 = vunpack.c.h.b16 %v584
      %v1888 = vunpack.c.l.b16 %v585
      %v1889 = vunpack.c.h.b16 %v585
      %v1890 = vunpack.c.l.b16 %v586
      %v1891 = vunpack.c.h.b16 %v586
      %v1892 = vunpack.c.l.b16 %v587
      %v1893 = vunpack.c.h.b16 %v587
      %v1894 = vunpack.c.l.b16 %v588
      %v1895 = vunpack.c.h.b16 %v588
      %v1896 = vunpack.c.l.b16 %v589
      %v1897 = vunpack.c.h.b16 %v589
      %v1898 = vunpack.c.l.b16 %v590
      %v1899 = vunpack.c.h.b16 %v590
      %v1900 = vunpack.c.l.b16 %v591
      %v1901 = vunpack.c.h.b16 %v591
      %v1902 = vunpack.c.l.b16 %v592
      %v1903 = vunpack.c.h.b16 %v592
      %v1904 = vunpack.c.l.b16 %v593
      %v1905 = vunpack.c.h.b16 %v593
      %v1906 = vunpack.c.l.b16 %v594
      %v1907 = vunpack.c.h.b16 %v594
      %v1908 = vunpack.c.l.b16 %v595
      %v1909 = vunpack.c.h.b16 %v595
      %v1910 = vunpack.c.l.b16 %v596
      %v1911 = vunpack.c.h.b16 %v596
      %v1912 = vunpack.c.l.b16 %v597
      %v1913 = vunpack.c.h.b16 %v597
      %v1914 = vunpack.c.l.b16 %v598
      %v1915 = vunpack.c.h.b16 %v598
      %v1916 = vunpack.c.l.b16 %v599
      %v1917 = vunpack.c.h.b16 %v599
      %v1918 = vunpack.c.l.b16 %v600
      %v1919 = vunpack.c.h.b16 %v600
      %v1920 = vunpack.c.l.b16 %v601
      %v1921 = vunpack.c.h.b16 %v601
      %v1922 = vunpack.c.l.b16 %v602
      %v1923 = vunpack.c.h.b16 %v602
      %v1924 = vunpack.c.l.b16 %v603
      %v1925 = vunpack.c.h.b16 %v603
      %v1926 = vunpack.c.l.b16 %v604
      %v1927 = vunpack.c.h.b16 %v604
      %v1928 = vunpack.c.l.b16 %v605
      %v1929 = vunpack.c.h.b16 %v605
      %v1930 = vunpack.c.l.b16 %v606
      %v1931 = vunpack.c.h.b16 %v606
      %v1932 = vunpack.c.l.b16 %v607
      %v1933 = vunpack.c.h.b16 %v607
      %v1934 = vunpack.c.l.b16 %v608
      %v1935 = vunpack.c.h.b16 %v608
      %v1936 = vunpack.c.l.b16 %v609
      %v1937 = vunpack.c.h.b16 %v609
      %v1938 = vunpack.c.l.b16 %v610
      %v1939 = vunpack.c.h.b16 %v610
      %v1940 = vunpack.c.l.b16 %v611
      %v1941 = vunpack.c.h.b16 %v611
      %v1942 = vunpack.c.l.b16 %v612
      %v1943 = vunpack.c.h.b16 %v612
      %v1944 = vunpack.c.l.b16 %v613
      %v1945 = vunpack.c.h.b16 %v613
      %v1946 = vunpack.c.l.b16 %v614
      %v1947 = vunpack.c.h.b16 %v614
      %v1948 = vunpack.c.l.b16 %v615
      %v1949 = vunpack.c.h.b16 %v615
      %v1950 = vunpack.c.l.b16 %v616
      %v1951 = vunpack.c.h.b16 %v616
      %v1952 = vunpack.c.l.b16 %v617
      %v1953 = vunpack.c.h.b16 %v617
      %v1954 = vunpack.c.l.b16 %v618
      %v1955 = vunpack.c.h.b16 %v618
      %v1956 = vunpack.c.l.b16 %v619
      %v1957 = vunpack.c.h.b16 %v619
      %v1958 = vunpack.c.l.b16 %v620
      %v1959 = vunpack.c.h.b16 %v620
      %v1960 = vunpack.c.l.b16 %v621
      %v1961 = vunpack.c.h.b16 %v621
      %v1962 = vunpack.c.l.b16 %v622
      %v1963 = vunpack.c.h.b16 %v622
      %v1964 = vunpack.c.l.b16 %v623
      %v1965 = vunpack.c.h.b16 %v623
      %v1966 = vunpack.c.l.b16 %v624
      %v1967 = vunpack.c.h.b16 %v624
      %v1968 = vunpack.c.l.b16 %v625
      %v1969 = vunpack.c.h.b16 %v625
      %v1970 = vunpack.c.l.b16 %v626
      %v1971 = vunpack.c.h.b16 %v626
      %v1972 = vunpack.c.l.b16 %v627
      %v1973 = vunpack.c.h.b16 %v627
      %v1974 = vunpack.c.l.b16 %v628
      %v1975 = vunpack.c.h.b16 %v628
      %v1976 = vunpack.c.l.b16 %v629
      %v1977 = vunpack.c.h.b16 %v629
      %v1978 = vunpack.c.l.b16 %v630
      %v1979 = vunpack.c.h.b16 %v630
      %v1980 = vunpack.c.l.b16 %v631
      %v1981 = vunpack.c.h.b16 %v631
      %v1982 = vunpack.c.l.b16 %v632
      %v1983 = vunpack.c.h.b16 %v632
      %v1984 = vunpack.c.l.b16 %v633
      %v1985 = vunpack.c.h.b16 %v633
      %v1986 = vunpack.c.l.b16 %v634
      %v1987 = vunpack.c.h.b16 %v634
      %v1988 = vunpack.c.l.b16 %v635
      %v1989 = vunpack.c.h.b16 %v635
      %v1990 = vunpack.c.l.b16 %v636
      %v1991 = vunpack.c.h.b16 %v636
      %v1992 = vunpack.c.l.b16 %v637
      %v1993 = vunpack.c.h.b16 %v637
      %v1994 = vunpack.c.l.b16 %v638
      %v1995 = vunpack.c.h.b16 %v638
      %v1996 = vunpack.c.l.b16 %v639
      %v1997 = vunpack.c.h.b16 %v639
      %v1998 = vunpack.c.l.b16 %v640
      %v1999 = vunpack.c.h.b16 %v640
      %v2000 = vunpack.c.l.b16 %v641
      %v2001 = vunpack.c.h.b16 %v641
      %v2002 = vunpack.c.l.b16 %v642
      %v2003 = vunpack.c.h.b16 %v642
      %v2004 = vunpack.c.l.b16 %v643
      %v2005 = vunpack.c.h.b16 %v643
      %v2006 = vunpack.c.l.b16 %v644
      %v2007 = vunpack.c.h.b16 %v644
      %v2008 = vunpack.c.l.b16 %v645
      %v2009 = vunpack.c.h.b16 %v645
      %v2010 = vunpack.c.l.b16 %v646
      %v2011 = vunpack.c.h.b16 %v646
      %v2012 = vunpack.c.l.b16 %v647
      %v2013 = vunpack.c.h.b16 %v647
      %v2014 = vunpack.c.l.b16 %v648
      %v2015 = vunpack.c.h.b16 %v648
      %v2016 = vunpack.c.l.b16 %v649
      %v2017 = vunpack.c.h.b16 %v649
      %v2018 = vunpack.c.l.b16 %v650
      %v2019 = vunpack.c.h.b16 %v650
      %v2020 = vunpack.c.l.b16 %v651
      %v2021 = vunpack.c.h.b16 %v651
      %v2022 = vunpack.c.l.b16 %v652
      %v2023 = vunpack.c.h.b16 %v652
      %v2024 = vunpack.c.l.b16 %v653
      %v2025 = vunpack.c.h.b16 %v653
      %v2026 = vunpack.c.l.b16 %v654
      %v2027 = vunpack.c.h.b16 %v654
      %v2028 = vunpack.c.l.b16 %v655
      %v2029 = vunpack.c.h.b16 %v655
      %v2030 = vunpack.c.l.b16 %v656
      %v2031 = vunpack.c.h.b16 %v656
      %v2032 = vunpack.c.l.b16 %v657
      %v2033 = vunpack.c.h.b16 %v657
      %v2034 = vunpack.c.l.b16 %v658
      %v2035 = vunpack.c.h.b16 %v658
      %v2036 = vunpack.c.l.b16 %v659
      %v2037 = vunpack.c.h.b16 %v659
      %v2038 = vunpack.c.l.b16 %v660
      %v2039 = vunpack.c.h.b16 %v660
      %v2040 = vunpack.c.l.b16 %v661
      %v2041 = vunpack.c.h.b16 %v661
      %v2042 = vpack.c.b16 %v1154, %v1146
      %v2043 = vpack.c.b16 %v1155, %v1147
      %v2044 = vpack.c.b16 %v1156, %v1148
      %v2045 = vpack.c.b16 %v1157, %v1149
      %v2046 = vpack.c.b16 %v1158, %v1150
      %v2047 = vpack.c.b16 %v1159, %v1151
      %v2048 = vpack.c.b16 %v1160, %v1152
      %v2049 = vpack.c.b16 %v1161, %v1153
      %v2050 = vpack.c.b16 %v1170, %v1162
      %v2051 = vpack.c.b16 %v1171, %v1163
      %v2052 = vpack.c.b16 %v1172, %v1164
      %v2053 = vpack.c.b16 %v1173, %v1165
      %v2054 = vpack.c.b16 %v1174, %v1166
      %v2055 = vpack.c.b16 %v1175, %v1167
      %v2056 = vpack.c.b16 %v1176, %v1168
      %v2057 = vpack.c.b16 %v1177, %v1169
      %v2058 = vpack.c.b16 %v1186, %v1178
      %v2059 = vpack.c.b16 %v1187, %v1179
      %v2060 = vpack.c.b16 %v1188, %v1180
      %v2061 = vpack.c.b16 %v1189, %v1181
      %v2062 = vpack.c.b16 %v1190, %v1182
      %v2063 = vpack.c.b16 %v1191, %v1183
      %v2064 = vpack.c.b16 %v1192, %v1184
      %v2065 = vpack.c.b16 %v1193, %v1185
      %v2066 = vpack.c.b16 %v1202, %v1194
      %v2067 = vpack.c.b16 %v1203, %v1195
      %v2068 = vpack.c.b16 %v1204, %v1196
      %v2069 = vpack.c.b16 %v1205, %v1197
      %v2070 = vpack.c.b16 %v1206, %v1198
      %v2071 = vpack.c.b16 %v1207, %v1199
      %v2072 = vpack.c.b16 %v1208, %v1200
      %v2073 = vpack.c.b16 %v1209, %v1201
      %v2074 = vpack.c.b16 %v1218, %v1210
      %v2075 = vpack.c.b16 %v1219, %v1211
      %v2076 = vpack.c.b16 %v1220, %v1212
      %v2077 = vpack.c.b16 %v1221, %v1213
      %v2078 = vpack.c.b16 %v1222, %v1214
      %v2079 = vpack.c.b16 %v1223, %v1215
      %v2080 = vpack.c.b16 %v1224, %v1216
      %v2081 = vpack.c.b16 %v1225, %v1217
      %v2082 = vpack.c.b16 %v1234, %v1226
      %v2083 = vpack.c.b16 %v1235, %v1227
      %v2084 = vpack.c.b16 %v1236, %v1228
      %v2085 = vpack.c.b16 %v1237, %v1229
      %v2086 = vpack.c.b16 %v1238, %v1230
      %v2087 = vpack.c.b16 %v1239, %v1231
      %v2088 = vpack.c.b16 %v1240, %v1232
      %v2089 = vpack.c.b16 %v1241, %v1233
      %v2090 = vpack.c.b16 %v1250, %v1242
      %v2091 = vpack.c.b16 %v1251, %v1243
      %v2092 = vpack.c.b16 %v1252, %v1244
      %v2093 = vpack.c.b16 %v1253, %v1245
      %v2094 = vpack.c.b16 %v1254, %v1246
      %v2095 = vpack.c.b16 %v1255, %v1247
      %v2096 = vpack.c.b16 %v1256, %v1248
      %v2097 = vpack.c.b16 %v1257, %v1249
      %v2098 = vpack.c.b16 %v1266, %v1258
      %v2099 = vpack.c.b16 %v1267, %v1259
      %v2100 = vpack.c.b16 %v1268, %v1260
      %v2101 = vpack.c.b16 %v1269, %v1261
      %v2102 = vpack.c.b16 %v1270, %v1262
      %v2103 = vpack.c.b16 %v1271, %v1263
      %v2104 = vpack.c.b16 %v1272, %v1264
      %v2105 = vpack.c.b16 %v1273, %v1265
      %v2106 = vpack.c.b16 %v1282, %v1274
      %v2107 = vpack.c.b16 %v1283, %v1275
      %v2108 = vpack.c.b16 %v1284, %v1276
      %v2109 = vpack.c.b16 %v1285, %v1277
      %v2110 = vpack.c.b16 %v1286, %v1278
      %v2111 = vpack.c.b16 %v1287, %v1279
      %v2112 = vpack.c.b16 %v1288, %v1280
      %v2113 = vpack.c.b16 %v1289, %v1281
      %v2114 = vpack.c.b16 %v1298, %v1290
      %v2115 = vpack.c.b16 %v1299, %v1291
      %v2116 = vpack.c.b16 %v1300, %v1292
      %v2117 = vpack.c.b16 %v1301, %v1293
      %v2118 = vpack.c.b16 %v1302, %v1294
      %v2119 = vpack.c.b16 %v1303, %v1295
      %v2120 = vpack.c.b16 %v1304, %v1296
      %v2121 = vpack.c.b16 %v1305, %v1297
      %v2122 = vpack.c.b16 %v1314, %v1306
      %v2123 = vpack.c.b16 %v1315, %v1307
      %v2124 = vpack.c.b16 %v1316, %v1308
      %v2125 = vpack.c.b16 %v1317, %v1309
      %v2126 = vpack.c.b16 %v1318, %v1310
      %v2127 = vpack.c.b16 %v1319, %v1311
      %v2128 = vpack.c.b16 %v1320, %v1312
      %v2129 = vpack.c.b16 %v1321, %v1313
      %v2130 = vpack.c.b16 %v1330, %v1322
      %v2131 = vpack.c.b16 %v1331, %v1323
      %v2132 = vpack.c.b16 %v1332, %v1324
      %v2133 = vpack.c.b16 %v1333, %v1325
      %v2134 = vpack.c.b16 %v1334, %v1326
      %v2135 = vpack.c.b16 %v1335, %v1327
      %v2136 = vpack.c.b16 %v1336, %v1328
      %v2137 = vpack.c.b16 %v1337, %v1329
      %v2138 = vpack.c.b16 %v1346, %v1338
      %v2139 = vpack.c.b16 %v1347, %v1339
      %v2140 = vpack.c.b16 %v1348, %v1340
      %v2141 = vpack.c.b16 %v1349, %v1341
      %v2142 = vpack.c.b16 %v1350, %v1342
      %v2143 = vpack.c.b16 %v1351, %v1343
      %v2144 = vpack.c.b16 %v1352, %v1344
      %v2145 = vpack.c.b16 %v1353, %v1345
      %v2146 = vpack.c.b16 %v1362, %v1354
      %v2147 = vpack.c.b16 %v1363, %v1355
      %v2148 = vpack.c.b16 %v1364, %v1356
      %v2149 = vpack.c.b16 %v1365, %v1357
      %v2150 = vpack.c.b16 %v1366, %v1358
      %v2151 = vpack.c.b16 %v1367, %v1359
      %v2152 = vpack.c.b16 %v1368, %v1360
      %v2153 = vpack.c.b16 %v1369, %v1361
      %v2154 = vpack.c.b16 %v1378, %v1370
      %v2155 = vpack.c.b16 %v1379, %v1371
      %v2156 = vpack.c.b16 %v1380, %v1372
      %v2157 = vpack.c.b16 %v1381, %v1373
      %v2158 = vpack.c.b16 %v1382, %v1374
      %v2159 = vpack.c.b16 %v1383, %v1375
      %v2160 = vpack.c.b16 %v1384, %v1376
      %v2161 = vpack.c.b16 %v1385, %v1377
      %v2162 = vpack.c.b16 %v1394, %v1386
      %v2163 = vpack.c.b16 %v1395, %v1387
      %v2164 = vpack.c.b16 %v1396, %v1388
      %v2165 = vpack.c.b16 %v1397, %v1389
      %v2166 = vpack.c.b16 %v1398, %v1390
      %v2167 = vpack.c.b16 %v1399, %v1391
      %v2168 = vpack.c.b16 %v1400, %v1392
      %v2169 = vpack.c.b16 %v1401, %v1393
      %v2170 = vpack.c.b16 %v1410, %v1402
      %v2171 = vpack.c.b16 %v1411, %v1403
      %v2172 = vpack.c.b16 %v1412, %v1404
      %v2173 = vpack.c.b16 %v1413, %v1405
      %v2174 = vpack.c.b16 %v1414, %v1406
      %v2175 = vpack.c.b16 %v1415, %v1407
      %v2176 = vpack.c.b16 %v1416, %v1408
      %v2177 = vpack.c.b16 %v1417, %v1409
      %v2178 = vpack.c.b16 %v1426, %v1418
      %v2179 = vpack.c.b16 %v1427, %v1419
      %v2180 = vpack.c.b16 %v1428, %v1420
      %v2181 = vpack.c.b16 %v1429, %v1421
      %v2182 = vpack.c.b16 %v1430, %v1422
      %v2183 = vpack.c.b16 %v1431, %v1423
      %v2184 = vpack.c.b16 %v1432, %v1424
      %v2185 = vpack.c.b16 %v1433, %v1425
      %v2186 = vpack.c.b16 %v1442, %v1434
      %v2187 = vpack.c.b16 %v1443, %v1435
      %v2188 = vpack.c.b16 %v1444, %v1436
      %v2189 = vpack.c.b16 %v1445, %v1437
      %v2190 = vpack.c.b16 %v1446, %v1438
      %v2191 = vpack.c.b16 %v1447, %v1439
      %v2192 = vpack.c.b16 %v1448, %v1440
      %v2193 = vpack.c.b16 %v1449, %v1441
      %v2194 = vpack.c.b16 %v1458, %v1450
      %v2195 = vpack.c.b16 %v1459, %v1451
      %v2196 = vpack.c.b16 %v1460, %v1452
      %v2197 = vpack.c.b16 %v1461, %v1453
      %v2198 = vpack.c.b16 %v1462, %v1454
      %v2199 = vpack.c.b16 %v1463, %v1455
      %v2200 = vpack.c.b16 %v1464, %v1456
      %v2201 = vpack.c.b16 %v1465, %v1457
      %v2202 = vpack.c.b16 %v1474, %v1466
      %v2203 = vpack.c.b16 %v1475, %v1467
      %v2204 = vpack.c.b16 %v1476, %v1468
      %v2205 = vpack.c.b16 %v1477, %v1469
      %v2206 = vpack.c.b16 %v1478, %v1470
      %v2207 = vpack.c.b16 %v1479, %v1471
      %v2208 = vpack.c.b16 %v1480, %v1472
      %v2209 = vpack.c.b16 %v1481, %v1473
      %v2210 = vpack.c.b16 %v1490, %v1482
      %v2211 = vpack.c.b16 %v1491, %v1483
      %v2212 = vpack.c.b16 %v1492, %v1484
      %v2213 = vpack.c.b16 %v1493, %v1485
      %v2214 = vpack.c.b16 %v1494, %v1486
      %v2215 = vpack.c.b16 %v1495, %v1487
      %v2216 = vpack.c.b16 %v1496, %v1488
      %v2217 = vpack.c.b16 %v1497, %v1489
      %v2218 = vpack.c.b16 %v1506, %v1498
      %v2219 = vpack.c.b16 %v1507, %v1499
      %v2220 = vpack.c.b16 %v1508, %v1500
      %v2221 = vpack.c.b16 %v1509, %v1501
      %v2222 = vpack.c.b16 %v1510, %v1502
      %v2223 = vpack.c.b16 %v1511, %v1503
      %v2224 = vpack.c.b16 %v1512, %v1504
      %v2225 = vpack.c.b16 %v1513, %v1505
      %v2226 = vpack.c.b16 %v1522, %v1514
      %v2227 = vpack.c.b16 %v1523, %v1515
      %v2228 = vpack.c.b16 %v1524, %v1516
      %v2229 = vpack.c.b16 %v1525, %v1517
      %v2230 = vpack.c.b16 %v1526, %v1518
      %v2231 = vpack.c.b16 %v1527, %v1519
      %v2232 = vpack.c.b16 %v1528, %v1520
      %v2233 = vpack.c.b16 %v1529, %v1521
      %v2234 = vpack.c.b16 %v1538, %v1530
      %v2235 = vpack.c.b16 %v1539, %v1531
      %v2236 = vpack.c.b16 %v1540, %v1532
      %v2237 = vpack.c.b16 %v1541, %v1533
      %v2238 = vpack.c.b16 %v1542, %v1534
      %v2239 = vpack.c.b16 %v1543, %v1535
      %v2240 = vpack.c.b16 %v1544, %v1536
      %v2241 = vpack.c.b16 %v1545, %v1537
      %v2242 = vpack.c.b16 %v1554, %v1546
      %v2243 = vpack.c.b16 %v1555, %v1547
      %v2244 = vpack.c.b16 %v1556, %v1548
      %v2245 = vpack.c.b16 %v1557, %v1549
      %v2246 = vpack.c.b16 %v1558, %v1550
      %v2247 = vpack.c.b16 %v1559, %v1551
      %v2248 = vpack.c.b16 %v1560, %v1552
      %v2249 = vpack.c.b16 %v1561, %v1553
      %v2250 = vpack.c.b16 %v1570, %v1562
      %v2251 = vpack.c.b16 %v1571, %v1563
      %v2252 = vpack.c.b16 %v1572, %v1564
      %v2253 = vpack.c.b16 %v1573, %v1565
      %v2254 = vpack.c.b16 %v1574, %v1566
      %v2255 = vpack.c.b16 %v1575, %v1567
      %v2256 = vpack.c.b16 %v1576, %v1568
      %v2257 = vpack.c.b16 %v1577, %v1569
      %v2258 = vpack.c.b16 %v1586, %v1578
      %v2259 = vpack.c.b16 %v1587, %v1579
      %v2260 = vpack.c.b16 %v1588, %v1580
      %v2261 = vpack.c.b16 %v1589, %v1581
      %v2262 = vpack.c.b16 %v1590, %v1582
      %v2263 = vpack.c.b16 %v1591, %v1583
      %v2264 = vpack.c.b16 %v1592, %v1584
      %v2265 = vpack.c.b16 %v1593, %v1585
      %v2266 = vpack.c.b16 %v1602, %v1594
      %v2267 = vpack.c.b16 %v1603, %v1595
      %v2268 = vpack.c.b16 %v1604, %v1596
      %v2269 = vpack.c.b16 %v1605, %v1597
      %v2270 = vpack.c.b16 %v1606, %v1598
      %v2271 = vpack.c.b16 %v1607, %v1599
      %v2272 = vpack.c.b16 %v1608, %v1600
      %v2273 = vpack.c.b16 %v1609, %v1601
      %v2274 = vpack.c.b16 %v1618, %v1610
      %v2275 = vpack.c.b16 %v1619, %v1611
      %v2276 = vpack.c.b16 %v1620, %v1612
      %v2277 = vpack.c.b16 %v1621, %v1613
      %v2278 = vpack.c.b16 %v1622, %v1614
      %v2279 = vpack.c.b16 %v1623, %v1615
      %v2280 = vpack.c.b16 %v1624, %v1616
      %v2281 = vpack.c.b16 %v1625, %v1617
      %v2282 = vpack.c.b16 %v1634, %v1626
      %v2283 = vpack.c.b16 %v1635, %v1627
      %v2284 = vpack.c.b16 %v1636, %v1628
      %v2285 = vpack.c.b16 %v1637, %v1629
      %v2286 = vpack.c.b16 %v1638, %v1630
      %v2287 = vpack.c.b16 %v1639, %v1631
      %v2288 = vpack.c.b16 %v1640, %v1632
      %v2289 = vpack.c.b16 %v1641, %v1633
      %v2290 = vpack.c.b16 %v1650, %v1642
      %v2291 = vpack.c.b16 %v1651, %v1643
      %v2292 = vpack.c.b16 %v1652, %v1644
      %v2293 = vpack.c.b16 %v1653, %v1645
      %v2294 = vpack.c.b16 %v1654, %v1646
      %v2295 = vpack.c.b16 %v1655, %v1647
      %v2296 = vpack.c.b16 %v1656, %v1648
      %v2297 = vpack.c.b16 %v1657, %v1649
      %v2298 = vpack.c.b16 %v1666, %v1658
      %v2299 = vpack.c.b16 %v1667, %v1659
      %v2300 = vpack.c.b16 %v1668, %v1660
      %v2301 = vpack.c.b16 %v1669, %v1661
      %v2302 = vpack.c.b16 %v1670, %v1662
      %v2303 = vpack.c.b16 %v1671, %v1663
      %v2304 = vpack.c.b16 %v1672, %v1664
      %v2305 = vpack.c.b16 %v1673, %v1665
      %v2306 = vpack.c.b16 %v1682, %v1674
      %v2307 = vpack.c.b16 %v1683, %v1675
      %v2308 = vpack.c.b16 %v1684, %v1676
      %v2309 = vpack.c.b16 %v1685, %v1677
      %v2310 = vpack.c.b16 %v1686, %v1678
      %v2311 = vpack.c.b16 %v1687, %v1679
      %v2312 = vpack.c.b16 %v1688, %v1680
      %v2313 = vpack.c.b16 %v1689, %v1681
      %v2314 = vpack.c.b16 %v1698, %v1690
      %v2315 = vpack.c.b16 %v1699, %v1691
      %v2316 = vpack.c.b16 %v1700, %v1692
      %v2317 = vpack.c.b16 %v1701, %v1693
      %v2318 = vpack.c.b16 %v1702, %v1694
      %v2319 = vpack.c.b16 %v1703, %v1695
      %v2320 = vpack.c.b16 %v1704, %v1696
      %v2321 = vpack.c.b16 %v1705, %v1697
      %v2322 = vpack.c.b16 %v1714, %v1706
      %v2323 = vpack.c.b16 %v1715, %v1707
      %v2324 = vpack.c.b16 %v1716, %v1708
      %v2325 = vpack.c.b16 %v1717, %v1709
      %v2326 = vpack.c.b16 %v1718, %v1710
      %v2327 = vpack.c.b16 %v1719, %v1711
      %v2328 = vpack.c.b16 %v1720, %v1712
      %v2329 = vpack.c.b16 %v1721, %v1713
      %v2330 = vpack.c.b16 %v1730, %v1722
      %v2331 = vpack.c.b16 %v1731, %v1723
      %v2332 = vpack.c.b16 %v1732, %v1724
      %v2333 = vpack.c.b16 %v1733, %v1725
      %v2334 = vpack.c.b16 %v1734, %v1726
      %v2335 = vpack.c.b16 %v1735, %v1727
      %v2336 = vpack.c.b16 %v1736, %v1728
      %v2337 = vpack.c.b16 %v1737, %v1729
      %v2338 = vpack.c.b16 %v1746, %v1738
      %v2339 = vpack.c.b16 %v1747, %v1739
      %v2340 = vpack.c.b16 %v1748, %v1740
      %v2341 = vpack.c.b16 %v1749, %v1741
      %v2342 = vpack.c.b16 %v1750, %v1742
      %v2343 = vpack.c.b16 %v1751, %v1743
      %v2344 = vpack.c.b16 %v1752, %v1744
      %v2345 = vpack.c.b16 %v1753, %v1745
      %v2346 = vpack.c.b16 %v1762, %v1754
      %v2347 = vpack.c.b16 %v1763, %v1755
      %v2348 = vpack.c.b16 %v1764, %v1756
      %v2349 = vpack.c.b16 %v1765, %v1757
      %v2350 = vpack.c.b16 %v1766, %v1758
      %v2351 = vpack.c.b16 %v1767, %v1759
      %v2352 = vpack.c.b16 %v1768, %v1760
      %v2353 = vpack.c.b16 %v1769, %v1761
      %v2354 = vpack.c.b16 %v1778, %v1770
      %v2355 = vpack.c.b16 %v1779, %v1771
      %v2356 = vpack.c.b16 %v1780, %v1772
      %v2357 = vpack.c.b16 %v1781, %v1773
      %v2358 = vpack.c.b16 %v1782, %v1774
      %v2359 = vpack.c.b16 %v1783, %v1775
      %v2360 = vpack.c.b16 %v1784, %v1776
      %v2361 = vpack.c.b16 %v1785, %v1777
      %v2362 = vpack.c.b16 %v1794, %v1786
      %v2363 = vpack.c.b16 %v1795, %v1787
      %v2364 = vpack.c.b16 %v1796, %v1788
      %v2365 = vpack.c.b16 %v1797, %v1789
      %v2366 = vpack.c.b16 %v1798, %v1790
      %v2367 = vpack.c.b16 %v1799, %v1791
      %v2368 = vpack.c.b16 %v1800, %v1792
      %v2369 = vpack.c.b16 %v1801, %v1793
      %v2370 = vpack.c.b16 %v1810, %v1802
      %v2371 = vpack.c.b16 %v1811, %v1803
      %v2372 = vpack.c.b16 %v1812, %v1804
      %v2373 = vpack.c.b16 %v1813, %v1805
      %v2374 = vpack.c.b16 %v1814, %v1806
      %v2375 = vpack.c.b16 %v1815, %v1807
      %v2376 = vpack.c.b16 %v1816, %v1808
      %v2377 = vpack.c.b16 %v1817, %v1809
      %v2378 = vpack.c.b16 %v1826, %v1818
      %v2379 = vpack.c.b16 %v1827, %v1819
      %v2380 = vpack.c.b16 %v1828, %v1820
      %v2381 = vpack.c.b16 %v1829, %v1821
      %v2382 = vpack.c.b16 %v1830, %v1822
      %v2383 = vpack.c.b16 %v1831, %v1823
      %v2384 = vpack.c.b16 %v1832, %v1824
      %v2385 = vpack.c.b16 %v1833, %v1825
      %v2386 = vpack.c.b16 %v1842, %v1834
      %v2387 = vpack.c.b16 %v1843, %v1835
      %v2388 = vpack.c.b16 %v1844, %v1836
      %v2389 = vpack.c.b16 %v1845, %v1837
      %v2390 = vpack.c.b16 %v1846, %v1838
      %v2391 = vpack.c.b16 %v1847, %v1839
      %v2392 = vpack.c.b16 %v1848, %v1840
      %v2393 = vpack.c.b16 %v1849, %v1841
      %v2394 = vpack.c.b16 %v1858, %v1850
      %v2395 = vpack.c.b16 %v1859, %v1851
      %v2396 = vpack.c.b16 %v1860, %v1852
      %v2397 = vpack.c.b16 %v1861, %v1853
      %v2398 = vpack.c.b16 %v1862, %v1854
      %v2399 = vpack.c.b16 %v1863, %v1855
      %v2400 = vpack.c.b16 %v1864, %v1856
      %v2401 = vpack.c.b16 %v1865, %v1857
      %v2402 = vpack.c.b16 %v1874, %v1866
      %v2403 = vpack.c.b16 %v1875, %v1867
      %v2404 = vpack.c.b16 %v1876, %v1868
      %v2405 = vpack.c.b16 %v1877, %v1869
      %v2406 = vpack.c.b16 %v1878, %v1870
      %v2407 = vpack.c.b16 %v1879, %v1871
      %v2408 = vpack.c.b16 %v1880, %v1872
      %v2409 = vpack.c.b16 %v1881, %v1873
      %v2410 = vpack.c.b16 %v1890, %v1882
      %v2411 = vpack.c.b16 %v1891, %v1883
      %v2412 = vpack.c.b16 %v1892, %v1884
      %v2413 = vpack.c.b16 %v1893, %v1885
      %v2414 = vpack.c.b16 %v1894, %v1886
      %v2415 = vpack.c.b16 %v1895, %v1887
      %v2416 = vpack.c.b16 %v1896, %v1888
      %v2417 = vpack.c.b16 %v1897, %v1889
      %v2418 = vpack.c.b16 %v1906, %v1898
      %v2419 = vpack.c.b16 %v1907, %v1899
      %v2420 = vpack.c.b16 %v1908, %v1900
      %v2421 = vpack.c.b16 %v1909, %v1901
      %v2422 = vpack.c.b16 %v1910, %v1902
      %v2423 = vpack.c.b16 %v1911, %v1903
      %v2424 = vpack.c.b16 %v1912, %v1904
      %v2425 = vpack.c.b16 %v1913, %v1905
      %v2426 = vpack.c.b16 %v1922, %v1914
      %v2427 = vpack.c.b16 %v1923, %v1915
      %v2428 = vpack.c.b16 %v1924, %v1916
      %v2429 = vpack.c.b16 %v1925, %v1917
      %v2430 = vpack.c.b16 %v1926, %v1918
      %v2431 = vpack.c.b16 %v1927, %v1919
      %v2432 = vpack.c.b16 %v1928, %v1920
      %v2433 = vpack.c.b16 %v1929, %v1921
      %v2434 = vpack.c.b16 %v1938, %v1930
      %v2435 = vpack.c.b16 %v1939, %v1931
      %v2436 = vpack.c.b16 %v1940, %v1932
      %v2437 = vpack.c.b16 %v1941, %v1933
      %v2438 = vpack.c.b16 %v1942, %v1934
      %v2439 = vpack.c.b16 %v1943, %v1935
      %v2440 = vpack.c.b16 %v1944, %v1936
      %v2441 = vpack.c.b16 %v1945, %v1937
      %v2442 = vpack.c.b16 %v1954, %v1946
      %v2443 = vpack.c.b16 %v1955, %v1947
      %v2444 = vpack.c.b16 %v1956, %v1948
      %v2445 = vpack.c.b16 %v1957, %v1949
      %v2446 = vpack.c.b16 %v1958, %v1950
      %v2447 = vpack.c.b16 %v1959, %v1951
      %v2448 = vpack.c.b16 %v1960, %v1952
      %v2449 = vpack.c.b16 %v1961, %v1953
      %v2450 = vpack.c.b16 %v1970, %v1962
      %v2451 = vpack.c.b16 %v1971, %v1963
      %v2452 = vpack.c.b16 %v1972, %v1964
      %v2453 = vpack.c.b16 %v1973, %v1965
      %v2454 = vpack.c.b16 %v1974, %v1966
      %v2455 = vpack.c.b16 %v1975, %v1967
      %v2456 = vpack.c.b16 %v1976, %v1968
      %v2457 = vpack.c.b16 %v1977, %v1969
      %v2458 = vpack.c.b16 %v1986, %v1978
      %v2459 = vpack.c.b16 %v1987, %v1979
      %v2460 = vpack.c.b16 %v1988, %v1980
      %v2461 = vpack.c.b16 %v1989, %v1981
      %v2462 = vpack.c.b16 %v1990, %v1982
      %v2463 = vpack.c.b16 %v1991, %v1983
      %v2464 = vpack.c.b16 %v1992, %v1984
      %v2465 = vpack.c.b16 %v1993, %v1985
      %v2466 = vpack.c.b16 %v2002, %v1994
      %v2467 = vpack.c.b16 %v2003, %v1995
      %v2468 = vpack.c.b16 %v2004, %v1996
      %v2469 = vpack.c.b16 %v2005, %v1997
      %v2470 = vpack.c.b16 %v2006, %v1998
      %v2471 = vpack.c.b16 %v2007, %v1999
      %v2472 = vpack.c.b16 %v2008, %v2000
      %v2473 = vpack.c.b16 %v2009, %v2001
      %v2474 = vpack.c.b16 %v2018, %v2010
      %v2475 = vpack.c.b16 %v2019, %v2011
      %v2476 = vpack.c.b16 %v2020, %v2012
      %v2477 = vpack.c.b16 %v2021, %v2013
      %v2478 = vpack.c.b16 %v2022, %v2014
      %v2479 = vpack.c.b16 %v2023, %v2015
      %v2480 = vpack.c.b16 %v2024, %v2016
      %v2481 = vpack.c.b16 %v2025, %v2017
      %v2482 = vpack.c.b16 %v2034, %v2026
      %v2483 = vpack.c.b16 %v2035, %v2027
      %v2484 = vpack.c.b16 %v2036, %v2028
      %v2485 = vpack.c.b16 %v2037, %v2029
      %v2486 = vpack.c.b16 %v2038, %v2030
      %v2487 = vpack.c.b16 %v2039, %v2031
      %v2488 = vpack.c.b16 %v2040, %v2032
      %v2489 = vpack.c.b16 %v2041, %v2033
      %2938 = vmatprep.subr.bf16.mxu0 %v2043
      %2939 = vmatpush1.bf16.msra.mxu0 %v2042
      %2940 = vmatprep.subr.bf16.mxu0 %v2051
      %2941 = vmatpush1.bf16.msra.mxu0 %v2050
      %2942 = vmatprep.subr.bf16.mxu0 %v2059
      %2943 = vmatpush1.bf16.msra.mxu0 %v2058
      %2944 = vmatprep.subr.bf16.mxu0 %v2067
      %2945 = vmatpush1.bf16.msra.mxu0 %v2066
      %2946 = vmatprep.subr.bf16.mxu0 %v2075
      %2947 = vmatpush1.bf16.msra.mxu0 %v2074
      %2948 = vmatprep.subr.bf16.mxu0 %v2083
      %2949 = vmatpush1.bf16.msra.mxu0 %v2082
      %2950 = vmatprep.subr.bf16.mxu0 %v2091
      %2951 = vmatpush1.bf16.msra.mxu0 %v2090
      %2952 = vmatprep.subr.bf16.mxu0 %v2099
      %2953 = vmatpush1.bf16.msra.mxu0 %v2098
      %2954 = vmatprep.subr.bf16.mxu0 %v2107
      %2955 = vmatpush1.bf16.msra.mxu0 %v2106
      %2956 = vmatprep.subr.bf16.mxu0 %v2115
      %2957 = vmatpush1.bf16.msra.mxu0 %v2114
      %2958 = vmatprep.subr.bf16.mxu0 %v2123
      %2959 = vmatpush1.bf16.msra.mxu0 %v2122
      %2960 = vmatprep.subr.bf16.mxu0 %v2131
      %2961 = vmatpush1.bf16.msra.mxu0 %v2130
      %2962 = vmatprep.subr.bf16.mxu0 %v2139
      %2963 = vmatpush1.bf16.msra.mxu0 %v2138
      %2964 = vmatprep.subr.bf16.mxu0 %v2147
      %2965 = vmatpush1.bf16.msra.mxu0 %v2146
      %2966 = vmatprep.subr.bf16.mxu0 %v2155
      %2967 = vmatpush1.bf16.msra.mxu0 %v2154
      %2968 = vmatprep.subr.bf16.mxu0 %v2163
      %2969 = vmatpush1.bf16.msra.mxu0 %v2162
      %2970 = vmatprep.mubr.bf16.mxu0 %v685
      %2971 = vmatmul.mubr.bf16.gmra.mrb[0].mxu0 %v684
      %v2972 = vpop.f32.mrb[0].mxu0
      %v2973 = vadd.f32 0.0, %v2972
      %v2974 = vpop.f32.mrb[0].mxu0
      %v2975 = vadd.f32 0.0, %v2974
      %v2976 = vpop.f32.mrb[0].mxu0
      %v2977 = vadd.f32 0.0, %v2976
      %v2978 = vpop.f32.mrb[0].mxu0
      %v2979 = vadd.f32 0.0, %v2978
      %2980 = vdwg.mxu0
      %2981 = vmatprep.subr.bf16.mxu0 %v2171
      %2982 = vmatpush1.bf16.msra.mxu0 %v2170
      %2983 = vmatprep.subr.bf16.mxu0 %v2179
      %2984 = vmatpush1.bf16.msra.mxu0 %v2178
      %2985 = vmatprep.subr.bf16.mxu0 %v2187
      %2986 = vmatpush1.bf16.msra.mxu0 %v2186
      %2987 = vmatprep.subr.bf16.mxu0 %v2195
      %2988 = vmatpush1.bf16.msra.mxu0 %v2194
      %2989 = vmatprep.subr.bf16.mxu0 %v2203
      %2990 = vmatpush1.bf16.msra.mxu0 %v2202
      %2991 = vmatprep.subr.bf16.mxu0 %v2211
      %2992 = vmatpush1.bf16.msra.mxu0 %v2210
      %2993 = vmatprep.subr.bf16.mxu0 %v2219
      %2994 = vmatpush1.bf16.msra.mxu0 %v2218
      %2995 = vmatprep.subr.bf16.mxu0 %v2227
      %2996 = vmatpush1.bf16.msra.mxu0 %v2226
      %2997 = vmatprep.subr.bf16.mxu0 %v2235
      %2998 = vmatpush1.bf16.msra.mxu0 %v2234
      %2999 = vmatprep.subr.bf16.mxu0 %v2243
      %3000 = vmatpush1.bf16.msra.mxu0 %v2242
      %3001 = vmatprep.subr.bf16.mxu0 %v2251
      %3002 = vmatpush1.bf16.msra.mxu0 %v2250
      %3003 = vmatprep.subr.bf16.mxu0 %v2259
      %3004 = vmatpush1.bf16.msra.mxu0 %v2258
      %3005 = vmatprep.subr.bf16.mxu0 %v2267
      %3006 = vmatpush1.bf16.msra.mxu0 %v2266
      %3007 = vmatprep.subr.bf16.mxu0 %v2275
      %3008 = vmatpush1.bf16.msra.mxu0 %v2274
      %3009 = vmatprep.subr.bf16.mxu0 %v2283
      %3010 = vmatpush1.bf16.msra.mxu0 %v2282
      %3011 = vmatprep.subr.bf16.mxu0 %v2291
      %3012 = vmatpush1.bf16.msra.mxu0 %v2290
      %3013 = vmatprep.mubr.bf16.mxu0 %v687
      %3014 = vmatmul.mubr.bf16.gmra.mrb[0].mxu0 %v686
      %v3015 = vpop.f32.mrb[0].mxu0
      %v3016 = vadd.f32 %v2973, %v3015
      %v3017 = vpop.f32.mrb[0].mxu0
      %v3018 = vadd.f32 %v2975, %v3017
      %v3019 = vpop.f32.mrb[0].mxu0
      %v3020 = vadd.f32 %v2977, %v3019
      %v3021 = vpop.f32.mrb[0].mxu0
      %v3022 = vadd.f32 %v2979, %v3021
      %3023 = vdwg.mxu0
      %3024 = vmatprep.subr.bf16.mxu0 %v2299
      %3025 = vmatpush1.bf16.msra.mxu0 %v2298
      %3026 = vmatprep.subr.bf16.mxu0 %v2307
      %3027 = vmatpush1.bf16.msra.mxu0 %v2306
      %3028 = vmatprep.subr.bf16.mxu0 %v2315
      %3029 = vmatpush1.bf16.msra.mxu0 %v2314
      %3030 = vmatprep.subr.bf16.mxu0 %v2323
      %3031 = vmatpush1.bf16.msra.mxu0 %v2322
      %3032 = vmatprep.subr.bf16.mxu0 %v2331
      %3033 = vmatpush1.bf16.msra.mxu0 %v2330
      %3034 = vmatprep.subr.bf16.mxu0 %v2339
      %3035 = vmatpush1.bf16.msra.mxu0 %v2338
      %3036 = vmatprep.subr.bf16.mxu0 %v2347
      %3037 = vmatpush1.bf16.msra.mxu0 %v2346
      %3038 = vmatprep.subr.bf16.mxu0 %v2355
      %3039 = vmatpush1.bf16.msra.mxu0 %v2354
      %3040 = vmatprep.subr.bf16.mxu0 %v2363
      %3041 = vmatpush1.bf16.msra.mxu0 %v2362
      %3042 = vmatprep.subr.bf16.mxu0 %v2371
      %3043 = vmatpush1.bf16.msra.mxu0 %v2370
      %3044 = vmatprep.subr.bf16.mxu0 %v2379
      %3045 = vmatpush1.bf16.msra.mxu0 %v2378
      %3046 = vmatprep.subr.bf16.mxu0 %v2387
      %3047 = vmatpush1.bf16.msra.mxu0 %v2386
      %3048 = vmatprep.subr.bf16.mxu0 %v2395
      %3049 = vmatpush1.bf16.msra.mxu0 %v2394
      %3050 = vmatprep.subr.bf16.mxu0 %v2403
      %3051 = vmatpush1.bf16.msra.mxu0 %v2402
      %3052 = vmatprep.subr.bf16.mxu0 %v2411
      %3053 = vmatpush1.bf16.msra.mxu0 %v2410
      %3054 = vmatprep.subr.bf16.mxu0 %v2419
      %3055 = vmatpush1.bf16.msra.mxu0 %v2418
      %3056 = vmatprep.mubr.bf16.mxu0 %v689
      %3057 = vmatmul.mubr.bf16.gmra.mrb[0].mxu0 %v688
      %v3058 = vpop.f32.mrb[0].mxu0
      %v3059 = vadd.f32 %v3016, %v3058
      %v3060 = vpop.f32.mrb[0].mxu0
      %v3061 = vadd.f32 %v3018, %v3060
      %v3062 = vpop.f32.mrb[0].mxu0
      %v3063 = vadd.f32 %v3020, %v3062
      %v3064 = vpop.f32.mrb[0].mxu0
      %v3065 = vadd.f32 %v3022, %v3064
      %3066 = vdwg.mxu0
      %3067 = vmatprep.subr.bf16.mxu0 %v2427
      %3068 = vmatpush1.bf16.msra.mxu0 %v2426
      %3069 = vmatprep.subr.bf16.mxu0 %v2435
      %3070 = vmatpush1.bf16.msra.mxu0 %v2434
      %3071 = vmatprep.subr.bf16.mxu0 %v2443
      %3072 = vmatpush1.bf16.msra.mxu0 %v2442
      %3073 = vmatprep.subr.bf16.mxu0 %v2451
      %3074 = vmatpush1.bf16.msra.mxu0 %v2450
      %3075 = vmatprep.subr.bf16.mxu0 %v2459
      %3076 = vmatpush1.bf16.msra.mxu0 %v2458
      %3077 = vmatprep.subr.bf16.mxu0 %v2467
      %3078 = vmatpush1.bf16.msra.mxu0 %v2466
      %3079 = vmatprep.subr.bf16.mxu0 %v2475
      %3080 = vmatpush1.bf16.msra.mxu0 %v2474
      %3081 = vmatprep.subr.bf16.mxu0 %v2483
      %3082 = vmatpush1.bf16.msra.mxu0 %v2482
      %3083 = vmatprep.subr.bf16.mxu0 0
      %3084 = vmatpush1.bf16.msra.mxu0 0
      %3085 = vmatprep.subr.bf16.mxu0 0
      %3086 = vmatpush1.bf16.msra.mxu0 0
      %3087 = vmatprep.subr.bf16.mxu0 0
      %3088 = vmatpush1.bf16.msra.mxu0 0
      %3089 = vmatprep.subr.bf16.mxu0 0
      %3090 = vmatpush1.bf16.msra.mxu0 0
      %3091 = vmatprep.subr.bf16.mxu0 0
      %3092 = vmatpush1.bf16.msra.mxu0 0
      %3093 = vmatprep.subr.bf16.mxu0 0
      %3094 = vmatpush1.bf16.msra.mxu0 0
      %3095 = vmatprep.subr.bf16.mxu0 0
      %3096 = vmatpush1.bf16.msra.mxu0 0
      %3097 = vmatprep.subr.bf16.mxu0 0
      %3098 = vmatpush1.bf16.msra.mxu0 0
      %3099 = vmatprep.mubr.bf16.mxu0 0
      %3100 = vmatmul.mubr.bf16.gmra.mrb[0].mxu0 %v690
      %v3101 = vpop.f32.mrb[0].mxu0
      %v3102 = vadd.f32 %v3059, %v3101
      %v3103 = vpop.f32.mrb[0].mxu0
      %v3104 = vadd.f32 %v3061, %v3103
      %v3105 = vpop.f32.mrb[0].mxu0
      %v3106 = vadd.f32 %v3063, %v3105
      %v3107 = vpop.f32.mrb[0].mxu0
      %v3108 = vadd.f32 %v3065, %v3107
      %3109 = vdwg.mxu0
      %3110 = vmatprep.subr.bf16.mxu0 %v2045
      %3111 = vmatpush1.bf16.msra.mxu0 %v2044
      %3112 = vmatprep.subr.bf16.mxu0 %v2053
      %3113 = vmatpush1.bf16.msra.mxu0 %v2052
      %3114 = vmatprep.subr.bf16.mxu0 %v2061
      %3115 = vmatpush1.bf16.msra.mxu0 %v2060
      %3116 = vmatprep.subr.bf16.mxu0 %v2069
      %3117 = vmatpush1.bf16.msra.mxu0 %v2068
      %3118 = vmatprep.subr.bf16.mxu0 %v2077
      %3119 = vmatpush1.bf16.msra.mxu0 %v2076
      %3120 = vmatprep.subr.bf16.mxu0 %v2085
      %3121 = vmatpush1.bf16.msra.mxu0 %v2084
      %3122 = vmatprep.subr.bf16.mxu0 %v2093
      %3123 = vmatpush1.bf16.msra.mxu0 %v2092
      %3124 = vmatprep.subr.bf16.mxu0 %v2101
      %3125 = vmatpush1.bf16.msra.mxu0 %v2100
      %3126 = vmatprep.subr.bf16.mxu0 %v2109
      %3127 = vmatpush1.bf16.msra.mxu0 %v2108
      %3128 = vmatprep.subr.bf16.mxu0 %v2117
      %3129 = vmatpush1.bf16.msra.mxu0 %v2116
      %3130 = vmatprep.subr.bf16.mxu0 %v2125
      %3131 = vmatpush1.bf16.msra.mxu0 %v2124
      %3132 = vmatprep.subr.bf16.mxu0 %v2133
      %3133 = vmatpush1.bf16.msra.mxu0 %v2132
      %3134 = vmatprep.subr.bf16.mxu0 %v2141
      %3135 = vmatpush1.bf16.msra.mxu0 %v2140
      %3136 = vmatprep.subr.bf16.mxu0 %v2149
      %3137 = vmatpush1.bf16.msra.mxu0 %v2148
      %3138 = vmatprep.subr.bf16.mxu0 %v2157
      %3139 = vmatpush1.bf16.msra.mxu0 %v2156
      %3140 = vmatprep.subr.bf16.mxu0 %v2165
      %3141 = vmatpush1.bf16.msra.mxu0 %v2164
      %3142 = vmatprep.mubr.bf16.mxu0 %v685
      %3143 = vmatmul.mubr.bf16.gmra.mrb[0].mxu0 %v684
      %v3144 = vpop.f32.mrb[0].mxu0
      %v3145 = vadd.f32 0.0, %v3144
      %v3146 = vpop.f32.mrb[0].mxu0
      %v3147 = vadd.f32 0.0, %v3146
      %v3148 = vpop.f32.mrb[0].mxu0
      %v3149 = vadd.f32 0.0, %v3148
      %v3150 = vpop.f32.mrb[0].mxu0
      %v3151 = vadd.f32 0.0, %v3150
      %3152 = vdwg.mxu0
      %3153 = vmatprep.subr.bf16.mxu0 %v2173
      %3154 = vmatpush1.bf16.msra.mxu0 %v2172
      %3155 = vmatprep.subr.bf16.mxu0 %v2181
      %3156 = vmatpush1.bf16.msra.mxu0 %v2180
      %3157 = vmatprep.subr.bf16.mxu0 %v2189
      %3158 = vmatpush1.bf16.msra.mxu0 %v2188
      %3159 = vmatprep.subr.bf16.mxu0 %v2197
      %3160 = vmatpush1.bf16.msra.mxu0 %v2196
      %3161 = vmatprep.subr.bf16.mxu0 %v2205
      %3162 = vmatpush1.bf16.msra.mxu0 %v2204
      %3163 = vmatprep.subr.bf16.mxu0 %v2213
      %3164 = vmatpush1.bf16.msra.mxu0 %v2212
      %3165 = vmatprep.subr.bf16.mxu0 %v2221
      %3166 = vmatpush1.bf16.msra.mxu0 %v2220
      %3167 = vmatprep.subr.bf16.mxu0 %v2229
      %3168 = vmatpush1.bf16.msra.mxu0 %v2228
      %3169 = vmatprep.subr.bf16.mxu0 %v2237
      %3170 = vmatpush1.bf16.msra.mxu0 %v2236
      %3171 = vmatprep.subr.bf16.mxu0 %v2245
      %3172 = vmatpush1.bf16.msra.mxu0 %v2244
      %3173 = vmatprep.subr.bf16.mxu0 %v2253
      %3174 = vmatpush1.bf16.msra.mxu0 %v2252
      %3175 = vmatprep.subr.bf16.mxu0 %v2261
      %3176 = vmatpush1.bf16.msra.mxu0 %v2260
      %3177 = vmatprep.subr.bf16.mxu0 %v2269
      %3178 = vmatpush1.bf16.msra.mxu0 %v2268
      %3179 = vmatprep.subr.bf16.mxu0 %v2277
      %3180 = vmatpush1.bf16.msra.mxu0 %v2276
      %3181 = vmatprep.subr.bf16.mxu0 %v2285
      %3182 = vmatpush1.bf16.msra.mxu0 %v2284
      %3183 = vmatprep.subr.bf16.mxu0 %v2293
      %3184 = vmatpush1.bf16.msra.mxu0 %v2292
      %3185 = vmatprep.mubr.bf16.mxu0 %v687
      %3186 = vmatmul.mubr.bf16.gmra.mrb[0].mxu0 %v686
      %v3187 = vpop.f32.mrb[0].mxu0
      %v3188 = vadd.f32 %v3145, %v3187
      %v3189 = vpop.f32.mrb[0].mxu0
      %v3190 = vadd.f32 %v3147, %v3189
      %v3191 = vpop.f32.mrb[0].mxu0
      %v3192 = vadd.f32 %v3149, %v3191
      %v3193 = vpop.f32.mrb[0].mxu0
      %v3194 = vadd.f32 %v3151, %v3193
      %3195 = vdwg.mxu0
      %3196 = vmatprep.subr.bf16.mxu0 %v2301
      %3197 = vmatpush1.bf16.msra.mxu0 %v2300
      %3198 = vmatprep.subr.bf16.mxu0 %v2309
      %3199 = vmatpush1.bf16.msra.mxu0 %v2308
      %3200 = vmatprep.subr.bf16.mxu0 %v2317
      %3201 = vmatpush1.bf16.msra.mxu0 %v2316
      %3202 = vmatprep.subr.bf16.mxu0 %v2325
      %3203 = vmatpush1.bf16.msra.mxu0 %v2324
      %3204 = vmatprep.subr.bf16.mxu0 %v2333
      %3205 = vmatpush1.bf16.msra.mxu0 %v2332
      %3206 = vmatprep.subr.bf16.mxu0 %v2341
      %3207 = vmatpush1.bf16.msra.mxu0 %v2340
      %3208 = vmatprep.subr.bf16.mxu0 %v2349
      %3209 = vmatpush1.bf16.msra.mxu0 %v2348
      %3210 = vmatprep.subr.bf16.mxu0 %v2357
      %3211 = vmatpush1.bf16.msra.mxu0 %v2356
      %3212 = vmatprep.subr.bf16.mxu0 %v2365
      %3213 = vmatpush1.bf16.msra.mxu0 %v2364
      %3214 = vmatprep.subr.bf16.mxu0 %v2373
      %3215 = vmatpush1.bf16.msra.mxu0 %v2372
      %3216 = vmatprep.subr.bf16.mxu0 %v2381
      %3217 = vmatpush1.bf16.msra.mxu0 %v2380
      %3218 = vmatprep.subr.bf16.mxu0 %v2389
      %3219 = vmatpush1.bf16.msra.mxu0 %v2388
      %3220 = vmatprep.subr.bf16.mxu0 %v2397
      %3221 = vmatpush1.bf16.msra.mxu0 %v2396
      %3222 = vmatprep.subr.bf16.mxu0 %v2405
      %3223 = vmatpush1.bf16.msra.mxu0 %v2404
      %3224 = vmatprep.subr.bf16.mxu0 %v2413
      %3225 = vmatpush1.bf16.msra.mxu0 %v2412
      %3226 = vmatprep.subr.bf16.mxu0 %v2421
      %3227 = vmatpush1.bf16.msra.mxu0 %v2420
      %3228 = vmatprep.mubr.bf16.mxu0 %v689
      %3229 = vmatmul.mubr.bf16.gmra.mrb[0].mxu0 %v688
      %v3230 = vpop.f32.mrb[0].mxu0
      %v3231 = vadd.f32 %v3188, %v3230
      %v3232 = vpop.f32.mrb[0].mxu0
      %v3233 = vadd.f32 %v3190, %v3232
      %v3234 = vpop.f32.mrb[0].mxu0
      %v3235 = vadd.f32 %v3192, %v3234
      %v3236 = vpop.f32.mrb[0].mxu0
      %v3237 = vadd.f32 %v3194, %v3236
      %3238 = vdwg.mxu0
      %3239 = vmatprep.subr.bf16.mxu0 %v2429
      %3240 = vmatpush1.bf16.msra.mxu0 %v2428
      %3241 = vmatprep.subr.bf16.mxu0 %v2437
      %3242 = vmatpush1.bf16.msra.mxu0 %v2436
      %3243 = vmatprep.subr.bf16.mxu0 %v2445
      %3244 = vmatpush1.bf16.msra.mxu0 %v2444
      %3245 = vmatprep.subr.bf16.mxu0 %v2453
      %3246 = vmatpush1.bf16.msra.mxu0 %v2452
      %3247 = vmatprep.subr.bf16.mxu0 %v2461
      %3248 = vmatpush1.bf16.msra.mxu0 %v2460
      %3249 = vmatprep.subr.bf16.mxu0 %v2469
      %3250 = vmatpush1.bf16.msra.mxu0 %v2468
      %3251 = vmatprep.subr.bf16.mxu0 %v2477
      %3252 = vmatpush1.bf16.msra.mxu0 %v2476
      %3253 = vmatprep.subr.bf16.mxu0 %v2485
      %3254 = vmatpush1.bf16.msra.mxu0 %v2484
      %3255 = vmatprep.subr.bf16.mxu0 0
      %3256 = vmatpush1.bf16.msra.mxu0 0
      %3257 = vmatprep.subr.bf16.mxu0 0
      %3258 = vmatpush1.bf16.msra.mxu0 0
      %3259 = vmatprep.subr.bf16.mxu0 0
      %3260 = vmatpush1.bf16.msra.mxu0 0
      %3261 = vmatprep.subr.bf16.mxu0 0
      %3262 = vmatpush1.bf16.msra.mxu0 0
      %3263 = vmatprep.subr.bf16.mxu0 0
      %3264 = vmatpush1.bf16.msra.mxu0 0
      %3265 = vmatprep.subr.bf16.mxu0 0
      %3266 = vmatpush1.bf16.msra.mxu0 0
      %3267 = vmatprep.subr.bf16.mxu0 0
      %3268 = vmatpush1.bf16.msra.mxu0 0
      %3269 = vmatprep.subr.bf16.mxu0 0
      %3270 = vmatpush1.bf16.msra.mxu0 0
      %3271 = vmatprep.mubr.bf16.mxu0 0
      %3272 = vmatmul.mubr.bf16.gmra.mrb[0].mxu0 %v690
      %v3273 = vpop.f32.mrb[0].mxu0
      %v3274 = vadd.f32 %v3231, %v3273
      %v3275 = vpop.f32.mrb[0].mxu0
      %v3276 = vadd.f32 %v3233, %v3275
      %v3277 = vpop.f32.mrb[0].mxu0
      %v3278 = vadd.f32 %v3235, %v3277
      %v3279 = vpop.f32.mrb[0].mxu0
      %v3280 = vadd.f32 %v3237, %v3279
      %3281 = vdwg.mxu0
      %3282 = vmatprep.subr.bf16.mxu0 %v2047
      %3283 = vmatpush1.bf16.msra.mxu0 %v2046
      %3284 = vmatprep.subr.bf16.mxu0 %v2055
      %3285 = vmatpush1.bf16.msra.mxu0 %v2054
      %3286 = vmatprep.subr.bf16.mxu0 %v2063
      %3287 = vmatpush1.bf16.msra.mxu0 %v2062
      %3288 = vmatprep.subr.bf16.mxu0 %v2071
      %3289 = vmatpush1.bf16.msra.mxu0 %v2070
      %3290 = vmatprep.subr.bf16.mxu0 %v2079
      %3291 = vmatpush1.bf16.msra.mxu0 %v2078
      %3292 = vmatprep.subr.bf16.mxu0 %v2087
      %3293 = vmatpush1.bf16.msra.mxu0 %v2086
      %3294 = vmatprep.subr.bf16.mxu0 %v2095
      %3295 = vmatpush1.bf16.msra.mxu0 %v2094
      %3296 = vmatprep.subr.bf16.mxu0 %v2103
      %3297 = vmatpush1.bf16.msra.mxu0 %v2102
      %3298 = vmatprep.subr.bf16.mxu0 %v2111
      %3299 = vmatpush1.bf16.msra.mxu0 %v2110
      %3300 = vmatprep.subr.bf16.mxu0 %v2119
      %3301 = vmatpush1.bf16.msra.mxu0 %v2118
      %3302 = vmatprep.subr.bf16.mxu0 %v2127
      %3303 = vmatpush1.bf16.msra.mxu0 %v2126
      %3304 = vmatprep.subr.bf16.mxu0 %v2135
      %3305 = vmatpush1.bf16.msra.mxu0 %v2134
      %3306 = vmatprep.subr.bf16.mxu0 %v2143
      %3307 = vmatpush1.bf16.msra.mxu0 %v2142
      %3308 = vmatprep.subr.bf16.mxu0 %v2151
      %3309 = vmatpush1.bf16.msra.mxu0 %v2150
      %3310 = vmatprep.subr.bf16.mxu0 %v2159
      %3311 = vmatpush1.bf16.msra.mxu0 %v2158
      %3312 = vmatprep.subr.bf16.mxu0 %v2167
      %3313 = vmatpush1.bf16.msra.mxu0 %v2166
      %3314 = vmatprep.mubr.bf16.mxu0 %v685
      %3315 = vmatmul.mubr.bf16.gmra.mrb[0].mxu0 %v684
      %v3316 = vpop.f32.mrb[0].mxu0
      %v3317 = vadd.f32 0.0, %v3316
      %v3318 = vpop.f32.mrb[0].mxu0
      %v3319 = vadd.f32 0.0, %v3318
      %v3320 = vpop.f32.mrb[0].mxu0
      %v3321 = vadd.f32 0.0, %v3320
      %v3322 = vpop.f32.mrb[0].mxu0
      %v3323 = vadd.f32 0.0, %v3322
      %3324 = vdwg.mxu0
      %3325 = vmatprep.subr.bf16.mxu0 %v2175
      %3326 = vmatpush1.bf16.msra.mxu0 %v2174
      %3327 = vmatprep.subr.bf16.mxu0 %v2183
      %3328 = vmatpush1.bf16.msra.mxu0 %v2182
      %3329 = vmatprep.subr.bf16.mxu0 %v2191
      %3330 = vmatpush1.bf16.msra.mxu0 %v2190
      %3331 = vmatprep.subr.bf16.mxu0 %v2199
      %3332 = vmatpush1.bf16.msra.mxu0 %v2198
      %3333 = vmatprep.subr.bf16.mxu0 %v2207
      %3334 = vmatpush1.bf16.msra.mxu0 %v2206
      %3335 = vmatprep.subr.bf16.mxu0 %v2215
      %3336 = vmatpush1.bf16.msra.mxu0 %v2214
      %3337 = vmatprep.subr.bf16.mxu0 %v2223
      %3338 = vmatpush1.bf16.msra.mxu0 %v2222
      %3339 = vmatprep.subr.bf16.mxu0 %v2231
      %3340 = vmatpush1.bf16.msra.mxu0 %v2230
      %3341 = vmatprep.subr.bf16.mxu0 %v2239
      %3342 = vmatpush1.bf16.msra.mxu0 %v2238
      %3343 = vmatprep.subr.bf16.mxu0 %v2247
      %3344 = vmatpush1.bf16.msra.mxu0 %v2246
      %3345 = vmatprep.subr.bf16.mxu0 %v2255
      %3346 = vmatpush1.bf16.msra.mxu0 %v2254
      %3347 = vmatprep.subr.bf16.mxu0 %v2263
      %3348 = vmatpush1.bf16.msra.mxu0 %v2262
      %3349 = vmatprep.subr.bf16.mxu0 %v2271
      %3350 = vmatpush1.bf16.msra.mxu0 %v2270
      %3351 = vmatprep.subr.bf16.mxu0 %v2279
      %3352 = vmatpush1.bf16.msra.mxu0 %v2278
      %3353 = vmatprep.subr.bf16.mxu0 %v2287
      %3354 = vmatpush1.bf16.msra.mxu0 %v2286
      %3355 = vmatprep.subr.bf16.mxu0 %v2295
      %3356 = vmatpush1.bf16.msra.mxu0 %v2294
      %3357 = vmatprep.mubr.bf16.mxu0 %v687
      %3358 = vmatmul.mubr.bf16.gmra.mrb[0].mxu0 %v686
      %v3359 = vpop.f32.mrb[0].mxu0
      %v3360 = vadd.f32 %v3317, %v3359
      %v3361 = vpop.f32.mrb[0].mxu0
      %v3362 = vadd.f32 %v3319, %v3361
      %v3363 = vpop.f32.mrb[0].mxu0
      %v3364 = vadd.f32 %v3321, %v3363
      %v3365 = vpop.f32.mrb[0].mxu0
      %v3366 = vadd.f32 %v3323, %v3365
      %3367 = vdwg.mxu0
      %3368 = vmatprep.subr.bf16.mxu0 %v2303
      %3369 = vmatpush1.bf16.msra.mxu0 %v2302
      %3370 = vmatprep.subr.bf16.mxu0 %v2311
      %3371 = vmatpush1.bf16.msra.mxu0 %v2310
      %3372 = vmatprep.subr.bf16.mxu0 %v2319
      %3373 = vmatpush1.bf16.msra.mxu0 %v2318
      %3374 = vmatprep.subr.bf16.mxu0 %v2327
      %3375 = vmatpush1.bf16.msra.mxu0 %v2326
      %3376 = vmatprep.subr.bf16.mxu0 %v2335
      %3377 = vmatpush1.bf16.msra.mxu0 %v2334
      %3378 = vmatprep.subr.bf16.mxu0 %v2343
      %3379 = vmatpush1.bf16.msra.mxu0 %v2342
      %3380 = vmatprep.subr.bf16.mxu0 %v2351
      %3381 = vmatpush1.bf16.msra.mxu0 %v2350
      %3382 = vmatprep.subr.bf16.mxu0 %v2359
      %3383 = vmatpush1.bf16.msra.mxu0 %v2358
      %3384 = vmatprep.subr.bf16.mxu0 %v2367
      %3385 = vmatpush1.bf16.msra.mxu0 %v2366
      %3386 = vmatprep.subr.bf16.mxu0 %v2375
      %3387 = vmatpush1.bf16.msra.mxu0 %v2374
      %3388 = vmatprep.subr.bf16.mxu0 %v2383
      %3389 = vmatpush1.bf16.msra.mxu0 %v2382
      %3390 = vmatprep.subr.bf16.mxu0 %v2391
      %3391 = vmatpush1.bf16.msra.mxu0 %v2390
      %3392 = vmatprep.subr.bf16.mxu0 %v2399
      %3393 = vmatpush1.bf16.msra.mxu0 %v2398
      %3394 = vmatprep.subr.bf16.mxu0 %v2407
      %3395 = vmatpush1.bf16.msra.mxu0 %v2406
      %3396 = vmatprep.subr.bf16.mxu0 %v2415
      %3397 = vmatpush1.bf16.msra.mxu0 %v2414
      %3398 = vmatprep.subr.bf16.mxu0 %v2423
      %3399 = vmatpush1.bf16.msra.mxu0 %v2422
      %3400 = vmatprep.mubr.bf16.mxu0 %v689
      %3401 = vmatmul.mubr.bf16.gmra.mrb[0].mxu0 %v688
      %v3402 = vpop.f32.mrb[0].mxu0
      %v3403 = vadd.f32 %v3360, %v3402
      %v3404 = vpop.f32.mrb[0].mxu0
      %v3405 = vadd.f32 %v3362, %v3404
      %v3406 = vpop.f32.mrb[0].mxu0
      %v3407 = vadd.f32 %v3364, %v3406
      %v3408 = vpop.f32.mrb[0].mxu0
      %v3409 = vadd.f32 %v3366, %v3408
      %3410 = vdwg.mxu0
      %3411 = vmatprep.subr.bf16.mxu0 %v2431
      %3412 = vmatpush1.bf16.msra.mxu0 %v2430
      %3413 = vmatprep.subr.bf16.mxu0 %v2439
      %3414 = vmatpush1.bf16.msra.mxu0 %v2438
      %3415 = vmatprep.subr.bf16.mxu0 %v2447
      %3416 = vmatpush1.bf16.msra.mxu0 %v2446
      %3417 = vmatprep.subr.bf16.mxu0 %v2455
      %3418 = vmatpush1.bf16.msra.mxu0 %v2454
      %3419 = vmatprep.subr.bf16.mxu0 %v2463
      %3420 = vmatpush1.bf16.msra.mxu0 %v2462
      %3421 = vmatprep.subr.bf16.mxu0 %v2471
      %3422 = vmatpush1.bf16.msra.mxu0 %v2470
      %3423 = vmatprep.subr.bf16.mxu0 %v2479
      %3424 = vmatpush1.bf16.msra.mxu0 %v2478
      %3425 = vmatprep.subr.bf16.mxu0 %v2487
      %3426 = vmatpush1.bf16.msra.mxu0 %v2486
      %3427 = vmatprep.subr.bf16.mxu0 0
      %3428 = vmatpush1.bf16.msra.mxu0 0
      %3429 = vmatprep.subr.bf16.mxu0 0
      %3430 = vmatpush1.bf16.msra.mxu0 0
      %3431 = vmatprep.subr.bf16.mxu0 0
      %3432 = vmatpush1.bf16.msra.mxu0 0
      %3433 = vmatprep.subr.bf16.mxu0 0
      %3434 = vmatpush1.bf16.msra.mxu0 0
      %3435 = vmatprep.subr.bf16.mxu0 0
      %3436 = vmatpush1.bf16.msra.mxu0 0
      %3437 = vmatprep.subr.bf16.mxu0 0
      %3438 = vmatpush1.bf16.msra.mxu0 0
      %3439 = vmatprep.subr.bf16.mxu0 0
      %3440 = vmatpush1.bf16.msra.mxu0 0
      %3441 = vmatprep.subr.bf16.mxu0 0
      %3442 = vmatpush1.bf16.msra.mxu0 0
      %3443 = vmatprep.mubr.bf16.mxu0 0
      %3444 = vmatmul.mubr.bf16.gmra.mrb[0].mxu0 %v690
      %v3445 = vpop.f32.mrb[0].mxu0
      %v3446 = vadd.f32 %v3403, %v3445
      %v3447 = vpop.f32.mrb[0].mxu0
      %v3448 = vadd.f32 %v3405, %v3447
      %v3449 = vpop.f32.mrb[0].mxu0
      %v3450 = vadd.f32 %v3407, %v3449
      %v3451 = vpop.f32.mrb[0].mxu0
      %v3452 = vadd.f32 %v3409, %v3451
      %3453 = vdwg.mxu0
      %3454 = vmatprep.subr.bf16.mxu0 %v2049
      %3455 = vmatpush1.bf16.msra.mxu0 %v2048
      %3456 = vmatprep.subr.bf16.mxu0 %v2057
      %3457 = vmatpush1.bf16.msra.mxu0 %v2056
      %3458 = vmatprep.subr.bf16.mxu0 %v2065
      %3459 = vmatpush1.bf16.msra.mxu0 %v2064
      %3460 = vmatprep.subr.bf16.mxu0 %v2073
      %3461 = vmatpush1.bf16.msra.mxu0 %v2072
      %3462 = vmatprep.subr.bf16.mxu0 %v2081
      %3463 = vmatpush1.bf16.msra.mxu0 %v2080
      %3464 = vmatprep.subr.bf16.mxu0 %v2089
      %3465 = vmatpush1.bf16.msra.mxu0 %v2088
      %3466 = vmatprep.subr.bf16.mxu0 %v2097
      %3467 = vmatpush1.bf16.msra.mxu0 %v2096
      %3468 = vmatprep.subr.bf16.mxu0 %v2105
      %3469 = vmatpush1.bf16.msra.mxu0 %v2104
      %3470 = vmatprep.subr.bf16.mxu0 %v2113
      %3471 = vmatpush1.bf16.msra.mxu0 %v2112
      %3472 = vmatprep.subr.bf16.mxu0 %v2121
      %3473 = vmatpush1.bf16.msra.mxu0 %v2120
      %3474 = vmatprep.subr.bf16.mxu0 %v2129
      %3475 = vmatpush1.bf16.msra.mxu0 %v2128
      %3476 = vmatprep.subr.bf16.mxu0 %v2137
      %3477 = vmatpush1.bf16.msra.mxu0 %v2136
      %3478 = vmatprep.subr.bf16.mxu0 %v2145
      %3479 = vmatpush1.bf16.msra.mxu0 %v2144
      %3480 = vmatprep.subr.bf16.mxu0 %v2153
      %3481 = vmatpush1.bf16.msra.mxu0 %v2152
      %3482 = vmatprep.subr.bf16.mxu0 %v2161
      %3483 = vmatpush1.bf16.msra.mxu0 %v2160
      %3484 = vmatprep.subr.bf16.mxu0 %v2169
      %3485 = vmatpush1.bf16.msra.mxu0 %v2168
      %3486 = vmatprep.mubr.bf16.mxu0 %v685
      %3487 = vmatmul.mubr.bf16.gmra.mrb[0].mxu0 %v684
      %v3488 = vpop.f32.mrb[0].mxu0
      %v3489 = vadd.f32 0.0, %v3488
      %v3490 = vpop.f32.mrb[0].mxu0
      %v3491 = vadd.f32 0.0, %v3490
      %v3492 = vpop.f32.mrb[0].mxu0
      %v3493 = vadd.f32 0.0, %v3492
      %v3494 = vpop.f32.mrb[0].mxu0
      %v3495 = vadd.f32 0.0, %v3494
      %3496 = vdwg.mxu0
      %3497 = vmatprep.subr.bf16.mxu0 %v2177
      %3498 = vmatpush1.bf16.msra.mxu0 %v2176
      %3499 = vmatprep.subr.bf16.mxu0 %v2185
      %3500 = vmatpush1.bf16.msra.mxu0 %v2184
      %3501 = vmatprep.subr.bf16.mxu0 %v2193
      %3502 = vmatpush1.bf16.msra.mxu0 %v2192
      %3503 = vmatprep.subr.bf16.mxu0 %v2201
      %3504 = vmatpush1.bf16.msra.mxu0 %v2200
      %3505 = vmatprep.subr.bf16.mxu0 %v2209
      %3506 = vmatpush1.bf16.msra.mxu0 %v2208
      %3507 = vmatprep.subr.bf16.mxu0 %v2217
      %3508 = vmatpush1.bf16.msra.mxu0 %v2216
      %3509 = vmatprep.subr.bf16.mxu0 %v2225
      %3510 = vmatpush1.bf16.msra.mxu0 %v2224
      %3511 = vmatprep.subr.bf16.mxu0 %v2233
      %3512 = vmatpush1.bf16.msra.mxu0 %v2232
      %3513 = vmatprep.subr.bf16.mxu0 %v2241
      %3514 = vmatpush1.bf16.msra.mxu0 %v2240
      %3515 = vmatprep.subr.bf16.mxu0 %v2249
      %3516 = vmatpush1.bf16.msra.mxu0 %v2248
      %3517 = vmatprep.subr.bf16.mxu0 %v2257
      %3518 = vmatpush1.bf16.msra.mxu0 %v2256
      %3519 = vmatprep.subr.bf16.mxu0 %v2265
      %3520 = vmatpush1.bf16.msra.mxu0 %v2264
      %3521 = vmatprep.subr.bf16.mxu0 %v2273
      %3522 = vmatpush1.bf16.msra.mxu0 %v2272
      %3523 = vmatprep.subr.bf16.mxu0 %v2281
      %3524 = vmatpush1.bf16.msra.mxu0 %v2280
      %3525 = vmatprep.subr.bf16.mxu0 %v2289
      %3526 = vmatpush1.bf16.msra.mxu0 %v2288
      %3527 = vmatprep.subr.bf16.mxu0 %v2297
      %3528 = vmatpush1.bf16.msra.mxu0 %v2296
      %3529 = vmatprep.mubr.bf16.mxu0 %v687
      %3530 = vmatmul.mubr.bf16.gmra.mrb[0].mxu0 %v686
      %v3531 = vpop.f32.mrb[0].mxu0
      %v3532 = vadd.f32 %v3489, %v3531
      %v3533 = vpop.f32.mrb[0].mxu0
      %v3534 = vadd.f32 %v3491, %v3533
      %v3535 = vpop.f32.mrb[0].mxu0
      %v3536 = vadd.f32 %v3493, %v3535
      %v3537 = vpop.f32.mrb[0].mxu0
      %v3538 = vadd.f32 %v3495, %v3537
      %3539 = vdwg.mxu0
      %3540 = vmatprep.subr.bf16.mxu0 %v2305
      %3541 = vmatpush1.bf16.msra.mxu0 %v2304
      %3542 = vmatprep.subr.bf16.mxu0 %v2313
      %3543 = vmatpush1.bf16.msra.mxu0 %v2312
      %3544 = vmatprep.subr.bf16.mxu0 %v2321
      %3545 = vmatpush1.bf16.msra.mxu0 %v2320
      %3546 = vmatprep.subr.bf16.mxu0 %v2329
      %3547 = vmatpush1.bf16.msra.mxu0 %v2328
      %3548 = vmatprep.subr.bf16.mxu0 %v2337
      %3549 = vmatpush1.bf16.msra.mxu0 %v2336
      %3550 = vmatprep.subr.bf16.mxu0 %v2345
      %3551 = vmatpush1.bf16.msra.mxu0 %v2344
      %3552 = vmatprep.subr.bf16.mxu0 %v2353
      %3553 = vmatpush1.bf16.msra.mxu0 %v2352
      %3554 = vmatprep.subr.bf16.mxu0 %v2361
      %3555 = vmatpush1.bf16.msra.mxu0 %v2360
      %3556 = vmatprep.subr.bf16.mxu0 %v2369
      %3557 = vmatpush1.bf16.msra.mxu0 %v2368
      %3558 = vmatprep.subr.bf16.mxu0 %v2377
      %3559 = vmatpush1.bf16.msra.mxu0 %v2376
      %3560 = vmatprep.subr.bf16.mxu0 %v2385
      %3561 = vmatpush1.bf16.msra.mxu0 %v2384
      %3562 = vmatprep.subr.bf16.mxu0 %v2393
      %3563 = vmatpush1.bf16.msra.mxu0 %v2392
      %3564 = vmatprep.subr.bf16.mxu0 %v2401
      %3565 = vmatpush1.bf16.msra.mxu0 %v2400
      %3566 = vmatprep.subr.bf16.mxu0 %v2409
      %3567 = vmatpush1.bf16.msra.mxu0 %v2408
      %3568 = vmatprep.subr.bf16.mxu0 %v2417
      %3569 = vmatpush1.bf16.msra.mxu0 %v2416
      %3570 = vmatprep.subr.bf16.mxu0 %v2425
      %3571 = vmatpush1.bf16.msra.mxu0 %v2424
      %3572 = vmatprep.mubr.bf16.mxu0 %v689
      %3573 = vmatmul.mubr.bf16.gmra.mrb[0].mxu0 %v688
      %v3574 = vpop.f32.mrb[0].mxu0
      %v3575 = vadd.f32 %v3532, %v3574
      %v3576 = vpop.f32.mrb[0].mxu0
      %v3577 = vadd.f32 %v3534, %v3576
      %v3578 = vpop.f32.mrb[0].mxu0
      %v3579 = vadd.f32 %v3536, %v3578
      %v3580 = vpop.f32.mrb[0].mxu0
      %v3581 = vadd.f32 %v3538, %v3580
      %3582 = vdwg.mxu0
      %3583 = vmatprep.subr.bf16.mxu0 %v2433
      %3584 = vmatpush1.bf16.msra.mxu0 %v2432
      %3585 = vmatprep.subr.bf16.mxu0 %v2441
      %3586 = vmatpush1.bf16.msra.mxu0 %v2440
      %3587 = vmatprep.subr.bf16.mxu0 %v2449
      %3588 = vmatpush1.bf16.msra.mxu0 %v2448
      %3589 = vmatprep.subr.bf16.mxu0 %v2457
      %3590 = vmatpush1.bf16.msra.mxu0 %v2456
      %3591 = vmatprep.subr.bf16.mxu0 %v2465
      %3592 = vmatpush1.bf16.msra.mxu0 %v2464
      %3593 = vmatprep.subr.bf16.mxu0 %v2473
      %3594 = vmatpush1.bf16.msra.mxu0 %v2472
      %3595 = vmatprep.subr.bf16.mxu0 %v2481
      %3596 = vmatpush1.bf16.msra.mxu0 %v2480
      %3597 = vmatprep.subr.bf16.mxu0 %v2489
      %3598 = vmatpush1.bf16.msra.mxu0 %v2488
      %3599 = vmatprep.subr.bf16.mxu0 0
      %3600 = vmatpush1.bf16.msra.mxu0 0
      %3601 = vmatprep.subr.bf16.mxu0 0
      %3602 = vmatpush1.bf16.msra.mxu0 0
      %3603 = vmatprep.subr.bf16.mxu0 0
      %3604 = vmatpush1.bf16.msra.mxu0 0
      %3605 = vmatprep.subr.bf16.mxu0 0
      %3606 = vmatpush1.bf16.msra.mxu0 0
      %3607 = vmatprep.subr.bf16.mxu0 0
      %3608 = vmatpush1.bf16.msra.mxu0 0
      %3609 = vmatprep.subr.bf16.mxu0 0
      %3610 = vmatpush1.bf16.msra.mxu0 0
      %3611 = vmatprep.subr.bf16.mxu0 0
      %3612 = vmatpush1.bf16.msra.mxu0 0
      %3613 = vmatprep.subr.bf16.mxu0 0
      %3614 = vmatpush1.bf16.msra.mxu0 0
      %3615 = vmatprep.mubr.bf16.mxu0 0
      %3616 = vmatmul.mubr.bf16.gmra.mrb[0].mxu0 %v690
      %v3617 = vpop.f32.mrb[0].mxu0
      %v3618 = vadd.f32 %v3575, %v3617
      %v3619 = vpop.f32.mrb[0].mxu0
      %v3620 = vadd.f32 %v3577, %v3619
      %v3621 = vpop.f32.mrb[0].mxu0
      %v3622 = vadd.f32 %v3579, %v3621
      %v3623 = vpop.f32.mrb[0].mxu0
      %v3624 = vadd.f32 %v3581, %v3623
      %3625 = vdwg.mxu0
      %v3626 = vmul.f32 %v3102, %v3102
      %v3627 = vmul.f32 %v3104, %v3104
      %v3628 = vmul.f32 %v3274, %v3274
      %v3629 = vmul.f32 %v3276, %v3276
      %v3630 = vmul.f32 %v3106, %v3106
      %v3631 = vmul.f32 %v3108, %v3108
      %v3632 = vmul.f32 %v3278, %v3278
      %v3633 = vmul.f32 %v3280, %v3280
      %v3634 = vmul.f32 %v3446, %v3446
      %v3635 = vmul.f32 %v3448, %v3448
      %v3636 = vmul.f32 %v3618, %v3618
      %v3637 = vmul.f32 %v3620, %v3620
      %v3638 = vmul.f32 %v3450, %v3450
      %v3639 = vmul.f32 %v3452, %v3452
      %v3640 = vmul.f32 %v3622, %v3622
      %v3641 = vmul.f32 %v3624, %v3624
      %v3642 = vadd.f32 %v3626, %v3634
      %v3643 = vadd.f32 %v3627, %v3635
      %v3644 = vadd.f32 %v3628, %v3636
      %v3645 = vadd.f32 %v3629, %v3637
      %v3646 = vadd.f32 %v3630, %v3638
      %v3647 = vadd.f32 %v3631, %v3639
      %v3648 = vadd.f32 %v3632, %v3640
      %v3649 = vadd.f32 %v3633, %v3641
      %v3650 = vrsqrt.pop %v3642
      %v3651 = vmul.f32 %v3642, %v3650
      %vm3652 = vcmp.eq.f32.partialorder %v3642, inf
      %v3653 = vsel %vm3652, %v3642, %v3651
      %vm3654 = vcmp.eq.f32.partialorder %v3642, 0.0
      %v3655 = vand.u32 %v3642, 2147483648
      %v3656 = vsel %vm3654, %v3655, %v3653
      %v3657 = vrsqrt.pop %v3643
      %v3658 = vmul.f32 %v3643, %v3657
      %vm3659 = vcmp.eq.f32.partialorder %v3643, inf
      %v3660 = vsel %vm3659, %v3643, %v3658
      %vm3661 = vcmp.eq.f32.partialorder %v3643, 0.0
      %v3662 = vand.u32 %v3643, 2147483648
      %v3663 = vsel %vm3661, %v3662, %v3660
      %v3664 = vrsqrt.pop %v3644
      %v3665 = vmul.f32 %v3644, %v3664
      %vm3666 = vcmp.eq.f32.partialorder %v3644, inf
      %v3667 = vsel %vm3666, %v3644, %v3665
      %vm3668 = vcmp.eq.f32.partialorder %v3644, 0.0
      %v3669 = vand.u32 %v3644, 2147483648
      %v3670 = vsel %vm3668, %v3669, %v3667
      %v3671 = vrsqrt.pop %v3645
      %v3672 = vmul.f32 %v3645, %v3671
      %vm3673 = vcmp.eq.f32.partialorder %v3645, inf
      %v3674 = vsel %vm3673, %v3645, %v3672
      %vm3675 = vcmp.eq.f32.partialorder %v3645, 0.0
      %v3676 = vand.u32 %v3645, 2147483648
      %v3677 = vsel %vm3675, %v3676, %v3674
      %v3678 = vrsqrt.pop %v3646
      %v3679 = vmul.f32 %v3646, %v3678
      %vm3680 = vcmp.eq.f32.partialorder %v3646, inf
      %v3681 = vsel %vm3680, %v3646, %v3679
      %vm3682 = vcmp.eq.f32.partialorder %v3646, 0.0
      %v3683 = vand.u32 %v3646, 2147483648
      %v3684 = vsel %vm3682, %v3683, %v3681
      %v3685 = vrsqrt.pop %v3647
      %v3686 = vmul.f32 %v3647, %v3685
      %vm3687 = vcmp.eq.f32.partialorder %v3647, inf
      %v3688 = vsel %vm3687, %v3647, %v3686
      %vm3689 = vcmp.eq.f32.partialorder %v3647, 0.0
      %v3690 = vand.u32 %v3647, 2147483648
      %v3691 = vsel %vm3689, %v3690, %v3688
      %v3692 = vrsqrt.pop %v3648
      %v3693 = vmul.f32 %v3648, %v3692
      %vm3694 = vcmp.eq.f32.partialorder %v3648, inf
      %v3695 = vsel %vm3694, %v3648, %v3693
      %vm3696 = vcmp.eq.f32.partialorder %v3648, 0.0
      %v3697 = vand.u32 %v3648, 2147483648
      %v3698 = vsel %vm3696, %v3697, %v3695
      %v3699 = vrsqrt.pop %v3649
      %v3700 = vmul.f32 %v3649, %v3699
      %vm3701 = vcmp.eq.f32.partialorder %v3649, inf
      %v3702 = vsel %vm3701, %v3649, %v3700
      %vm3703 = vcmp.eq.f32.partialorder %v3649, 0.0
      %v3704 = vand.u32 %v3649, 2147483648
      %v3705 = vsel %vm3703, %v3704, %v3702
      %v3706 = vpack.c.bf16 %v3684, %v3656
      %v3707 = vpack.c.bf16 %v3691, %v3663
      %v3708 = vpack.c.bf16 %v3698, %v3670
      %v3709 = vpack.c.bf16 %v3705, %v3677
      %v3710 = vld [vmem:[%s3] sm:$0xf]
      %v3711 = vld [vmem:[%s3 + $0x4] sm:$0xf]
      %v3712 = vld [vmem:[%s3 + $0x8] sm:$0xf]
      %v3713 = vld [vmem:[%s3 + $0xc] sm:$0xf]
      %v3714 = vld [vmem:[%s3 + $0x10] sm:$0xf]
      %v3715 = vld [vmem:[%s3 + $0x14] sm:$0xf]
      %v3716 = vld [vmem:[%s3 + $0x18] sm:$0xf]
      %v3717 = vld [vmem:[%s3 + $0x1c] sm:$0xf]
      %v3718 = vld [vmem:[%s3 + $0x20] sm:$0xf]
      %v3719 = vld [vmem:[%s3 + $0x24] sm:$0xf]
      %v3720 = vld [vmem:[%s3 + $0x28] sm:$0xf]
      %v3721 = vld [vmem:[%s3 + $0x2c] sm:$0xf]
      %v3722 = vld [vmem:[%s3 + $0x30] sm:$0xf]
      %v3723 = vld [vmem:[%s3 + $0x34] sm:$0xf]
      %v3724 = vld [vmem:[%s3 + $0x38] sm:$0xf]
      %v3725 = vld [vmem:[%s3 + $0x3c] sm:$0xf]
      %v3726 = vld [vmem:[%s3 + $0x40] sm:$0xf]
      %v3727 = vld [vmem:[%s3 + $0x44] sm:$0xf]
      %v3728 = vld [vmem:[%s3 + $0x48] sm:$0xf]
      %v3729 = vld [vmem:[%s3 + $0x4c] sm:$0xf]
      %v3730 = vld [vmem:[%s3 + $0x50] sm:$0xf]
      %v3731 = vld [vmem:[%s3 + $0x54] sm:$0xf]
      %v3732 = vld [vmem:[%s3 + $0x58] sm:$0xf]
      %v3733 = vld [vmem:[%s3 + $0x5c] sm:$0xf]
      %v3734 = vld [vmem:[%s3 + $0x60] sm:$0xf]
      %v3735 = vld [vmem:[%s3 + $0x64] sm:$0xf]
      %v3736 = vld [vmem:[%s3 + $0x68] sm:$0xf]
      %v3737 = vld [vmem:[%s3 + $0x6c] sm:$0xf]
      %v3738 = vld [vmem:[%s3 + $0x70] sm:$0xf]
      %v3739 = vld [vmem:[%s3 + $0x74] sm:$0xf]
      %v3740 = vld [vmem:[%s3 + $0x78] sm:$0xf]
      %v3741 = vld [vmem:[%s3 + $0x7c] sm:$0xf]
      %v3742 = vld [vmem:[%s3 + $0x80] sm:$0xf]
      %v3743 = vld [vmem:[%s3 + $0x84] sm:$0xf]
      %v3744 = vld [vmem:[%s3 + $0x88] sm:$0xf]
      %v3745 = vld [vmem:[%s3 + $0x8c] sm:$0xf]
      %v3746 = vld [vmem:[%s3 + $0x90] sm:$0xf]
      %v3747 = vld [vmem:[%s3 + $0x94] sm:$0xf]
      %v3748 = vld [vmem:[%s3 + $0x98] sm:$0xf]
      %v3749 = vld [vmem:[%s3 + $0x9c] sm:$0xf]
      %v3750 = vld [vmem:[%s3 + $0xa0] sm:$0xf]
      %v3751 = vld [vmem:[%s3 + $0xa4] sm:$0xf]
      %v3752 = vld [vmem:[%s3 + $0xa8] sm:$0xf]
      %v3753 = vld [vmem:[%s3 + $0xac] sm:$0xf]
      %v3754 = vld [vmem:[%s3 + $0xb0] sm:$0xf]
      %v3755 = vld [vmem:[%s3 + $0xb4] sm:$0xf]
      %v3756 = vld [vmem:[%s3 + $0xb8] sm:$0xf]
      %v3757 = vld [vmem:[%s3 + $0xbc] sm:$0xf]
      %v3758 = vld [vmem:[%s3 + $0xc0] sm:$0xf]
      %v3759 = vld [vmem:[%s3 + $0xc4] sm:$0xf]
      %v3760 = vld [vmem:[%s3 + $0xc8] sm:$0xf]
      %v3761 = vld [vmem:[%s3 + $0xcc] sm:$0xf]
      %v3762 = vld [vmem:[%s3 + $0xd0] sm:$0xf]
      %v3763 = vld [vmem:[%s3 + $0xd4] sm:$0xf]
      %v3764 = vld [vmem:[%s3 + $0xd8] sm:$0xf]
      %v3765 = vld [vmem:[%s3 + $0xdc] sm:$0xf]
      %v3766 = vld [vmem:[%s3 + $0xe0] sm:$0xf]
      %v3767 = vld [vmem:[%s3 + $0xe4] sm:$0xf]
      %v3768 = vld [vmem:[%s3 + $0xe8] sm:$0xf]
      %v3769 = vld [vmem:[%s3 + $0xec] sm:$0xf]
      %v3770 = vld [vmem:[%s3 + $0xf0] sm:$0xf]
      %v3771 = vld [vmem:[%s3 + $0xf4] sm:$0xf]
      %v3772 = vld [vmem:[%s3 + $0xf8] sm:$0xf]
      %v3773 = vld [vmem:[%s3 + $0xfc] sm:$0xf]
      %v3838 = vunpack.c.l.b16 %v3710
      %v3839 = vunpack.c.l.b16 %v3711
      %v3840 = vunpack.c.l.b16 %v3712
      %v3841 = vunpack.c.l.b16 %v3713
      %v3842 = vunpack.c.l.b16 %v3714
      %v3843 = vunpack.c.l.b16 %v3715
      %v3844 = vunpack.c.l.b16 %v3716
      %v3845 = vunpack.c.l.b16 %v3717
      %v3846 = vunpack.c.l.b16 %v3718
      %v3847 = vunpack.c.l.b16 %v3719
      %v3848 = vunpack.c.l.b16 %v3720
      %v3849 = vunpack.c.l.b16 %v3721
      %v3850 = vunpack.c.l.b16 %v3722
      %v3851 = vunpack.c.l.b16 %v3723
      %v3852 = vunpack.c.l.b16 %v3724
      %v3853 = vunpack.c.l.b16 %v3725
      %v3854 = vunpack.c.l.b16 %v3726
      %v3855 = vunpack.c.l.b16 %v3727
      %v3856 = vunpack.c.l.b16 %v3728
      %v3857 = vunpack.c.l.b16 %v3729
      %v3858 = vunpack.c.l.b16 %v3730
      %v3859 = vunpack.c.l.b16 %v3731
      %v3860 = vunpack.c.l.b16 %v3732
      %v3861 = vunpack.c.l.b16 %v3733
      %v3862 = vunpack.c.l.b16 %v3734
      %v3863 = vunpack.c.l.b16 %v3735
      %v3864 = vunpack.c.l.b16 %v3736
      %v3865 = vunpack.c.l.b16 %v3737
      %v3866 = vunpack.c.l.b16 %v3738
      %v3867 = vunpack.c.l.b16 %v3739
      %v3868 = vunpack.c.l.b16 %v3740
      %v3869 = vunpack.c.l.b16 %v3741
      %v3870 = vunpack.c.l.b16 %v3742
      %v3871 = vunpack.c.l.b16 %v3743
      %v3872 = vunpack.c.l.b16 %v3744
      %v3873 = vunpack.c.l.b16 %v3745
      %v3874 = vunpack.c.l.b16 %v3746
      %v3875 = vunpack.c.l.b16 %v3747
      %v3876 = vunpack.c.l.b16 %v3748
      %v3877 = vunpack.c.l.b16 %v3749
      %v3878 = vunpack.c.l.b16 %v3750
      %v3879 = vunpack.c.l.b16 %v3751
      %v3880 = vunpack.c.l.b16 %v3752
      %v3881 = vunpack.c.l.b16 %v3753
      %v3882 = vunpack.c.l.b16 %v3754
      %v3883 = vunpack.c.l.b16 %v3755
      %v3884 = vunpack.c.l.b16 %v3756
      %v3885 = vunpack.c.l.b16 %v3757
      %v3886 = vunpack.c.l.b16 %v3758
      %v3887 = vunpack.c.l.b16 %v3759
      %v3888 = vunpack.c.l.b16 %v3760
      %v3889 = vunpack.c.l.b16 %v3761
      %v3890 = vunpack.c.l.b16 %v3762
      %v3891 = vunpack.c.l.b16 %v3763
      %v3892 = vunpack.c.l.b16 %v3764
      %v3893 = vunpack.c.l.b16 %v3765
      %v3894 = vunpack.c.l.b16 %v3766
      %v3895 = vunpack.c.l.b16 %v3767
      %v3896 = vunpack.c.l.b16 %v3768
      %v3897 = vunpack.c.l.b16 %v3769
      %v3898 = vunpack.c.l.b16 %v3770
      %v3899 = vunpack.c.l.b16 %v3771
      %v3900 = vunpack.c.l.b16 %v3772
      %v3901 = vunpack.c.l.b16 %v3773
      %v3902 = vpack.c.b16 %v3839, %v3838
      %v3903 = vpack.c.b16 %v3841, %v3840
      %v3904 = vpack.c.b16 %v3843, %v3842
      %v3905 = vpack.c.b16 %v3845, %v3844
      %v3906 = vpack.c.b16 %v3847, %v3846
      %v3907 = vpack.c.b16 %v3849, %v3848
      %v3908 = vpack.c.b16 %v3851, %v3850
      %v3909 = vpack.c.b16 %v3853, %v3852
      %v3910 = vpack.c.b16 %v3855, %v3854
      %v3911 = vpack.c.b16 %v3857, %v3856
      %v3912 = vpack.c.b16 %v3859, %v3858
      %v3913 = vpack.c.b16 %v3861, %v3860
      %v3914 = vpack.c.b16 %v3863, %v3862
      %v3915 = vpack.c.b16 %v3865, %v3864
      %v3916 = vpack.c.b16 %v3867, %v3866
      %v3917 = vpack.c.b16 %v3869, %v3868
      %v3918 = vpack.c.b16 %v3871, %v3870
      %v3919 = vpack.c.b16 %v3873, %v3872
      %v3920 = vpack.c.b16 %v3875, %v3874
      %v3921 = vpack.c.b16 %v3877, %v3876
      %v3922 = vpack.c.b16 %v3879, %v3878
      %v3923 = vpack.c.b16 %v3881, %v3880
      %v3924 = vpack.c.b16 %v3883, %v3882
      %v3925 = vpack.c.b16 %v3885, %v3884
      %v3926 = vpack.c.b16 %v3887, %v3886
      %v3927 = vpack.c.b16 %v3889, %v3888
      %v3928 = vpack.c.b16 %v3891, %v3890
      %v3929 = vpack.c.b16 %v3893, %v3892
      %v3930 = vpack.c.b16 %v3895, %v3894
      %v3931 = vpack.c.b16 %v3897, %v3896
      %v3932 = vpack.c.b16 %v3899, %v3898
      %v3933 = vpack.c.b16 %v3901, %v3900
      %3966 = vmatprep.subr.bf16.mxu0 0
      %3967 = vmatpush1.bf16.msra.mxu0 %v3902
      %3968 = vmatprep.subr.bf16.mxu0 0
      %3969 = vmatpush1.bf16.msra.mxu0 %v3903
      %3970 = vmatprep.subr.bf16.mxu0 0
      %3971 = vmatpush1.bf16.msra.mxu0 %v3904
      %3972 = vmatprep.subr.bf16.mxu0 0
      %3973 = vmatpush1.bf16.msra.mxu0 %v3905
      %3974 = vmatprep.subr.bf16.mxu0 0
      %3975 = vmatpush1.bf16.msra.mxu0 %v3906
      %3976 = vmatprep.subr.bf16.mxu0 0
      %3977 = vmatpush1.bf16.msra.mxu0 %v3907
      %3978 = vmatprep.subr.bf16.mxu0 0
      %3979 = vmatpush1.bf16.msra.mxu0 %v3908
      %3980 = vmatprep.subr.bf16.mxu0 0
      %3981 = vmatpush1.bf16.msra.mxu0 %v3909
      %3982 = vmatprep.subr.bf16.mxu0 0
      %3983 = vmatpush1.bf16.msra.mxu0 %v3910
      %3984 = vmatprep.subr.bf16.mxu0 0
      %3985 = vmatpush1.bf16.msra.mxu0 %v3911
      %3986 = vmatprep.subr.bf16.mxu0 0
      %3987 = vmatpush1.bf16.msra.mxu0 %v3912
      %3988 = vmatprep.subr.bf16.mxu0 0
      %3989 = vmatpush1.bf16.msra.mxu0 %v3913
      %3990 = vmatprep.subr.bf16.mxu0 0
      %3991 = vmatpush1.bf16.msra.mxu0 %v3914
      %3992 = vmatprep.subr.bf16.mxu0 0
      %3993 = vmatpush1.bf16.msra.mxu0 %v3915
      %3994 = vmatprep.subr.bf16.mxu0 0
      %3995 = vmatpush1.bf16.msra.mxu0 %v3916
      %3996 = vmatprep.subr.bf16.mxu0 0
      %3997 = vmatpush1.bf16.msra.mxu0 %v3917
      %3998 = vmatprep.mubr.bf16.mxu0 %v3707
      %3999 = vmatmul.mubr.bf16.gmra.mrb[0].mxu0 %v3706
      %v4000 = vpop.f32.mrb[0].mxu0
      %v4001 = vadd.f32 0.0, %v4000
      %v4002 = vpop.f32.mrb[0].mxu0
      %v4003 = vpop.f32.mrb[0].mxu0
      %v4004 = vadd.f32 0.0, %v4003
      %v4005 = vpop.f32.mrb[0].mxu0
      %4006 = vdwg.mxu0
      %4007 = vmatprep.subr.bf16.mxu0 0
      %4008 = vmatpush1.bf16.msra.mxu0 %v3918
      %4009 = vmatprep.subr.bf16.mxu0 0
      %4010 = vmatpush1.bf16.msra.mxu0 %v3919
      %4011 = vmatprep.subr.bf16.mxu0 0
      %4012 = vmatpush1.bf16.msra.mxu0 %v3920
      %4013 = vmatprep.subr.bf16.mxu0 0
      %4014 = vmatpush1.bf16.msra.mxu0 %v3921
      %4015 = vmatprep.subr.bf16.mxu0 0
      %4016 = vmatpush1.bf16.msra.mxu0 %v3922
      %4017 = vmatprep.subr.bf16.mxu0 0
      %4018 = vmatpush1.bf16.msra.mxu0 %v3923
      %4019 = vmatprep.subr.bf16.mxu0 0
      %4020 = vmatpush1.bf16.msra.mxu0 %v3924
      %4021 = vmatprep.subr.bf16.mxu0 0
      %4022 = vmatpush1.bf16.msra.mxu0 %v3925
      %4023 = vmatprep.subr.bf16.mxu0 0
      %4024 = vmatpush1.bf16.msra.mxu0 %v3926
      %4025 = vmatprep.subr.bf16.mxu0 0
      %4026 = vmatpush1.bf16.msra.mxu0 %v3927
      %4027 = vmatprep.subr.bf16.mxu0 0
      %4028 = vmatpush1.bf16.msra.mxu0 %v3928
      %4029 = vmatprep.subr.bf16.mxu0 0
      %4030 = vmatpush1.bf16.msra.mxu0 %v3929
      %4031 = vmatprep.subr.bf16.mxu0 0
      %4032 = vmatpush1.bf16.msra.mxu0 %v3930
      %4033 = vmatprep.subr.bf16.mxu0 0
      %4034 = vmatpush1.bf16.msra.mxu0 %v3931
      %4035 = vmatprep.subr.bf16.mxu0 0
      %4036 = vmatpush1.bf16.msra.mxu0 %v3932
      %4037 = vmatprep.subr.bf16.mxu0 0
      %4038 = vmatpush1.bf16.msra.mxu0 %v3933
      %4039 = vmatprep.mubr.bf16.mxu0 %v3709
      %4040 = vmatmul.mubr.bf16.gmra.mrb[0].mxu0 %v3708
      %v4041 = vpop.f32.mrb[0].mxu0
      %v4042 = vadd.f32 %v4001, %v4041
      %v4043 = vpop.f32.mrb[0].mxu0
      %v4044 = vpop.f32.mrb[0].mxu0
      %v4045 = vadd.f32 %v4004, %v4044
      %v4046 = vpop.f32.mrb[0].mxu0
      %4047 = vdwg.mxu0
      %s4048 = sld [smem:[#allocation2]]
      %v4049 = vstv %s4048
      %v4050 = vmul.f32 %v4042, %v4049
      %v4051 = vmul.f32 %v4045, %v4049
      %v4052 = vmax.f32 %v4050, 1e-05
      %v4053 = vmax.f32 %v4051, 1e-05
      %v4054 = vlog2.pop %v4052
      %v4055 = vmul.f32 %v4054, 0.6931472
      %v4056 = vlog2.pop %v4053
      %v4057 = vmul.f32 %v4056, 0.6931472
      %v4058 = vmul.f32 %v4055, 8.685889
      %v4059 = vmul.f32 %v4057, 8.685889
      %v4060 = vsub.f32 %v4058, 20.0
      %v4061 = vsub.f32 %v4059, 20.0
      %v4062 = vsub.f32 %v4060, -100.0
      %v4063 = vsub.f32 %v4061, -100.0
      %v4064 = vmul.f32 %v4062, 0.08
      %v4065 = vmul.f32 %v4063, 0.08
      %v4066 = vsub.f32 %v4064, 4.0
      %v4067 = vsub.f32 %v4065, 4.0
      %v4068 = vmax.f32 %v4066, -4.0
      %v4069 = vmax.f32 %v4067, -4.0
      %v4070 = vmin.f32 %v4068, 4.0
      %v4071 = vmin.f32 %v4069, 4.0
      %4072 = vst [vmem:[%s203] sm:$0xff] %v4070
      %4073 = vst [vmem:[%s203 + $0x8] sm:$0xff] %v4071
      %s4074 = smul.u32 2, %s16
      %p4075 = scmp.lt.s32.totalorder %s4074, 3
      %s4076 = scalar_select %p4075, %s4074, 3
      %s4077 = smul.addr %s4076, 8
      %s4078 = scalar_lea.vmem %s4, %s4077
      // Predicated region
      $region37: #{_log_fbank_impl.1} parent=35 // pred_check
        %p4079 = pneg %p123
      $region38: #{_log_fbank_impl.1} parent=35 // pred_check_branch
        %4081 = sbr.rel (%p4079) target = $region40
      $region39: #{_log_fbank_impl.1} parent=35 // pred_region
        %s4082 = smul.u32 2, %s16
      $region40: #{_log_fbank_impl.1} parent=35 // pred_fallthru
        _
    $region36: #{_log_fbank_impl.1} parent=5 // pred_fallthru
      _
    %p4083 = scmp.le.s32.totalorder 2, %s11
    // Predicated region
    $region41: #{_log_fbank_impl.1} parent=5 // pred_check
      %p4084 = pneg %p4083
    $region42: #{_log_fbank_impl.1} parent=5 // pred_check_branch
      %4086 = sbr.rel (%p4084) target = $region44
    $region43: #{_log_fbank_impl.1} parent=5 // pred_region
      %s4087 = ssub.s32 %s11, 2
      // Predicated region
      $region45: #{_log_fbank_impl.1} parent=43 // pred_check
        %p4088 = pneg %p129
      $region46: #{_log_fbank_impl.1} parent=43 // pred_check_branch
        %4090 = sbr.rel (%p4088) target = $region48
      $region47: #{_log_fbank_impl.1} parent=43 // pred_region
        %s4091 = smul.u32 2, %s17
        %p4092 = scmp.lt.s32.totalorder %s4091, 3
        %s4093 = scalar_select %p4092, %s4091, 3
        %s4094 = smul.addr %s4093, 8
        %s4095 = scalar_lea.vmem %s4, %s4094
      $region48: #{_log_fbank_impl.1} parent=43 // pred_fallthru
        _
    $region44: #{_log_fbank_impl.1} parent=5 // pred_fallthru
      _
  $region6: #{_log_fbank_impl.1} parent=0 // loop_footer
    %s15 = sadd.s32 1, %s11
  $region7: #{_log_fbank_impl.1} parent=0 // loop_footer_branch
    %10 = sbr.rel target = $region3
  $region8: #{_log_fbank_impl.1} parent=0 // loop_exit
    _

</llo_original>
